<compile_context>
chip_gen: v7x
topology: tpu7x:2x2x1
jax: 0.10.0
libtpu: 0.0.40
codegen_flags: <defaults>
</compile_context>

<pallas_src>
import numpy as np

import jax
import jax.numpy as jnp
from jax import lax
from jax.experimental import pallas as pl
from jax.experimental.pallas import tpu as pltpu

# ---- hyper-parameters (mirror MultiDomainFENDModel.__init__) ---------------
B = 4                        # batch_size
S = 16                       # sequence length
E = 32                       # emb_dim (w2v embedding dim)
MLP_DIM = 64                 # mlp_dims[-1]  (gate hidden & classifier hidden)
NUM_EXPERT = 5
DOMAIN_NUM = 9
KSIZES = (1, 2, 3, 5, 10)    # feature_kernel keys
NFILT = 64                   # filters per kernel size
FEAT = NFILT * len(KSIZES)   # 320 = per-expert feature dim = classifier input
NOUT = NUM_EXPERT * NFILT    # 320 = per-ksize conv output columns [expert][filter]
MAXK = max(KSIZES)           # 10
NEG_INF = -1e30              # Python float -> jaxpr literal (NOT a captured const)

# row offsets of each kernel-size block inside the packed conv weight slab
KOFF = (0,)
for _k in KSIZES:
    KOFF = KOFF + (KOFF[-1] + _k * E,)          # (0, 32, 96, 192, 352, 672)


def mdfend_kernel(x_ref, mask_ref, xcols_ref, pslab_ref, wpack_ref,
                  clw1rep_ref, out_ref):
    x = x_ref[...]                                        # (B, S, E) f32
    mask = mask_ref[...]                                  # (B, S) f32 in {0,1}

    # ---------------- MaskAttention (VPU elementwise, f32) ------------------
    attw = pslab_ref[0:1, 0:E]                            # (1, E)
    attb = pslab_ref[0:1, E:E + 1]                        # (1, 1)
    scores = jnp.sum(x * attw[None, :, :], axis=-1) + attb          # (B, S)
    scores = jnp.where(mask == 0.0, NEG_INF, scores)      # masked_fill(-inf)
    scores = scores - jnp.max(scores, axis=-1, keepdims=True)
    e_s = jnp.exp(scores)
    attn = e_s / jnp.sum(e_s, axis=-1, keepdims=True)     # (B, S)
    feature = jnp.sum(attn[:, :, None] * x, axis=1)       # (B, E)

    # ---------------- gate MLP (domain-emb term pre-folded into bias) -------
    gw1f = pslab_ref[8:8 + E, 0:MLP_DIM]                  # (E, MLP_DIM)
    gb1 = pslab_ref[1:2, 0:MLP_DIM]                       # (1, MLP_DIM)
    gw2 = pslab_ref[8:8 + MLP_DIM, MLP_DIM:MLP_DIM + NUM_EXPERT]    # (MLP_DIM, 5)
    gb2 = pslab_ref[1:2, MLP_DIM:MLP_DIM + NUM_EXPERT]    # (1, 5)
    h = jnp.dot(feature, gw1f, preferred_element_type=jnp.float32) + gb1
    h = jnp.maximum(h, 0.0)
    g = jnp.dot(h, gw2, preferred_element_type=jnp.float32) + gb2
    g = g - jnp.max(g, axis=-1, keepdims=True)
    e_g = jnp.exp(g)
    gate = e_g / jnp.sum(e_g, axis=-1, keepdims=True)     # (B, NUM_EXPERT)

    # expand gate to all [expert][filter] columns: gate_exp[b, e*64+f] = gate[b,e]
    lane = lax.broadcasted_iota(jnp.int32, (NUM_EXPERT, NOUT), 1)
    row = lax.broadcasted_iota(jnp.int32, (NUM_EXPERT, NOUT), 0)
    gsel = jnp.where(
        jnp.logical_and(lane >= row * NFILT, lane < (row + 1) * NFILT), 1.0, 0.0)
    gate_exp = jnp.dot(gate, gsel, preferred_element_type=jnp.float32)   # (B, NOUT)

    # ------- per-ksize conv (bf16 MXU, f32 acc) + max-over-time + fused -----
    # ------- gated mixture / first classifier Linear (BN pre-folded) --------
    s_pos = lax.broadcasted_iota(jnp.int32, (S, NOUT), 0)           # (S, NOUT)
    h1 = pslab_ref[2:3, 0:MLP_DIM]                        # clb1_eff (1, MLP_DIM)
    for ki, k in enumerate(KSIZES):
        r0 = KOFF[ki]
        w_k = wpack_ref[r0:r0 + k * E, :]                 # (k*E, NOUT) bf16
        lhs_k = xcols_ref[:, 0:k * E]                     # (B*S, k*E) bf16
        conv = jnp.dot(lhs_k, w_k,
                       preferred_element_type=jnp.float32)          # (B*S, NOUT)
        conv = conv.reshape(B, S, NOUT)
        # max-over-time only over the valid conv positions s < S - k + 1
        negmask = jnp.where(s_pos < (S - k + 1), 0.0, NEG_INF)      # (S, NOUT)
        pooled = jnp.max(conv + negmask[None, :, :], axis=1)        # (B, NOUT)
        pooled = pooled + pslab_ref[3 + ki:4 + ki, 0:NOUT]          # + conv bias
        gated = (pooled * gate_exp).astype(jnp.bfloat16)            # (B, NOUT)
        h1 = h1 + jnp.dot(gated, clw1rep_ref[ki],
                          preferred_element_type=jnp.float32)       # (B, MLP_DIM)

    # ------ classifier tail: (BN folded) ReLU -> Linear(.,1) -> sigmoid -----
    h1 = jnp.maximum(h1, 0.0)
    clw2 = pslab_ref[8:8 + MLP_DIM,
                     MLP_DIM + NUM_EXPERT:MLP_DIM + NUM_EXPERT + 1]  # (MLP_DIM, 1)
    clb2 = pslab_ref[0:1, E + 1:E + 2]                    # (1, 1)
    logits = jnp.dot(h1, clw2, preferred_element_type=jnp.float32) + clb2
    out_ref[...] = jax.nn.sigmoid(logits)


def mdfend_forward(x, mask, p):
    # im2col (pure layout plumbing, wrapper-side): zero-pad the sequence and
    # stack MAXK shifted copies along the embedding axis -> (B*S, MAXK*E) bf16.
    xp = jnp.pad(x, ((0, 0), (0, MAXK - 1), (0, 0)))
    xcols = jnp.concatenate([xp[:, j:j + S, :] for j in range(MAXK)], axis=-1)
    xcols = xcols.reshape(B * S, MAXK * E).astype(jnp.bfloat16)

    args = (x, mask, xcols, p["pslab"], p["wpack"], p["clw1rep"])
    vmem = pl.BlockSpec(memory_space=pltpu.MemorySpace.VMEM)
    return pl.pallas_call(
        mdfend_kernel,
        out_shape=jax.ShapeDtypeStruct((B, 1), jnp.float32),
        in_specs=[vmem] * len(args),
        out_specs=vmem,
    )(*args)


def make_params(key):
    keys = jax.random.split(key, 16)
    kit = iter(keys)

    def nrm(shape, scale=0.1):
        return (scale * jax.random.normal(next(kit), shape)).astype(jnp.float32)

    p = {}
    # ---- original-layout parameters (used by the pure-JAX reference) -------
    p["att_w"] = nrm((1, E))                      # MaskAttention Linear(E, 1)
    p["att_b"] = jnp.zeros((1, 1), jnp.float32)
    dom_table = nrm((DOMAIN_NUM, E), 1.0)         # domain embedder; ids 0..3 summed
    p["dom"] = jnp.sum(dom_table[0:4], axis=0, keepdims=True)           # (1, E)
    p["gw1"] = nrm((2 * E, MLP_DIM))              # gate Linear(2E, MLP_DIM)
    p["gb1"] = jnp.zeros((1, MLP_DIM), jnp.float32)
    p["gw2"] = nrm((MLP_DIM, NUM_EXPERT))
    p["gb2"] = jnp.zeros((1, NUM_EXPERT), jnp.float32)
    # experts: per expert, Conv1d(E, 64, k); cw[ki][e, j] == torch_w[:, :, j].T
    p["cw"] = [nrm((NUM_EXPERT, k, E, NFILT)) for k in KSIZES]
    p["cb"] = nrm((NUM_EXPERT, len(KSIZES), NFILT), 0.01)
    # classifier MLP(320,[MLP_DIM]): Linear->BatchNorm1d->ReLU->Dropout->Linear(.,1)
    p["clw1"] = nrm((FEAT, MLP_DIM))
    p["clb1"] = jnp.zeros((1, MLP_DIM), jnp.float32)
    eps = 1e-5
    gamma = jnp.ones((MLP_DIM,), jnp.float32)
    beta = jnp.zeros((MLP_DIM,), jnp.float32)
    run_mean = jnp.zeros((MLP_DIM,), jnp.float32)
    run_var = jnp.ones((MLP_DIM,), jnp.float32)
    scale = gamma / jnp.sqrt(run_var + eps)
    p["bn_scale"] = scale.reshape(1, MLP_DIM)
    p["bn_shift"] = (beta - run_mean * scale).reshape(1, MLP_DIM)
    p["clw2"] = nrm((MLP_DIM, 1))
    p["clb2"] = jnp.zeros((1, 1), jnp.float32)

    # ---- kernel-side packing -----------------------------------------------
    # (a) per-ksize conv weight slab, bf16, no structural-zero tap rows.
    #     rows KOFF[ki]+j*E .. +E = tap j of kernel-size ki; cols = [expert][filter]
    wpack = np.zeros((KOFF[-1], NOUT), np.float32)
    for ki, k in enumerate(KSIZES):
        w_all = np.asarray(p["cw"][ki])                  # (NUM_EXPERT, k, E, NFILT)
        for e in range(NUM_EXPERT):
            for j in range(k):
                r = KOFF[ki] + j * E
                wpack[r:r + E, e * NFILT:(e + 1) * NFILT] = w_all[e, j]
    p["wpack"] = jnp.asarray(wpack).astype(jnp.bfloat16)

    # (b) first classifier Linear with eval BatchNorm folded, replicated per
    #     expert so the gated mixture can stay lane-dense.
    clw1_eff = np.asarray(p["clw1"] * p["bn_scale"])                 # (FEAT, MLP_DIM)
    clb1_eff = np.asarray(p["clb1"] * p["bn_scale"] + p["bn_shift"])  # (1, MLP_DIM)
    clw1rep = np.zeros((len(KSIZES), NOUT, MLP_DIM), np.float32)
    for ki in range(len(KSIZES)):
        blk = clw1_eff[ki * NFILT:(ki + 1) * NFILT, :]               # (NFILT, MLP_DIM)
        for e in range(NUM_EXPERT):
            clw1rep[ki, e * NFILT:(e + 1) * NFILT, :] = blk
    p["clw1rep"] = jnp.asarray(clw1rep).astype(jnp.bfloat16)

    # (c) single small f32 slab for all remaining parameters:
    #     row 0: att_w | att_b | clb2
    #     row 1: gb1_eff (domain-embedding term folded in) | gb2
    #     row 2: clb1_eff (BatchNorm folded in)
    #     rows 3..7: conv bias per kernel size (cols = [expert][filter])
    #     rows 8..8+E,       cols 0:MLP_DIM               -> gw1 feature half
    #     rows 8..8+MLP_DIM, cols MLP_DIM:MLP_DIM+5       -> gw2
    #     rows 8..8+MLP_DIM, col  MLP_DIM+5               -> clw2
    gb1_eff = np.asarray(p["dom"] @ p["gw1"][:E, :] + p["gb1"])      # (1, MLP_DIM)
    pslab = np.zeros((8 + MLP_DIM, NOUT), np.float32)
    pslab[0, 0:E] = np.asarray(p["att_w"])[0]
    pslab[0, E] = np.asarray(p["att_b"])[0, 0]
    pslab[0, E + 1] = np.asarray(p["clb2"])[0, 0]
    pslab[1, 0:MLP_DIM] = gb1_eff[0]
    pslab[1, MLP_DIM:MLP_DIM + NUM_EXPERT] = np.asarray(p["gb2"])[0]
    pslab[2, 0:MLP_DIM] = clb1_eff[0]
    cb = np.asarray(p["cb"])
    for ki in range(len(KSIZES)):
        for e in range(NUM_EXPERT):
            pslab[3 + ki, e * NFILT:(e + 1) * NFILT] = cb[e, ki]
    pslab[8:8 + E, 0:MLP_DIM] = np.asarray(p["gw1"])[E:, :]
    pslab[8:8 + MLP_DIM, MLP_DIM:MLP_DIM + NUM_EXPERT] = np.asarray(p["gw2"])
    pslab[8:8 + MLP_DIM, MLP_DIM + NUM_EXPERT] = np.asarray(p["clw2"])[:, 0]
    p["pslab"] = jnp.asarray(pslab)
    return p


def mdfend_reference(x, mask, p):
    """Pure-JAX mirror of the PyTorch forward (w2v branch), for validation."""
    scores = jnp.sum(x * p["att_w"][0][None, None, :], axis=-1) + p["att_b"][0, 0]
    scores = jnp.where(mask == 0.0, NEG_INF, scores)
    scores = jax.nn.softmax(scores, axis=-1)
    feature = jnp.einsum("bs,bse->be", scores, x)
    dom = jnp.broadcast_to(p["dom"], (x.shape[0], E))
    gate_in = jnp.concatenate([dom, feature], axis=-1)
    h = jax.nn.relu(gate_in @ p["gw1"] + p["gb1"])
    gate = jax.nn.softmax(h @ p["gw2"] + p["gb2"], axis=-1)
    shared = jnp.zeros((x.shape[0], FEAT), jnp.float32)
    for e in range(NUM_EXPERT):
        feats = []
        for ki, k in enumerate(KSIZES):
            L = S - k + 1
            acc = jnp.zeros((x.shape[0], L, NFILT), jnp.float32)
            for j in range(k):
                acc = acc + jnp.einsum("ble,ef->blf",
                                       x[:, j:j + L, :], p["cw"][ki][e, j])
            acc = acc + p["cb"][e, ki]
            feats.append(jnp.max(acc, axis=1))
        expert_feat = jnp.concatenate(feats, axis=-1)
        shared = shared + expert_feat * gate[:, e:e + 1]
    h1 = shared @ p["clw1"] + p["clb1"]
    h1 = h1 * p["bn_scale"] + p["bn_shift"]
    h1 = jax.nn.relu(h1)
    logits = h1 @ p["clw2"] + p["clb2"]
    return jax.nn.sigmoid(logits)


if __name__ == "__main__":
    root = jax.random.PRNGKey(0)
    kx, kp = jax.random.split(root)
    # emb_type == 'w2v': `content` is already an embedded sequence (B, S, E)
    x = jax.random.normal(kx, (B, S, E), dtype=jnp.float32)
    mask = jnp.ones((B, S), jnp.float32)
    mask = mask.at[:, 12:].set(0.0)      # padded tail positions
    mask = mask.at[0, 8:].set(0.0)
    params = make_params(kp)

    fwd = jax.jit(mdfend_forward)
    out = fwd(x, mask, params)
    out = jax.block_until_ready(out)
    ref = mdfend_reference(x, mask, params)

    assert out.shape == (B, 1) and out.dtype == jnp.float32
    assert bool(jnp.all(jnp.isfinite(out)))
    assert bool(jnp.allclose(out, ref, rtol=1e-2, atol=1e-2)), (out, ref)
    print("KERNEL_OK")
</pallas_src>

<mosaic_0001>
module attributes {stable_mosaic.version = 11 : i64} {
  func.func @mdfend_kernel(%arg0: memref<4x16x32xf32, #tpu.memory_space<vmem>>, %arg1: memref<4x16xf32, #tpu.memory_space<vmem>>, %arg2: memref<64x320xbf16, #tpu.memory_space<vmem>>, %arg3: memref<72x320xf32, #tpu.memory_space<vmem>>, %arg4: memref<672x320xbf16, #tpu.memory_space<vmem>>, %arg5: memref<5x320x64xbf16, #tpu.memory_space<vmem>>, %arg6: memref<4x1xf32, #tpu.memory_space<vmem>>) attributes {dimension_semantics = [], scalar_prefetch = 0 : i64, scratch_operands = 0 : i64, tpu.core_type = #tpu.core_type<tc>} {
    %c0 = arith.constant 0 : index
    %c0_0 = arith.constant 0 : index
    %c0_1 = arith.constant 0 : index
    %0 = vector.load %arg0[%c0, %c0_0, %c0_1] : memref<4x16x32xf32, #tpu.memory_space<vmem>>, vector<4x16x32xf32>
    %c0_2 = arith.constant 0 : index
    %c0_3 = arith.constant 0 : index
    %1 = vector.load %arg1[%c0_2, %c0_3] : memref<4x16xf32, #tpu.memory_space<vmem>>, vector<4x16xf32>
    %c0_4 = arith.constant 0 : index
    %c0_5 = arith.constant 0 : index
    %2 = vector.load %arg3[%c0_4, %c0_5] : memref<72x320xf32, #tpu.memory_space<vmem>>, vector<1x32xf32>
    %c0_6 = arith.constant 0 : index
    %c32 = arith.constant 32 : index
    %3 = vector.load %arg3[%c0_6, %c32] : memref<72x320xf32, #tpu.memory_space<vmem>>, vector<1x1xf32>
    %4 = vector.shape_cast %2 : vector<1x32xf32> to vector<1x1x32xf32>
    %5 = vector.broadcast %4 : vector<1x1x32xf32> to vector<4x16x32xf32>
    %6 = arith.mulf %0, %5 : vector<4x16x32xf32>
    %cst = arith.constant dense<0.000000e+00> : vector<4x16xf32>
    %7 = vector.multi_reduction <add>, %6, %cst [2] : vector<4x16x32xf32> to vector<4x16xf32>
    %8 = vector.broadcast %3 : vector<1x1xf32> to vector<4x16xf32>
    %9 = arith.addf %7, %8 : vector<4x16xf32>
    %cst_7 = arith.constant 0.000000e+00 : f32
    %10 = vector.broadcast %cst_7 : f32 to vector<4x16xf32>
    %11 = arith.cmpf oeq, %1, %10 : vector<4x16xf32>
    %cst_8 = arith.constant -1.000000e+30 : f32
    %12 = vector.broadcast %cst_8 : f32 to vector<4x16xf32>
    %13 = arith.select %11, %12, %9 : vector<4x16xi1>, vector<4x16xf32>
    %cst_9 = arith.constant dense<0xFF800000> : vector<4xf32>
    %14 = vector.multi_reduction <maximumf>, %13, %cst_9 [1] : vector<4x16xf32> to vector<4xf32>
    %15 = vector.shape_cast %14 : vector<4xf32> to vector<4x1xf32>
    %16 = vector.broadcast %15 : vector<4x1xf32> to vector<4x16xf32>
    %17 = arith.subf %13, %16 : vector<4x16xf32>
    %18 = math.exp %17 : vector<4x16xf32>
    %cst_10 = arith.constant dense<0.000000e+00> : vector<4xf32>
    %19 = vector.multi_reduction <add>, %18, %cst_10 [1] : vector<4x16xf32> to vector<4xf32>
    %20 = vector.shape_cast %19 : vector<4xf32> to vector<4x1xf32>
    %21 = vector.broadcast %20 : vector<4x1xf32> to vector<4x16xf32>
    %22 = arith.divf %18, %21 : vector<4x16xf32>
    %23 = vector.shape_cast %22 : vector<4x16xf32> to vector<4x16x1xf32>
    %24 = vector.broadcast %23 : vector<4x16x1xf32> to vector<4x16x32xf32>
    %25 = arith.mulf %24, %0 : vector<4x16x32xf32>
    %cst_11 = arith.constant dense<0.000000e+00> : vector<4x32xf32>
    %26 = vector.multi_reduction <add>, %25, %cst_11 [1] : vector<4x16x32xf32> to vector<4x32xf32>
    %c8 = arith.constant 8 : index
    %c0_12 = arith.constant 0 : index
    %27 = vector.load %arg3[%c8, %c0_12] : memref<72x320xf32, #tpu.memory_space<vmem>>, vector<32x64xf32>
    %c1 = arith.constant 1 : index
    %c0_13 = arith.constant 0 : index
    %28 = vector.load %arg3[%c1, %c0_13] : memref<72x320xf32, #tpu.memory_space<vmem>>, vector<1x64xf32>
    %c8_14 = arith.constant 8 : index
    %c64 = arith.constant 64 : index
    %29 = vector.load %arg3[%c8_14, %c64] : memref<72x320xf32, #tpu.memory_space<vmem>>, vector<64x5xf32>
    %c1_15 = arith.constant 1 : index
    %c64_16 = arith.constant 64 : index
    %30 = vector.load %arg3[%c1_15, %c64_16] : memref<72x320xf32, #tpu.memory_space<vmem>>, vector<1x5xf32>
    %cst_17 = arith.constant dense<0.000000e+00> : vector<4x64xf32>
    %31 = tpu.matmul %26, %27, %cst_17 {dimension_numbers = #tpu.dot_dimension_numbers<[1], [0], [0], [1], [0, 0, 1, 1], [], []>} : vector<4x32xf32>, vector<32x64xf32>, vector<4x64xf32> -> vector<4x64xf32>
    %32 = vector.broadcast %28 : vector<1x64xf32> to vector<4x64xf32>
    %33 = arith.addf %31, %32 : vector<4x64xf32>
    %cst_18 = arith.constant 0.000000e+00 : f32
    %34 = vector.broadcast %cst_18 : f32 to vector<4x64xf32>
    %35 = arith.maximumf %33, %34 : vector<4x64xf32>
    %cst_19 = arith.constant dense<0.000000e+00> : vector<4x5xf32>
    %36 = tpu.matmul %35, %29, %cst_19 {dimension_numbers = #tpu.dot_dimension_numbers<[1], [0], [0], [1], [0, 0, 1, 1], [], []>} : vector<4x64xf32>, vector<64x5xf32>, vector<4x5xf32> -> vector<4x5xf32>
    %37 = vector.broadcast %30 : vector<1x5xf32> to vector<4x5xf32>
    %38 = arith.addf %36, %37 : vector<4x5xf32>
    %cst_20 = arith.constant dense<0xFF800000> : vector<4xf32>
    %39 = vector.multi_reduction <maximumf>, %38, %cst_20 [1] : vector<4x5xf32> to vector<4xf32>
    %40 = vector.shape_cast %39 : vector<4xf32> to vector<4x1xf32>
    %41 = vector.broadcast %40 : vector<4x1xf32> to vector<4x5xf32>
    %42 = arith.subf %38, %41 : vector<4x5xf32>
    %43 = math.exp %42 : vector<4x5xf32>
    %cst_21 = arith.constant dense<0.000000e+00> : vector<4xf32>
    %44 = vector.multi_reduction <add>, %43, %cst_21 [1] : vector<4x5xf32> to vector<4xf32>
    %45 = vector.shape_cast %44 : vector<4xf32> to vector<4x1xf32>
    %46 = vector.broadcast %45 : vector<4x1xf32> to vector<4x5xf32>
    %47 = arith.divf %43, %46 : vector<4x5xf32>
    %48 = tpu.iota {dimensions = array<i32: 1>} : vector<5x320xi32>
    %49 = tpu.iota {dimensions = array<i32: 0>} : vector<5x320xi32>
    %c64_i32 = arith.constant 64 : i32
    %50 = vector.broadcast %c64_i32 : i32 to vector<5x320xi32>
    %51 = arith.muli %49, %50 : vector<5x320xi32>
    %52 = arith.cmpi sge, %48, %51 : vector<5x320xi32>
    %c1_i32 = arith.constant 1 : i32
    %53 = vector.broadcast %c1_i32 : i32 to vector<5x320xi32>
    %54 = arith.addi %49, %53 : vector<5x320xi32>
    %c64_i32_22 = arith.constant 64 : i32
    %55 = vector.broadcast %c64_i32_22 : i32 to vector<5x320xi32>
    %56 = arith.muli %54, %55 : vector<5x320xi32>
    %57 = arith.cmpi slt, %48, %56 : vector<5x320xi32>
    %58 = arith.andi %52, %57 : vector<5x320xi1>
    %cst_23 = arith.constant 1.000000e+00 : f32
    %cst_24 = arith.constant 0.000000e+00 : f32
    %59 = vector.broadcast %cst_23 : f32 to vector<5x320xf32>
    %60 = vector.broadcast %cst_24 : f32 to vector<5x320xf32>
    %61 = arith.select %58, %59, %60 : vector<5x320xi1>, vector<5x320xf32>
    %cst_25 = arith.constant dense<0.000000e+00> : vector<4x320xf32>
    %62 = tpu.matmul %47, %61, %cst_25 {dimension_numbers = #tpu.dot_dimension_numbers<[1], [0], [0], [1], [0, 0, 1, 1], [], []>} : vector<4x5xf32>, vector<5x320xf32>, vector<4x320xf32> -> vector<4x320xf32>
    %63 = tpu.iota {dimensions = array<i32: 0>} : vector<16x320xi32>
    %c2 = arith.constant 2 : index
    %c0_26 = arith.constant 0 : index
    %64 = vector.load %arg3[%c2, %c0_26] : memref<72x320xf32, #tpu.memory_space<vmem>>, vector<1x64xf32>
    %c0_27 = arith.constant 0 : index
    %c0_28 = arith.constant 0 : index
    %65 = vector.load %arg4[%c0_27, %c0_28] : memref<672x320xbf16, #tpu.memory_space<vmem>>, vector<32x320xbf16>
    %c0_29 = arith.constant 0 : index
    %c0_30 = arith.constant 0 : index
    %66 = vector.load %arg2[%c0_29, %c0_30] : memref<64x320xbf16, #tpu.memory_space<vmem>>, vector<64x32xbf16>
    %cst_31 = arith.constant dense<0.000000e+00> : vector<64x320xf32>
    %67 = tpu.matmul %66, %65, %cst_31 {dimension_numbers = #tpu.dot_dimension_numbers<[1], [0], [0], [1], [0, 0, 1, 1], [], []>} : vector<64x32xbf16>, vector<32x320xbf16>, vector<64x320xf32> -> vector<64x320xf32>
    %68 = vector.shape_cast %67 : vector<64x320xf32> to vector<4x16x320xf32>
    %c16_i32 = arith.constant 16 : i32
    %69 = vector.broadcast %c16_i32 : i32 to vector<16x320xi32>
    %70 = arith.cmpi slt, %63, %69 : vector<16x320xi32>
    %cst_32 = arith.constant 0.000000e+00 : f32
    %cst_33 = arith.constant -1.000000e+30 : f32
    %71 = vector.broadcast %cst_32 : f32 to vector<16x320xf32>
    %72 = vector.broadcast %cst_33 : f32 to vector<16x320xf32>
    %73 = arith.select %70, %71, %72 : vector<16x320xi1>, vector<16x320xf32>
    %74 = vector.shape_cast %73 : vector<16x320xf32> to vector<1x16x320xf32>
    %75 = vector.broadcast %74 : vector<1x16x320xf32> to vector<4x16x320xf32>
    %76 = arith.addf %68, %75 : vector<4x16x320xf32>
    %cst_34 = arith.constant dense<0xFF800000> : vector<4x320xf32>
    %77 = vector.multi_reduction <maximumf>, %76, %cst_34 [1] : vector<4x16x320xf32> to vector<4x320xf32>
    %c3 = arith.constant 3 : index
    %c0_35 = arith.constant 0 : index
    %78 = vector.load %arg3[%c3, %c0_35] : memref<72x320xf32, #tpu.memory_space<vmem>>, vector<1x320xf32>
    %79 = vector.broadcast %78 : vector<1x320xf32> to vector<4x320xf32>
    %80 = arith.addf %77, %79 : vector<4x320xf32>
    %81 = arith.mulf %80, %62 : vector<4x320xf32>
    %82 = arith.truncf %81 : vector<4x320xf32> to vector<4x320xbf16>
    %c0_36 = arith.constant 0 : index
    %c0_37 = arith.constant 0 : index
    %c0_38 = arith.constant 0 : index
    %83 = vector.load %arg5[%c0_36, %c0_37, %c0_38] : memref<5x320x64xbf16, #tpu.memory_space<vmem>>, vector<1x320x64xbf16>
    %84 = vector.shape_cast %83 : vector<1x320x64xbf16> to vector<320x64xbf16>
    %cst_39 = arith.constant dense<0.000000e+00> : vector<4x64xf32>
    %85 = tpu.matmul %82, %84, %cst_39 {dimension_numbers = #tpu.dot_dimension_numbers<[1], [0], [0], [1], [0, 0, 1, 1], [], []>} : vector<4x320xbf16>, vector<320x64xbf16>, vector<4x64xf32> -> vector<4x64xf32>
    %86 = vector.broadcast %64 : vector<1x64xf32> to vector<4x64xf32>
    %87 = arith.addf %86, %85 : vector<4x64xf32>
    %c32_40 = arith.constant 32 : index
    %c0_41 = arith.constant 0 : index
    %88 = vector.load %arg4[%c32_40, %c0_41] : memref<672x320xbf16, #tpu.memory_space<vmem>>, vector<64x320xbf16>
    %c0_42 = arith.constant 0 : index
    %c0_43 = arith.constant 0 : index
    %89 = vector.load %arg2[%c0_42, %c0_43] : memref<64x320xbf16, #tpu.memory_space<vmem>>, vector<64x64xbf16>
    %cst_44 = arith.constant dense<0.000000e+00> : vector<64x320xf32>
    %90 = tpu.matmul %89, %88, %cst_44 {dimension_numbers = #tpu.dot_dimension_numbers<[1], [0], [0], [1], [0, 0, 1, 1], [], []>} : vector<64x64xbf16>, vector<64x320xbf16>, vector<64x320xf32> -> vector<64x320xf32>
    %91 = vector.shape_cast %90 : vector<64x320xf32> to vector<4x16x320xf32>
    %c15_i32 = arith.constant 15 : i32
    %92 = vector.broadcast %c15_i32 : i32 to vector<16x320xi32>
    %93 = arith.cmpi slt, %63, %92 : vector<16x320xi32>
    %cst_45 = arith.constant 0.000000e+00 : f32
    %cst_46 = arith.constant -1.000000e+30 : f32
    %94 = vector.broadcast %cst_45 : f32 to vector<16x320xf32>
    %95 = vector.broadcast %cst_46 : f32 to vector<16x320xf32>
    %96 = arith.select %93, %94, %95 : vector<16x320xi1>, vector<16x320xf32>
    %97 = vector.shape_cast %96 : vector<16x320xf32> to vector<1x16x320xf32>
    %98 = vector.broadcast %97 : vector<1x16x320xf32> to vector<4x16x320xf32>
    %99 = arith.addf %91, %98 : vector<4x16x320xf32>
    %cst_47 = arith.constant dense<0xFF800000> : vector<4x320xf32>
    %100 = vector.multi_reduction <maximumf>, %99, %cst_47 [1] : vector<4x16x320xf32> to vector<4x320xf32>
    %c4 = arith.constant 4 : index
    %c0_48 = arith.constant 0 : index
    %101 = vector.load %arg3[%c4, %c0_48] : memref<72x320xf32, #tpu.memory_space<vmem>>, vector<1x320xf32>
    %102 = vector.broadcast %101 : vector<1x320xf32> to vector<4x320xf32>
    %103 = arith.addf %100, %102 : vector<4x320xf32>
    %104 = arith.mulf %103, %62 : vector<4x320xf32>
    %105 = arith.truncf %104 : vector<4x320xf32> to vector<4x320xbf16>
    %c1_49 = arith.constant 1 : index
    %c0_50 = arith.constant 0 : index
    %c0_51 = arith.constant 0 : index
    %106 = vector.load %arg5[%c1_49, %c0_50, %c0_51] : memref<5x320x64xbf16, #tpu.memory_space<vmem>>, vector<1x320x64xbf16>
    %107 = vector.shape_cast %106 : vector<1x320x64xbf16> to vector<320x64xbf16>
    %cst_52 = arith.constant dense<0.000000e+00> : vector<4x64xf32>
    %108 = tpu.matmul %105, %107, %cst_52 {dimension_numbers = #tpu.dot_dimension_numbers<[1], [0], [0], [1], [0, 0, 1, 1], [], []>} : vector<4x320xbf16>, vector<320x64xbf16>, vector<4x64xf32> -> vector<4x64xf32>
    %109 = arith.addf %87, %108 : vector<4x64xf32>
    %c96 = arith.constant 96 : index
    %c0_53 = arith.constant 0 : index
    %110 = vector.load %arg4[%c96, %c0_53] : memref<672x320xbf16, #tpu.memory_space<vmem>>, vector<96x320xbf16>
    %c0_54 = arith.constant 0 : index
    %c0_55 = arith.constant 0 : index
    %111 = vector.load %arg2[%c0_54, %c0_55] : memref<64x320xbf16, #tpu.memory_space<vmem>>, vector<64x96xbf16>
    %cst_56 = arith.constant dense<0.000000e+00> : vector<64x320xf32>
    %112 = tpu.matmul %111, %110, %cst_56 {dimension_numbers = #tpu.dot_dimension_numbers<[1], [0], [0], [1], [0, 0, 1, 1], [], []>} : vector<64x96xbf16>, vector<96x320xbf16>, vector<64x320xf32> -> vector<64x320xf32>
    %113 = vector.shape_cast %112 : vector<64x320xf32> to vector<4x16x320xf32>
    %c14_i32 = arith.constant 14 : i32
    %114 = vector.broadcast %c14_i32 : i32 to vector<16x320xi32>
    %115 = arith.cmpi slt, %63, %114 : vector<16x320xi32>
    %cst_57 = arith.constant 0.000000e+00 : f32
    %cst_58 = arith.constant -1.000000e+30 : f32
    %116 = vector.broadcast %cst_57 : f32 to vector<16x320xf32>
    %117 = vector.broadcast %cst_58 : f32 to vector<16x320xf32>
    %118 = arith.select %115, %116, %117 : vector<16x320xi1>, vector<16x320xf32>
    %119 = vector.shape_cast %118 : vector<16x320xf32> to vector<1x16x320xf32>
    %120 = vector.broadcast %119 : vector<1x16x320xf32> to vector<4x16x320xf32>
    %121 = arith.addf %113, %120 : vector<4x16x320xf32>
    %cst_59 = arith.constant dense<0xFF800000> : vector<4x320xf32>
    %122 = vector.multi_reduction <maximumf>, %121, %cst_59 [1] : vector<4x16x320xf32> to vector<4x320xf32>
    %c5 = arith.constant 5 : index
    %c0_60 = arith.constant 0 : index
    %123 = vector.load %arg3[%c5, %c0_60] : memref<72x320xf32, #tpu.memory_space<vmem>>, vector<1x320xf32>
    %124 = vector.broadcast %123 : vector<1x320xf32> to vector<4x320xf32>
    %125 = arith.addf %122, %124 : vector<4x320xf32>
    %126 = arith.mulf %125, %62 : vector<4x320xf32>
    %127 = arith.truncf %126 : vector<4x320xf32> to vector<4x320xbf16>
    %c2_61 = arith.constant 2 : index
    %c0_62 = arith.constant 0 : index
    %c0_63 = arith.constant 0 : index
    %128 = vector.load %arg5[%c2_61, %c0_62, %c0_63] : memref<5x320x64xbf16, #tpu.memory_space<vmem>>, vector<1x320x64xbf16>
    %129 = vector.shape_cast %128 : vector<1x320x64xbf16> to vector<320x64xbf16>
    %cst_64 = arith.constant dense<0.000000e+00> : vector<4x64xf32>
    %130 = tpu.matmul %127, %129, %cst_64 {dimension_numbers = #tpu.dot_dimension_numbers<[1], [0], [0], [1], [0, 0, 1, 1], [], []>} : vector<4x320xbf16>, vector<320x64xbf16>, vector<4x64xf32> -> vector<4x64xf32>
    %131 = arith.addf %109, %130 : vector<4x64xf32>
    %c192 = arith.constant 192 : index
    %c0_65 = arith.constant 0 : index
    %132 = vector.load %arg4[%c192, %c0_65] : memref<672x320xbf16, #tpu.memory_space<vmem>>, vector<160x320xbf16>
    %c0_66 = arith.constant 0 : index
    %c0_67 = arith.constant 0 : index
    %133 = vector.load %arg2[%c0_66, %c0_67] : memref<64x320xbf16, #tpu.memory_space<vmem>>, vector<64x160xbf16>
    %cst_68 = arith.constant dense<0.000000e+00> : vector<64x320xf32>
    %134 = tpu.matmul %133, %132, %cst_68 {dimension_numbers = #tpu.dot_dimension_numbers<[1], [0], [0], [1], [0, 0, 1, 1], [], []>} : vector<64x160xbf16>, vector<160x320xbf16>, vector<64x320xf32> -> vector<64x320xf32>
    %135 = vector.shape_cast %134 : vector<64x320xf32> to vector<4x16x320xf32>
    %c12_i32 = arith.constant 12 : i32
    %136 = vector.broadcast %c12_i32 : i32 to vector<16x320xi32>
    %137 = arith.cmpi slt, %63, %136 : vector<16x320xi32>
    %cst_69 = arith.constant 0.000000e+00 : f32
    %cst_70 = arith.constant -1.000000e+30 : f32
    %138 = vector.broadcast %cst_69 : f32 to vector<16x320xf32>
    %139 = vector.broadcast %cst_70 : f32 to vector<16x320xf32>
    %140 = arith.select %137, %138, %139 : vector<16x320xi1>, vector<16x320xf32>
    %141 = vector.shape_cast %140 : vector<16x320xf32> to vector<1x16x320xf32>
    %142 = vector.broadcast %141 : vector<1x16x320xf32> to vector<4x16x320xf32>
    %143 = arith.addf %135, %142 : vector<4x16x320xf32>
    %cst_71 = arith.constant dense<0xFF800000> : vector<4x320xf32>
    %144 = vector.multi_reduction <maximumf>, %143, %cst_71 [1] : vector<4x16x320xf32> to vector<4x320xf32>
    %c6 = arith.constant 6 : index
    %c0_72 = arith.constant 0 : index
    %145 = vector.load %arg3[%c6, %c0_72] : memref<72x320xf32, #tpu.memory_space<vmem>>, vector<1x320xf32>
    %146 = vector.broadcast %145 : vector<1x320xf32> to vector<4x320xf32>
    %147 = arith.addf %144, %146 : vector<4x320xf32>
    %148 = arith.mulf %147, %62 : vector<4x320xf32>
    %149 = arith.truncf %148 : vector<4x320xf32> to vector<4x320xbf16>
    %c3_73 = arith.constant 3 : index
    %c0_74 = arith.constant 0 : index
    %c0_75 = arith.constant 0 : index
    %150 = vector.load %arg5[%c3_73, %c0_74, %c0_75] : memref<5x320x64xbf16, #tpu.memory_space<vmem>>, vector<1x320x64xbf16>
    %151 = vector.shape_cast %150 : vector<1x320x64xbf16> to vector<320x64xbf16>
    %cst_76 = arith.constant dense<0.000000e+00> : vector<4x64xf32>
    %152 = tpu.matmul %149, %151, %cst_76 {dimension_numbers = #tpu.dot_dimension_numbers<[1], [0], [0], [1], [0, 0, 1, 1], [], []>} : vector<4x320xbf16>, vector<320x64xbf16>, vector<4x64xf32> -> vector<4x64xf32>
    %153 = arith.addf %131, %152 : vector<4x64xf32>
    %c352 = arith.constant 352 : index
    %c0_77 = arith.constant 0 : index
    %154 = vector.load %arg4[%c352, %c0_77] : memref<672x320xbf16, #tpu.memory_space<vmem>>, vector<320x320xbf16>
    %c0_78 = arith.constant 0 : index
    %c0_79 = arith.constant 0 : index
    %155 = vector.load %arg2[%c0_78, %c0_79] : memref<64x320xbf16, #tpu.memory_space<vmem>>, vector<64x320xbf16>
    %cst_80 = arith.constant dense<0.000000e+00> : vector<64x320xf32>
    %156 = tpu.matmul %155, %154, %cst_80 {dimension_numbers = #tpu.dot_dimension_numbers<[1], [0], [0], [1], [0, 0, 1, 1], [], []>} : vector<64x320xbf16>, vector<320x320xbf16>, vector<64x320xf32> -> vector<64x320xf32>
    %157 = vector.shape_cast %156 : vector<64x320xf32> to vector<4x16x320xf32>
    %c7_i32 = arith.constant 7 : i32
    %158 = vector.broadcast %c7_i32 : i32 to vector<16x320xi32>
    %159 = arith.cmpi slt, %63, %158 : vector<16x320xi32>
    %cst_81 = arith.constant 0.000000e+00 : f32
    %cst_82 = arith.constant -1.000000e+30 : f32
    %160 = vector.broadcast %cst_81 : f32 to vector<16x320xf32>
    %161 = vector.broadcast %cst_82 : f32 to vector<16x320xf32>
    %162 = arith.select %159, %160, %161 : vector<16x320xi1>, vector<16x320xf32>
    %163 = vector.shape_cast %162 : vector<16x320xf32> to vector<1x16x320xf32>
    %164 = vector.broadcast %163 : vector<1x16x320xf32> to vector<4x16x320xf32>
    %165 = arith.addf %157, %164 : vector<4x16x320xf32>
    %cst_83 = arith.constant dense<0xFF800000> : vector<4x320xf32>
    %166 = vector.multi_reduction <maximumf>, %165, %cst_83 [1] : vector<4x16x320xf32> to vector<4x320xf32>
    %c7 = arith.constant 7 : index
    %c0_84 = arith.constant 0 : index
    %167 = vector.load %arg3[%c7, %c0_84] : memref<72x320xf32, #tpu.memory_space<vmem>>, vector<1x320xf32>
    %168 = vector.broadcast %167 : vector<1x320xf32> to vector<4x320xf32>
    %169 = arith.addf %166, %168 : vector<4x320xf32>
    %170 = arith.mulf %169, %62 : vector<4x320xf32>
    %171 = arith.truncf %170 : vector<4x320xf32> to vector<4x320xbf16>
    %c4_85 = arith.constant 4 : index
    %c0_86 = arith.constant 0 : index
    %c0_87 = arith.constant 0 : index
    %172 = vector.load %arg5[%c4_85, %c0_86, %c0_87] : memref<5x320x64xbf16, #tpu.memory_space<vmem>>, vector<1x320x64xbf16>
    %173 = vector.shape_cast %172 : vector<1x320x64xbf16> to vector<320x64xbf16>
    %cst_88 = arith.constant dense<0.000000e+00> : vector<4x64xf32>
    %174 = tpu.matmul %171, %173, %cst_88 {dimension_numbers = #tpu.dot_dimension_numbers<[1], [0], [0], [1], [0, 0, 1, 1], [], []>} : vector<4x320xbf16>, vector<320x64xbf16>, vector<4x64xf32> -> vector<4x64xf32>
    %175 = arith.addf %153, %174 : vector<4x64xf32>
    %cst_89 = arith.constant 0.000000e+00 : f32
    %176 = vector.broadcast %cst_89 : f32 to vector<4x64xf32>
    %177 = arith.maximumf %175, %176 : vector<4x64xf32>
    %c8_90 = arith.constant 8 : index
    %c69 = arith.constant 69 : index
    %178 = vector.load %arg3[%c8_90, %c69] : memref<72x320xf32, #tpu.memory_space<vmem>>, vector<64x1xf32>
    %c0_91 = arith.constant 0 : index
    %c33 = arith.constant 33 : index
    %179 = vector.load %arg3[%c0_91, %c33] : memref<72x320xf32, #tpu.memory_space<vmem>>, vector<1x1xf32>
    %cst_92 = arith.constant dense<0.000000e+00> : vector<4x1xf32>
    %180 = tpu.matmul %177, %178, %cst_92 {dimension_numbers = #tpu.dot_dimension_numbers<[1], [0], [0], [1], [0, 0, 1, 1], [], []>} : vector<4x64xf32>, vector<64x1xf32>, vector<4x1xf32> -> vector<4x1xf32>
    %181 = vector.broadcast %179 : vector<1x1xf32> to vector<4x1xf32>
    %182 = arith.addf %180, %181 : vector<4x1xf32>
    %183 = arith.negf %182 : vector<4x1xf32>
    %184 = math.exp %183 : vector<4x1xf32>
    %cst_93 = arith.constant 1.000000e+00 : f32
    %185 = vector.broadcast %cst_93 : f32 to vector<4x1xf32>
    %186 = arith.addf %185, %184 : vector<4x1xf32>
    %187 = arith.divf %185, %186 : vector<4x1xf32>
    %c0_94 = arith.constant 0 : index
    %c0_95 = arith.constant 0 : index
    %188 = vector.load %arg6[%c0_94, %c0_95] : memref<4x1xf32, #tpu.memory_space<vmem>>, vector<4x1xf32>
    tpu.vector_store %arg6[%c0_94, %c0_95], %187 {strides = array<i32>} : memref<4x1xf32, #tpu.memory_space<vmem>>, vector<4x1xf32>,
    return
  }
}

</mosaic_0001>

<llo_original>
// kernel: mdfend_forward.1
$region0: #{mdfend_forward.1}
  #allocation0 [shape = 'u32[]', space=smem, size = 0x4, offset = 0x4, fixed_abs, tag = 'smem constant byte address 0x4 - core index']
  #allocation1 [shape = 'u32[144,128]{1,0:T(1,128)}', space=vmem, size = 0x12000, scoped, tag = 'internal scratch']
  %s0 = inlined_call_operand.vmem [shape: f32[4,16,32], index: 0, kind: input, shape index: {}]
  %s1 = inlined_call_operand.vmem [shape: f32[4,16], index: 1, kind: input, shape index: {}]
  %s2 = inlined_call_operand.vmem [shape: bf16[64,320], index: 2, kind: input, shape index: {}]
  %s3 = inlined_call_operand.vmem [shape: f32[72,320], index: 3, kind: input, shape index: {}]
  %s4 = inlined_call_operand.vmem [shape: bf16[672,320], index: 4, kind: input, shape index: {}]
  %s5 = inlined_call_operand.vmem [shape: bf16[5,320,64], index: 5, kind: input, shape index: {}]
  %s6 = inlined_call_operand.vmem [shape: f32[4,1], index: 6, kind: output, shape index: {}]
  %s7 = sld [smem:[#allocation0]]
  $region34: #{mdfend_forward.1} parent=0
    _
  %s9 = ssub.s32 1, %s7
  %s10 = scalar_select 0, %s9, %s7
  // Predicated region
  $region2: #{mdfend_forward.1} parent=0 // pred_check
    _
  $region3: #{mdfend_forward.1} parent=0 // pred_check_branch
    %12 = sbr.rel (0) target = $region5
  $region4: #{mdfend_forward.1} parent=0 // pred_region
    _
  $region5: #{mdfend_forward.1} parent=0 // pred_fallthru
    _
  // Predicated region
  $region6: #{mdfend_forward.1} parent=0 // pred_check
    _
  $region7: #{mdfend_forward.1} parent=0 // pred_check_branch
    %14 = sbr.rel (0) target = $region9
  $region8: #{mdfend_forward.1} parent=0 // pred_region
    _
  $region9: #{mdfend_forward.1} parent=0 // pred_fallthru
    _
  // Predicated region
  $region10: #{mdfend_forward.1} parent=0 // pred_check
    _
  $region11: #{mdfend_forward.1} parent=0 // pred_check_branch
    %16 = sbr.rel (0) target = $region13
  $region12: #{mdfend_forward.1} parent=0 // pred_region
    _
  $region13: #{mdfend_forward.1} parent=0 // pred_fallthru
    _
  // Predicated region
  $region14: #{mdfend_forward.1} parent=0 // pred_check
    _
  $region15: #{mdfend_forward.1} parent=0 // pred_check_branch
    %18 = sbr.rel (0) target = $region17
  $region16: #{mdfend_forward.1} parent=0 // pred_region
    _
  $region17: #{mdfend_forward.1} parent=0 // pred_fallthru
    _
  // Predicated region
  $region18: #{mdfend_forward.1} parent=0 // pred_check
    _
  $region19: #{mdfend_forward.1} parent=0 // pred_check_branch
    %20 = sbr.rel (0) target = $region21
  $region20: #{mdfend_forward.1} parent=0 // pred_region
    _
  $region21: #{mdfend_forward.1} parent=0 // pred_fallthru
    _
  // Predicated region
  $region22: #{mdfend_forward.1} parent=0 // pred_check
    _
  $region23: #{mdfend_forward.1} parent=0 // pred_check_branch
    %22 = sbr.rel (0) target = $region25
  $region24: #{mdfend_forward.1} parent=0 // pred_region
    _
  $region25: #{mdfend_forward.1} parent=0 // pred_fallthru
    _
  %v24 = vld [vmem:[%s0] sm:$0xff]
  %v25 = vld [vmem:[%s0 + $0x8] sm:$0xff]
  %v26 = vld [vmem:[%s0 + $0x10] sm:$0xff]
  %v27 = vld [vmem:[%s0 + $0x18] sm:$0xff]
  %v28 = vld [vmem:[%s0 + $0x20] sm:$0xff]
  %v29 = vld [vmem:[%s0 + $0x28] sm:$0xff]
  %v30 = vld [vmem:[%s0 + $0x30] sm:$0xff]
  %v31 = vld [vmem:[%s0 + $0x38] sm:$0xff]
  %v32 = vld [vmem:[%s1] sm:$0xf]
  %v33 = vld [vmem:[%s3] ss:$0 sm:$0xff]
  %v34 = vmul.f32 %v24, %v33
  %v35 = vmul.f32 %v25, %v33
  %v36 = vmul.f32 %v26, %v33
  %v37 = vmul.f32 %v27, %v33
  %v38 = vmul.f32 %v28, %v33
  %v39 = vmul.f32 %v29, %v33
  %v40 = vmul.f32 %v30, %v33
  %v41 = vmul.f32 %v31, %v33
  %vm42 = vcmask 261120
  %v43 = vsel %vm42, %v34, 0.0
  %44 = vadd.xlane.f32.xlu0 %v43
  %v45 = vpop.xlane.xlu0 %44
  %v46 = vsel %vm42, %v35, 0.0
  %47 = vadd.xlane.f32.xlu0 %v46
  %v48 = vpop.xlane.xlu0 %47
  %v49 = vsel %vm42, %v36, 0.0
  %50 = vadd.xlane.f32.xlu0 %v49
  %v51 = vpop.xlane.xlu0 %50
  %v52 = vsel %vm42, %v37, 0.0
  %53 = vadd.xlane.f32.xlu0 %v52
  %v54 = vpop.xlane.xlu0 %53
  %v55 = vsel %vm42, %v38, 0.0
  %56 = vadd.xlane.f32.xlu0 %v55
  %v57 = vpop.xlane.xlu0 %56
  %v58 = vsel %vm42, %v39, 0.0
  %59 = vadd.xlane.f32.xlu0 %v58
  %v60 = vpop.xlane.xlu0 %59
  %v61 = vsel %vm42, %v40, 0.0
  %62 = vadd.xlane.f32.xlu0 %v61
  %v63 = vpop.xlane.xlu0 %62
  %v64 = vsel %vm42, %v41, 0.0
  %65 = vadd.xlane.f32.xlu0 %v64
  %v66 = vpop.xlane.xlu0 %65
  %68 = vset.pattern.permute.xlu0 32
  %69 = vperm.xlu0 %68, %v33
  %v70 = vpop.permute.xlu0 %69
  %v72 = vadd.f32 %v45, %v70
  %v73 = vadd.f32 %v48, %v70
  %v74 = vadd.f32 %v51, %v70
  %v75 = vadd.f32 %v54, %v70
  %v76 = vadd.f32 %v57, %v70
  %v77 = vadd.f32 %v60, %v70
  %v78 = vadd.f32 %v63, %v70
  %v79 = vadd.f32 %v66, %v70
  %vm80 = vcmp.eq.f32.partialorder %v32, 0.0
  %v89 = vlaneseq
  %v90 = vand.u32 %v89, 127
  %v91 = vlaneseq
  %v92 = vshrl.u32 %v91, 7
  %v93 = vsub.s32 %v90, %v92
  %v94 = vrot.slane %v72, %v93
  %v95 = vadd.s32 %v90, 4294967288
  %v96 = vlaneseq
  %v97 = vshrl.u32 %v96, 7
  %v98 = vsub.s32 %v95, %v97
  %v99 = vrot.slane %v73, %v98
  %vm100 = vcmask 130112
  %v101 = vsel %vm100, %v99, %v94
  %v102 = vlaneseq
  %v103 = vshrl.u32 %v102, 7
  %v104 = vsub.s32 %v90, %v103
  %v105 = vrot.slane %v74, %v104
  %v106 = vlaneseq
  %v107 = vshrl.u32 %v106, 7
  %v108 = vsub.s32 %v95, %v107
  %v109 = vrot.slane %v75, %v108
  %v110 = vsel %vm100, %v109, %v105
  %v111 = vlaneseq
  %v112 = vshrl.u32 %v111, 7
  %v113 = vsub.s32 %v90, %v112
  %v114 = vrot.slane %v76, %v113
  %v115 = vlaneseq
  %v116 = vshrl.u32 %v115, 7
  %v117 = vsub.s32 %v95, %v116
  %v118 = vrot.slane %v77, %v117
  %v119 = vsel %vm100, %v118, %v114
  %v120 = vlaneseq
  %v121 = vshrl.u32 %v120, 7
  %v122 = vsub.s32 %v90, %v121
  %v123 = vrot.slane %v78, %v122
  %v124 = vlaneseq
  %v125 = vshrl.u32 %v124, 7
  %v126 = vsub.s32 %v95, %v125
  %v127 = vrot.slane %v79, %v126
  %v128 = vsel %vm100, %v127, %v123
  %vm129 = vcmask 1041409
  %v130 = vsel %vm129, %v110, %v101
  %vm131 = vcmask 1042434
  %v132 = vsel %vm131, %v119, %v130
  %vm133 = vcmask 1043459
  %v134 = vsel %vm133, %v128, %v132
  %v136 = vsel %vm80, -1e+30, %v134
  %vm137 = vcmask 125952
  %v138 = vsel %vm137, %v136, -inf
  %139 = vmax.xlane.f32.xlu0 %v138
  %v140 = vpop.xlane.xlu0 %139
  %v141 = vsub.f32 %v136, %v140
  %v142 = vmul.f32 %v141, 1.442695
  %v143 = vpow.pop %v142
  %v144 = vsel %vm137, %v143, 0.0
  %145 = vadd.xlane.f32.xlu0 %v144
  %v146 = vpop.xlane.xlu0 %145
  %v147 = vrcp.pop %v146
  %v148 = vmul.f32 %v143, %v147
  %v149 = vlaneseq
  %v150 = vshrl.u32 %v149, 7
  %v151 = vsub.s32 0, %v150
  %v152 = vrot.slane %v148, %v151
  %154 = vbcast.lane.b32.xlu0 %v152, 256
  %v155 = vpop.permute.xlu0 %154
  %s157 = sor.u32 256, 8
  %158 = vbcast.lane.b32.xlu0 %v152, %s157
  %v159 = vpop.permute.xlu0 %158
  %v160 = vlaneseq
  %v161 = vshrl.u32 %v160, 7
  %v162 = vsub.s32 1, %v161
  %v163 = vrot.slane %v148, %v162
  %165 = vbcast.lane.b32.xlu0 %v163, 256
  %v166 = vpop.permute.xlu0 %165
  %s168 = sor.u32 256, 8
  %169 = vbcast.lane.b32.xlu0 %v163, %s168
  %v170 = vpop.permute.xlu0 %169
  %v171 = vlaneseq
  %v172 = vshrl.u32 %v171, 7
  %v173 = vsub.s32 2, %v172
  %v174 = vrot.slane %v148, %v173
  %176 = vbcast.lane.b32.xlu0 %v174, 256
  %v177 = vpop.permute.xlu0 %176
  %s179 = sor.u32 256, 8
  %180 = vbcast.lane.b32.xlu0 %v174, %s179
  %v181 = vpop.permute.xlu0 %180
  %v182 = vlaneseq
  %v183 = vshrl.u32 %v182, 7
  %v184 = vsub.s32 3, %v183
  %v185 = vrot.slane %v148, %v184
  %187 = vbcast.lane.b32.xlu0 %v185, 256
  %v188 = vpop.permute.xlu0 %187
  %s190 = sor.u32 256, 8
  %191 = vbcast.lane.b32.xlu0 %v185, %s190
  %v192 = vpop.permute.xlu0 %191
  %v193 = vmul.f32 %v155, %v24
  %v194 = vmul.f32 %v159, %v25
  %v195 = vmul.f32 %v166, %v26
  %v196 = vmul.f32 %v170, %v27
  %v197 = vmul.f32 %v177, %v28
  %v198 = vmul.f32 %v181, %v29
  %v199 = vmul.f32 %v188, %v30
  %v200 = vmul.f32 %v192, %v31
  %v201 = vsel %vm42, %v193, 0.0
  %v202 = vsel %vm42, %v194, 0.0
  %v203 = vadd.f32 %v201, %v202
  %v204 = vrot.slane %v203, 4
  %v205 = vadd.f32 %v203, %v204
  %v206 = vrot.slane %v205, 2
  %v207 = vadd.f32 %v205, %v206
  %v208 = vrot.slane %v207, 1
  %v209 = vadd.f32 %v207, %v208
  %v210 = vsel %vm42, %v195, 0.0
  %v211 = vsel %vm42, %v196, 0.0
  %v212 = vadd.f32 %v210, %v211
  %v213 = vrot.slane %v212, 4
  %v214 = vadd.f32 %v212, %v213
  %v215 = vrot.slane %v214, 2
  %v216 = vadd.f32 %v214, %v215
  %v217 = vrot.slane %v216, 1
  %v218 = vadd.f32 %v216, %v217
  %v219 = vsel %vm42, %v197, 0.0
  %v220 = vsel %vm42, %v198, 0.0
  %v221 = vadd.f32 %v219, %v220
  %v222 = vrot.slane %v221, 4
  %v223 = vadd.f32 %v221, %v222
  %v224 = vrot.slane %v223, 2
  %v225 = vadd.f32 %v223, %v224
  %v226 = vrot.slane %v225, 1
  %v227 = vadd.f32 %v225, %v226
  %v228 = vsel %vm42, %v199, 0.0
  %v229 = vsel %vm42, %v200, 0.0
  %v230 = vadd.f32 %v228, %v229
  %v231 = vrot.slane %v230, 4
  %v232 = vadd.f32 %v230, %v231
  %v233 = vrot.slane %v232, 2
  %v234 = vadd.f32 %v232, %v233
  %v235 = vrot.slane %v234, 1
  %v236 = vadd.f32 %v234, %v235
  %v237 = vld [vmem:[%s3 + $0x18] sm:$0xff]
  %v238 = vld [vmem:[%s3 + $0x30] sm:$0xff]
  %v239 = vld [vmem:[%s3 + $0x48] sm:$0xff]
  %v240 = vld [vmem:[%s3 + $0x60] sm:$0xff]
  %v241 = vld [vmem:[%s3 + $0x1] ss:$0 sm:$0xff]
  %v242 = vld [vmem:[%s3 + $0x78] sm:$0xff]
  %v243 = vld [vmem:[%s3 + $0x90] sm:$0xff]
  %v244 = vld [vmem:[%s3 + $0xa8] sm:$0xff]
  %v245 = vld [vmem:[%s3 + $0xc0] sm:$0xff]
  %v250 = vsel %vm129, %v218, %v209
  %v251 = vsel %vm131, %v227, %v250
  %v252 = vsel %vm133, %v236, %v251
  %v253 = vsel %vm42, %v252, 0
  %255 = vmatprep.subr.mxu0 0.0
  %256 = vmatpush1.msra.mxu0 %v237
  %257 = vmatprep.subr.mxu0 0.0
  %258 = vmatpush1.msra.mxu0 %v238
  %259 = vmatprep.subr.mxu0 0.0
  %260 = vmatpush1.msra.mxu0 %v239
  %261 = vmatprep.subr.mxu0 0.0
  %262 = vmatpush1.msra.mxu0 %v240
  %263 = vmatprep.subr.mxu0 0.0
  %264 = vmatpush1.msra.mxu0 0.0
  %265 = vmatprep.subr.mxu0 0.0
  %266 = vmatpush1.msra.mxu0 0.0
  %267 = vmatprep.subr.mxu0 0.0
  %268 = vmatpush1.msra.mxu0 0.0
  %269 = vmatprep.subr.mxu0 0.0
  %270 = vmatpush1.msra.mxu0 0.0
  %271 = vmatprep.subr.mxu0 0.0
  %272 = vmatpush1.msra.mxu0 0.0
  %273 = vmatprep.subr.mxu0 0.0
  %274 = vmatpush1.msra.mxu0 0.0
  %275 = vmatprep.subr.mxu0 0.0
  %276 = vmatpush1.msra.mxu0 0.0
  %277 = vmatprep.subr.mxu0 0.0
  %278 = vmatpush1.msra.mxu0 0.0
  %279 = vmatprep.subr.mxu0 0.0
  %280 = vmatpush1.msra.mxu0 0.0
  %281 = vmatprep.subr.mxu0 0.0
  %282 = vmatpush1.msra.mxu0 0.0
  %283 = vmatprep.subr.mxu0 0.0
  %284 = vmatpush1.msra.mxu0 0.0
  %285 = vmatprep.subr.mxu0 0.0
  %286 = vmatpush1.msra.mxu0 0.0
  %287 = vmatprep.subr.mxu0 0.0
  %288 = vmatpush1.msra.mxu0 0.0
  %289 = vmatprep.subr.mxu0 0.0
  %290 = vmatpush1.msra.mxu0 0.0
  %291 = vmatprep.subr.mxu0 0.0
  %292 = vmatpush1.msra.mxu0 0.0
  %293 = vmatprep.subr.mxu0 0.0
  %294 = vmatpush1.msra.mxu0 0.0
  %295 = vmatprep.subr.mxu0 0.0
  %296 = vmatpush1.msra.mxu0 0.0
  %297 = vmatprep.subr.mxu0 0.0
  %298 = vmatpush1.msra.mxu0 0.0
  %299 = vmatprep.subr.mxu0 0.0
  %300 = vmatpush1.msra.mxu0 0.0
  %301 = vmatprep.subr.mxu0 0.0
  %302 = vmatpush1.msra.mxu0 0.0
  %303 = vmatprep.subr.mxu0 0.0
  %304 = vmatpush1.msra.mxu0 0.0
  %305 = vmatprep.subr.mxu0 0.0
  %306 = vmatpush1.msra.mxu0 0.0
  %307 = vmatprep.subr.mxu0 0.0
  %308 = vmatpush1.msra.mxu0 0.0
  %309 = vmatprep.subr.mxu0 0.0
  %310 = vmatpush1.msra.mxu0 0.0
  %311 = vmatprep.subr.mxu0 0.0
  %312 = vmatpush1.msra.mxu0 0.0
  %313 = vmatprep.subr.mxu0 0.0
  %314 = vmatpush1.msra.mxu0 0.0
  %315 = vmatprep.subr.mxu0 0.0
  %316 = vmatpush1.msra.mxu0 0.0
  %317 = vmatprep.subr.mxu0 0.0
  %318 = vmatpush1.msra.mxu0 0.0
  %319 = vmatprep.mubr.f32.mxu0 0.0
  %320 = vmatmul.mubr.f32.gmra.mrb[0].mxu0 %v253
  %v321 = vpop.f32.mrb[0].mxu0
  %v322 = vadd.f32 %v241, %v321
  %v323 = vpop.f32.mrb[0].mxu0
  %324 = vdwg.mxu0
  %v325 = vmax.f32 %v322, 0.0
  %334 = vrot.lane.b32.xlu0 %v237, 64
  %v335 = vpop.permute.xlu0 %334
  %336 = vrot.lane.b32.xlu0 %v238, 64
  %v337 = vpop.permute.xlu0 %336
  %338 = vrot.lane.b32.xlu0 %v239, 64
  %v339 = vpop.permute.xlu0 %338
  %340 = vrot.lane.b32.xlu0 %v240, 64
  %v341 = vpop.permute.xlu0 %340
  %342 = vrot.lane.b32.xlu0 %v242, 64
  %v343 = vpop.permute.xlu0 %342
  %344 = vrot.lane.b32.xlu0 %v243, 64
  %v345 = vpop.permute.xlu0 %344
  %346 = vrot.lane.b32.xlu0 %v244, 64
  %v347 = vpop.permute.xlu0 %346
  %348 = vrot.lane.b32.xlu0 %v245, 64
  %v349 = vpop.permute.xlu0 %348
  %359 = vrot.lane.b32.xlu0 %v241, 64
  %v360 = vpop.permute.xlu0 %359
  %vm362 = vcmask 523264
  %v364 = vsel %vm362, %v325, 0
  %366 = vmatprep.subr.mxu0 0.0
  %367 = vmatpush1.msra.mxu0 %v335
  %368 = vmatprep.subr.mxu0 0.0
  %369 = vmatpush1.msra.mxu0 %v337
  %370 = vmatprep.subr.mxu0 0.0
  %371 = vmatpush1.msra.mxu0 %v339
  %372 = vmatprep.subr.mxu0 0.0
  %373 = vmatpush1.msra.mxu0 %v341
  %374 = vmatprep.subr.mxu0 0.0
  %375 = vmatpush1.msra.mxu0 %v343
  %376 = vmatprep.subr.mxu0 0.0
  %377 = vmatpush1.msra.mxu0 %v345
  %378 = vmatprep.subr.mxu0 0.0
  %379 = vmatpush1.msra.mxu0 %v347
  %380 = vmatprep.subr.mxu0 0.0
  %381 = vmatpush1.msra.mxu0 %v349
  %382 = vmatprep.subr.mxu0 0.0
  %383 = vmatpush1.msra.mxu0 0.0
  %384 = vmatprep.subr.mxu0 0.0
  %385 = vmatpush1.msra.mxu0 0.0
  %386 = vmatprep.subr.mxu0 0.0
  %387 = vmatpush1.msra.mxu0 0.0
  %388 = vmatprep.subr.mxu0 0.0
  %389 = vmatpush1.msra.mxu0 0.0
  %390 = vmatprep.subr.mxu0 0.0
  %391 = vmatpush1.msra.mxu0 0.0
  %392 = vmatprep.subr.mxu0 0.0
  %393 = vmatpush1.msra.mxu0 0.0
  %394 = vmatprep.subr.mxu0 0.0
  %395 = vmatpush1.msra.mxu0 0.0
  %396 = vmatprep.subr.mxu0 0.0
  %397 = vmatpush1.msra.mxu0 0.0
  %398 = vmatprep.subr.mxu0 0.0
  %399 = vmatpush1.msra.mxu0 0.0
  %400 = vmatprep.subr.mxu0 0.0
  %401 = vmatpush1.msra.mxu0 0.0
  %402 = vmatprep.subr.mxu0 0.0
  %403 = vmatpush1.msra.mxu0 0.0
  %404 = vmatprep.subr.mxu0 0.0
  %405 = vmatpush1.msra.mxu0 0.0
  %406 = vmatprep.subr.mxu0 0.0
  %407 = vmatpush1.msra.mxu0 0.0
  %408 = vmatprep.subr.mxu0 0.0
  %409 = vmatpush1.msra.mxu0 0.0
  %410 = vmatprep.subr.mxu0 0.0
  %411 = vmatpush1.msra.mxu0 0.0
  %412 = vmatprep.subr.mxu0 0.0
  %413 = vmatpush1.msra.mxu0 0.0
  %414 = vmatprep.subr.mxu0 0.0
  %415 = vmatpush1.msra.mxu0 0.0
  %416 = vmatprep.subr.mxu0 0.0
  %417 = vmatpush1.msra.mxu0 0.0
  %418 = vmatprep.subr.mxu0 0.0
  %419 = vmatpush1.msra.mxu0 0.0
  %420 = vmatprep.subr.mxu0 0.0
  %421 = vmatpush1.msra.mxu0 0.0
  %422 = vmatprep.subr.mxu0 0.0
  %423 = vmatpush1.msra.mxu0 0.0
  %424 = vmatprep.subr.mxu0 0.0
  %425 = vmatpush1.msra.mxu0 0.0
  %426 = vmatprep.subr.mxu0 0.0
  %427 = vmatpush1.msra.mxu0 0.0
  %428 = vmatprep.subr.mxu0 0.0
  %429 = vmatpush1.msra.mxu0 0.0
  %430 = vmatprep.mubr.f32.mxu0 0.0
  %431 = vmatmul.mubr.f32.gmra.mrb[0].mxu0 %v364
  %v432 = vpop.f32.mrb[0].mxu0
  %v433 = vadd.f32 %v360, %v432
  %v434 = vpop.f32.mrb[0].mxu0
  %435 = vdwg.mxu0
  %vm436 = vcmask 35840
  %v437 = vsel %vm436, %v433, -inf
  %438 = vmax.xlane.f32.xlu0 %v437
  %v439 = vpop.xlane.xlu0 %438
  %v440 = vsub.f32 %v433, %v439
  %v441 = vmul.f32 %v440, 1.442695
  %v442 = vpow.pop %v441
  %v443 = vsel %vm436, %v442, 0.0
  %444 = vadd.xlane.f32.xlu0 %v443
  %v445 = vpop.xlane.xlu0 %444
  %v446 = vrcp.pop %v445
  %v447 = vmul.f32 %v442, %v446
  %v448 = vadd.s32 %v90, 128
  %v449 = vadd.s32 %v90, 256
  %v450 = vlaneseq
  %v451 = vshrl.u32 %v450, 7
  %v452 = vmul.u32 %v451, 64
  %vm453 = vcmp.ge.s32.totalorder %v90, %v452
  %vm454 = vcmp.ge.s32.totalorder %v448, %v452
  %vm455 = vcmp.ge.s32.totalorder %v449, %v452
  %v456 = vadd.s32 %v451, 1
  %v457 = vmul.u32 %v456, 64
  %vm458 = vcmp.lt.s32.totalorder %v90, %v457
  %vm459 = vcmp.lt.s32.totalorder %v448, %v457
  %vm460 = vcmp.lt.s32.totalorder %v449, %v457
  %vm461 = vmand %vm453, %vm458
  %vm462 = vmand %vm454, %vm459
  %vm463 = vmand %vm455, %vm460
  %v464 = vsel %vm461, 1.0, 0.0
  %v465 = vsel %vm462, 1.0, 0.0
  %v466 = vsel %vm463, 1.0, 0.0
  %vm467 = vcmask 39936
  %v469 = vsel %vm467, %v447, 0
  %vm471 = vcmask 1044480
  %v473 = vsel %vm471, %v464, 0
  %v476 = vsel %vm471, %v465, 0
  %v479 = vsel %vm471, %v466, 0
  %481 = vmatprep.subr.mxu0 %v476
  %482 = vmatpush1.msra.mxu0 %v473
  %483 = vmatprep.subr.mxu0 0.0
  %484 = vmatpush1.msra.mxu0 0.0
  %485 = vmatprep.subr.mxu0 0.0
  %486 = vmatpush1.msra.mxu0 0.0
  %487 = vmatprep.subr.mxu0 0.0
  %488 = vmatpush1.msra.mxu0 0.0
  %489 = vmatprep.subr.mxu0 0.0
  %490 = vmatpush1.msra.mxu0 0.0
  %491 = vmatprep.subr.mxu0 0.0
  %492 = vmatpush1.msra.mxu0 0.0
  %493 = vmatprep.subr.mxu0 0.0
  %494 = vmatpush1.msra.mxu0 0.0
  %495 = vmatprep.subr.mxu0 0.0
  %496 = vmatpush1.msra.mxu0 0.0
  %497 = vmatprep.subr.mxu0 0.0
  %498 = vmatpush1.msra.mxu0 0.0
  %499 = vmatprep.subr.mxu0 0.0
  %500 = vmatpush1.msra.mxu0 0.0
  %501 = vmatprep.subr.mxu0 0.0
  %502 = vmatpush1.msra.mxu0 0.0
  %503 = vmatprep.subr.mxu0 0.0
  %504 = vmatpush1.msra.mxu0 0.0
  %505 = vmatprep.subr.mxu0 0.0
  %506 = vmatpush1.msra.mxu0 0.0
  %507 = vmatprep.subr.mxu0 0.0
  %508 = vmatpush1.msra.mxu0 0.0
  %509 = vmatprep.subr.mxu0 0.0
  %510 = vmatpush1.msra.mxu0 0.0
  %511 = vmatprep.subr.mxu0 0.0
  %512 = vmatpush1.msra.mxu0 0.0
  %513 = vmatprep.subr.mxu0 0.0
  %514 = vmatpush1.msra.mxu0 0.0
  %515 = vmatprep.subr.mxu0 0.0
  %516 = vmatpush1.msra.mxu0 0.0
  %517 = vmatprep.subr.mxu0 0.0
  %518 = vmatpush1.msra.mxu0 0.0
  %519 = vmatprep.subr.mxu0 0.0
  %520 = vmatpush1.msra.mxu0 0.0
  %521 = vmatprep.subr.mxu0 0.0
  %522 = vmatpush1.msra.mxu0 0.0
  %523 = vmatprep.subr.mxu0 0.0
  %524 = vmatpush1.msra.mxu0 0.0
  %525 = vmatprep.subr.mxu0 0.0
  %526 = vmatpush1.msra.mxu0 0.0
  %527 = vmatprep.subr.mxu0 0.0
  %528 = vmatpush1.msra.mxu0 0.0
  %529 = vmatprep.subr.mxu0 0.0
  %530 = vmatpush1.msra.mxu0 0.0
  %531 = vmatprep.subr.mxu0 0.0
  %532 = vmatpush1.msra.mxu0 0.0
  %533 = vmatprep.subr.mxu0 0.0
  %534 = vmatpush1.msra.mxu0 0.0
  %535 = vmatprep.subr.mxu0 0.0
  %536 = vmatpush1.msra.mxu0 0.0
  %537 = vmatprep.subr.mxu0 0.0
  %538 = vmatpush1.msra.mxu0 0.0
  %539 = vmatprep.subr.mxu0 0.0
  %540 = vmatpush1.msra.mxu0 0.0
  %541 = vmatprep.subr.mxu0 0.0
  %542 = vmatpush1.msra.mxu0 0.0
  %543 = vmatprep.subr.mxu0 0.0
  %544 = vmatpush1.msra.mxu0 0.0
  %545 = vmatprep.mubr.f32.mxu0 0.0
  %546 = vmatmul.mubr.f32.gmra.mrb[0].mxu0 %v469
  %v547 = vpop.f32.mrb[0].mxu0
  %v548 = vadd.f32 0.0, %v547
  %v549 = vpop.f32.mrb[0].mxu0
  %v550 = vadd.f32 0.0, %v549
  %551 = vdwg.mxu0
  %552 = vmatprep.subr.mxu0 0.0
  %553 = vmatpush1.msra.mxu0 %v479
  %554 = vmatprep.subr.mxu0 0.0
  %555 = vmatpush1.msra.mxu0 0.0
  %556 = vmatprep.subr.mxu0 0.0
  %557 = vmatpush1.msra.mxu0 0.0
  %558 = vmatprep.subr.mxu0 0.0
  %559 = vmatpush1.msra.mxu0 0.0
  %560 = vmatprep.subr.mxu0 0.0
  %561 = vmatpush1.msra.mxu0 0.0
  %562 = vmatprep.subr.mxu0 0.0
  %563 = vmatpush1.msra.mxu0 0.0
  %564 = vmatprep.subr.mxu0 0.0
  %565 = vmatpush1.msra.mxu0 0.0
  %566 = vmatprep.subr.mxu0 0.0
  %567 = vmatpush1.msra.mxu0 0.0
  %568 = vmatprep.subr.mxu0 0.0
  %569 = vmatpush1.msra.mxu0 0.0
  %570 = vmatprep.subr.mxu0 0.0
  %571 = vmatpush1.msra.mxu0 0.0
  %572 = vmatprep.subr.mxu0 0.0
  %573 = vmatpush1.msra.mxu0 0.0
  %574 = vmatprep.subr.mxu0 0.0
  %575 = vmatpush1.msra.mxu0 0.0
  %576 = vmatprep.subr.mxu0 0.0
  %577 = vmatpush1.msra.mxu0 0.0
  %578 = vmatprep.subr.mxu0 0.0
  %579 = vmatpush1.msra.mxu0 0.0
  %580 = vmatprep.subr.mxu0 0.0
  %581 = vmatpush1.msra.mxu0 0.0
  %582 = vmatprep.subr.mxu0 0.0
  %583 = vmatpush1.msra.mxu0 0.0
  %584 = vmatprep.subr.mxu0 0.0
  %585 = vmatpush1.msra.mxu0 0.0
  %586 = vmatprep.subr.mxu0 0.0
  %587 = vmatpush1.msra.mxu0 0.0
  %588 = vmatprep.subr.mxu0 0.0
  %589 = vmatpush1.msra.mxu0 0.0
  %590 = vmatprep.subr.mxu0 0.0
  %591 = vmatpush1.msra.mxu0 0.0
  %592 = vmatprep.subr.mxu0 0.0
  %593 = vmatpush1.msra.mxu0 0.0
  %594 = vmatprep.subr.mxu0 0.0
  %595 = vmatpush1.msra.mxu0 0.0
  %596 = vmatprep.subr.mxu0 0.0
  %597 = vmatpush1.msra.mxu0 0.0
  %598 = vmatprep.subr.mxu0 0.0
  %599 = vmatpush1.msra.mxu0 0.0
  %600 = vmatprep.subr.mxu0 0.0
  %601 = vmatpush1.msra.mxu0 0.0
  %602 = vmatprep.subr.mxu0 0.0
  %603 = vmatpush1.msra.mxu0 0.0
  %604 = vmatprep.subr.mxu0 0.0
  %605 = vmatpush1.msra.mxu0 0.0
  %606 = vmatprep.subr.mxu0 0.0
  %607 = vmatpush1.msra.mxu0 0.0
  %608 = vmatprep.subr.mxu0 0.0
  %609 = vmatpush1.msra.mxu0 0.0
  %610 = vmatprep.subr.mxu0 0.0
  %611 = vmatpush1.msra.mxu0 0.0
  %612 = vmatprep.subr.mxu0 0.0
  %613 = vmatpush1.msra.mxu0 0.0
  %614 = vmatprep.subr.mxu0 0.0
  %615 = vmatpush1.msra.mxu0 0.0
  %616 = vmatprep.mubr.f32.mxu0 0.0
  %617 = vmatmul.mubr.f32.gmra.mrb[0].mxu0 %v469
  %v618 = vpop.f32.mrb[0].mxu0
  %v619 = vadd.f32 0.0, %v618
  %v620 = vpop.f32.mrb[0].mxu0
  %621 = vdwg.mxu0
  %v622 = vadd.s32 %v451, 8
  %v623 = vld [vmem:[%s3 + $0x2] ss:$0 sm:$0xff]
  %v624 = vld [vmem:[%s4] sm:$0xff]
  %v625 = vld [vmem:[%s4 + $0x8] sm:$0xf]
  %v626 = vld [vmem:[%s4 + $0xc] sm:$0xff]
  %v627 = vld [vmem:[%s4 + $0x14] sm:$0xf]
  %v628 = vld [vmem:[%s4 + $0x18] sm:$0xff]
  %v629 = vld [vmem:[%s4 + $0x20] sm:$0xf]
  %v630 = vld [vmem:[%s4 + $0x24] sm:$0xff]
  %v631 = vld [vmem:[%s4 + $0x2c] sm:$0xf]
  %v632 = vld [vmem:[%s2] sm:$0xf]
  %v633 = vld [vmem:[%s2 + $0xc] sm:$0xf]
  %v634 = vld [vmem:[%s2 + $0x18] sm:$0xf]
  %v635 = vld [vmem:[%s2 + $0x24] sm:$0xf]
  %v636 = vld [vmem:[%s2 + $0x30] sm:$0xf]
  %v637 = vld [vmem:[%s2 + $0x3c] sm:$0xf]
  %v638 = vld [vmem:[%s2 + $0x48] sm:$0xf]
  %v639 = vld [vmem:[%s2 + $0x54] sm:$0xf]
  %v648 = vunpack.c.l.b16 %v632
  %v649 = vunpack.c.l.b16 %v633
  %v650 = vunpack.c.l.b16 %v634
  %v651 = vunpack.c.l.b16 %v635
  %v652 = vunpack.c.l.b16 %v636
  %v653 = vunpack.c.l.b16 %v637
  %v654 = vunpack.c.l.b16 %v638
  %v655 = vunpack.c.l.b16 %v639
  %v656 = vpack.c.b16 %v649, %v648
  %v657 = vpack.c.b16 %v651, %v650
  %v658 = vpack.c.b16 %v653, %v652
  %v659 = vpack.c.b16 %v655, %v654
  %v668 = vunpack.c.l.b16 %v624
  %v669 = vunpack.c.h.b16 %v624
  %v670 = vunpack.c.l.b16 %v625
  %v671 = vunpack.c.l.b16 %v626
  %v672 = vunpack.c.h.b16 %v626
  %v673 = vunpack.c.l.b16 %v627
  %v674 = vunpack.c.l.b16 %v628
  %v675 = vunpack.c.h.b16 %v628
  %v676 = vunpack.c.l.b16 %v629
  %v677 = vunpack.c.l.b16 %v630
  %v678 = vunpack.c.h.b16 %v630
  %v679 = vunpack.c.l.b16 %v631
  %v680 = vpack.c.b16 %v671, %v668
  %v681 = vpack.c.b16 %v672, %v669
  %v682 = vpack.c.b16 %v673, %v670
  %v683 = vpack.c.b16 %v677, %v674
  %v684 = vpack.c.b16 %v678, %v675
  %v685 = vpack.c.b16 %v679, %v676
  %v693 = vsel %vm42, %v656, 0
  %v696 = vsel %vm42, %v657, 0
  %v699 = vsel %vm42, %v658, 0
  %v702 = vsel %vm42, %v659, 0
  %704 = vmatprep.subr.bf16.mxu0 %v681
  %705 = vmatpush1.bf16.msra.mxu0 %v680
  %706 = vmatprep.subr.bf16.mxu0 %v684
  %707 = vmatpush1.bf16.msra.mxu0 %v683
  %708 = vmatprep.subr.bf16.mxu0 0
  %709 = vmatpush1.bf16.msra.mxu0 0
  %710 = vmatprep.subr.bf16.mxu0 0
  %711 = vmatpush1.bf16.msra.mxu0 0
  %712 = vmatprep.subr.bf16.mxu0 0
  %713 = vmatpush1.bf16.msra.mxu0 0
  %714 = vmatprep.subr.bf16.mxu0 0
  %715 = vmatpush1.bf16.msra.mxu0 0
  %716 = vmatprep.subr.bf16.mxu0 0
  %717 = vmatpush1.bf16.msra.mxu0 0
  %718 = vmatprep.subr.bf16.mxu0 0
  %719 = vmatpush1.bf16.msra.mxu0 0
  %720 = vmatprep.subr.bf16.mxu0 0
  %721 = vmatpush1.bf16.msra.mxu0 0
  %722 = vmatprep.subr.bf16.mxu0 0
  %723 = vmatpush1.bf16.msra.mxu0 0
  %724 = vmatprep.subr.bf16.mxu0 0
  %725 = vmatpush1.bf16.msra.mxu0 0
  %726 = vmatprep.subr.bf16.mxu0 0
  %727 = vmatpush1.bf16.msra.mxu0 0
  %728 = vmatprep.subr.bf16.mxu0 0
  %729 = vmatpush1.bf16.msra.mxu0 0
  %730 = vmatprep.subr.bf16.mxu0 0
  %731 = vmatpush1.bf16.msra.mxu0 0
  %732 = vmatprep.subr.bf16.mxu0 0
  %733 = vmatpush1.bf16.msra.mxu0 0
  %734 = vmatprep.subr.bf16.mxu0 0
  %735 = vmatpush1.bf16.msra.mxu0 0
  %736 = vmatprep.mubr.bf16.mxu0 0
  %737 = vmatmul.mubr.bf16.gmra.mrb[0].mxu0 %v693
  %v738 = vpop.f32.mrb[0].mxu0
  %v739 = vadd.f32 0.0, %v738
  %v740 = vpop.f32.mrb[0].mxu0
  %v741 = vadd.f32 0.0, %v740
  %v742 = vpop.f32.mrb[0].mxu0
  %v743 = vadd.f32 0.0, %v742
  %v744 = vpop.f32.mrb[0].mxu0
  %v745 = vadd.f32 0.0, %v744
  %746 = vmatprep.mubr.bf16.mxu0 0
  %747 = vmatmul.mubr.bf16.gmra.mrb[0].mxu0 %v696
  %v748 = vpop.f32.mrb[0].mxu0
  %v749 = vadd.f32 0.0, %v748
  %v750 = vpop.f32.mrb[0].mxu0
  %v751 = vadd.f32 0.0, %v750
  %v752 = vpop.f32.mrb[0].mxu0
  %v753 = vadd.f32 0.0, %v752
  %v754 = vpop.f32.mrb[0].mxu0
  %v755 = vadd.f32 0.0, %v754
  %756 = vmatprep.mubr.bf16.mxu0 0
  %757 = vmatmul.mubr.bf16.gmra.mrb[0].mxu0 %v699
  %v758 = vpop.f32.mrb[0].mxu0
  %v759 = vadd.f32 0.0, %v758
  %v760 = vpop.f32.mrb[0].mxu0
  %v761 = vadd.f32 0.0, %v760
  %v762 = vpop.f32.mrb[0].mxu0
  %v763 = vadd.f32 0.0, %v762
  %v764 = vpop.f32.mrb[0].mxu0
  %v765 = vadd.f32 0.0, %v764
  %766 = vmatprep.mubr.bf16.mxu0 0
  %767 = vmatmul.mubr.bf16.gmra.mrb[0].mxu0 %v702
  %v768 = vpop.f32.mrb[0].mxu0
  %v769 = vadd.f32 0.0, %v768
  %v770 = vpop.f32.mrb[0].mxu0
  %v771 = vadd.f32 0.0, %v770
  %v772 = vpop.f32.mrb[0].mxu0
  %v773 = vadd.f32 0.0, %v772
  %v774 = vpop.f32.mrb[0].mxu0
  %v775 = vadd.f32 0.0, %v774
  %776 = vdwg.mxu0
  %777 = vmatprep.subr.bf16.mxu0 0
  %778 = vmatpush1.bf16.msra.mxu0 %v682
  %779 = vmatprep.subr.bf16.mxu0 0
  %780 = vmatpush1.bf16.msra.mxu0 %v685
  %781 = vmatprep.subr.bf16.mxu0 0
  %782 = vmatpush1.bf16.msra.mxu0 0
  %783 = vmatprep.subr.bf16.mxu0 0
  %784 = vmatpush1.bf16.msra.mxu0 0
  %785 = vmatprep.subr.bf16.mxu0 0
  %786 = vmatpush1.bf16.msra.mxu0 0
  %787 = vmatprep.subr.bf16.mxu0 0
  %788 = vmatpush1.bf16.msra.mxu0 0
  %789 = vmatprep.subr.bf16.mxu0 0
  %790 = vmatpush1.bf16.msra.mxu0 0
  %791 = vmatprep.subr.bf16.mxu0 0
  %792 = vmatpush1.bf16.msra.mxu0 0
  %793 = vmatprep.subr.bf16.mxu0 0
  %794 = vmatpush1.bf16.msra.mxu0 0
  %795 = vmatprep.subr.bf16.mxu0 0
  %796 = vmatpush1.bf16.msra.mxu0 0
  %797 = vmatprep.subr.bf16.mxu0 0
  %798 = vmatpush1.bf16.msra.mxu0 0
  %799 = vmatprep.subr.bf16.mxu0 0
  %800 = vmatpush1.bf16.msra.mxu0 0
  %801 = vmatprep.subr.bf16.mxu0 0
  %802 = vmatpush1.bf16.msra.mxu0 0
  %803 = vmatprep.subr.bf16.mxu0 0
  %804 = vmatpush1.bf16.msra.mxu0 0
  %805 = vmatprep.subr.bf16.mxu0 0
  %806 = vmatpush1.bf16.msra.mxu0 0
  %807 = vmatprep.subr.bf16.mxu0 0
  %808 = vmatpush1.bf16.msra.mxu0 0
  %809 = vmatprep.mubr.bf16.mxu0 0
  %810 = vmatmul.mubr.bf16.gmra.mrb[0].mxu0 %v693
  %v811 = vpop.f32.mrb[0].mxu0
  %v812 = vadd.f32 0.0, %v811
  %v813 = vpop.f32.mrb[0].mxu0
  %v814 = vpop.f32.mrb[0].mxu0
  %v815 = vadd.f32 0.0, %v814
  %v816 = vpop.f32.mrb[0].mxu0
  %817 = vmatprep.mubr.bf16.mxu0 0
  %818 = vmatmul.mubr.bf16.gmra.mrb[0].mxu0 %v696
  %v819 = vpop.f32.mrb[0].mxu0
  %v820 = vadd.f32 0.0, %v819
  %v821 = vpop.f32.mrb[0].mxu0
  %v822 = vpop.f32.mrb[0].mxu0
  %v823 = vadd.f32 0.0, %v822
  %v824 = vpop.f32.mrb[0].mxu0
  %825 = vmatprep.mubr.bf16.mxu0 0
  %826 = vmatmul.mubr.bf16.gmra.mrb[0].mxu0 %v699
  %v827 = vpop.f32.mrb[0].mxu0
  %v828 = vadd.f32 0.0, %v827
  %v829 = vpop.f32.mrb[0].mxu0
  %v830 = vpop.f32.mrb[0].mxu0
  %v831 = vadd.f32 0.0, %v830
  %v832 = vpop.f32.mrb[0].mxu0
  %833 = vmatprep.mubr.bf16.mxu0 0
  %834 = vmatmul.mubr.bf16.gmra.mrb[0].mxu0 %v702
  %v835 = vpop.f32.mrb[0].mxu0
  %v836 = vadd.f32 0.0, %v835
  %v837 = vpop.f32.mrb[0].mxu0
  %v838 = vpop.f32.mrb[0].mxu0
  %v839 = vadd.f32 0.0, %v838
  %v840 = vpop.f32.mrb[0].mxu0
  %841 = vdwg.mxu0
  %vm842 = vcmp.lt.s32.totalorder %v451, 16
  %vm843 = vcmp.lt.s32.totalorder %v622, 16
  %v844 = vsel %vm842, 0.0, -1e+30
  %v845 = vsel %vm843, 0.0, -1e+30
  %v846 = vadd.f32 %v739, %v844
  %v847 = vadd.f32 %v741, %v844
  %v848 = vadd.f32 %v812, %v844
  %v849 = vadd.f32 %v743, %v845
  %v850 = vadd.f32 %v745, %v845
  %v851 = vadd.f32 %v815, %v845
  %v852 = vadd.f32 %v749, %v844
  %v853 = vadd.f32 %v751, %v844
  %v854 = vadd.f32 %v820, %v844
  %v855 = vadd.f32 %v753, %v845
  %v856 = vadd.f32 %v755, %v845
  %v857 = vadd.f32 %v823, %v845
  %v858 = vadd.f32 %v759, %v844
  %v859 = vadd.f32 %v761, %v844
  %v860 = vadd.f32 %v828, %v844
  %v861 = vadd.f32 %v763, %v845
  %v862 = vadd.f32 %v765, %v845
  %v863 = vadd.f32 %v831, %v845
  %v864 = vadd.f32 %v769, %v844
  %v865 = vadd.f32 %v771, %v844
  %v866 = vadd.f32 %v836, %v844
  %v867 = vadd.f32 %v773, %v845
  %v868 = vadd.f32 %v775, %v845
  %v869 = vadd.f32 %v839, %v845
  %v870 = vmax.f32 %v846, %v849
  %v871 = vrot.slane %v870, 4
  %v872 = vmax.f32 %v870, %v871
  %v873 = vrot.slane %v872, 2
  %v874 = vmax.f32 %v872, %v873
  %v875 = vrot.slane %v874, 1
  %v876 = vmax.f32 %v874, %v875
  %v877 = vmax.f32 %v847, %v850
  %v878 = vrot.slane %v877, 4
  %v879 = vmax.f32 %v877, %v878
  %v880 = vrot.slane %v879, 2
  %v881 = vmax.f32 %v879, %v880
  %v882 = vrot.slane %v881, 1
  %v883 = vmax.f32 %v881, %v882
  %v884 = vsel %vm362, %v848, -inf
  %v885 = vsel %vm362, %v851, -inf
  %v886 = vmax.f32 %v884, %v885
  %v887 = vrot.slane %v886, 4
  %v888 = vmax.f32 %v886, %v887
  %v889 = vrot.slane %v888, 2
  %v890 = vmax.f32 %v888, %v889
  %v891 = vrot.slane %v890, 1
  %v892 = vmax.f32 %v890, %v891
  %v893 = vmax.f32 %v852, %v855
  %v894 = vrot.slane %v893, 4
  %v895 = vmax.f32 %v893, %v894
  %v896 = vrot.slane %v895, 2
  %v897 = vmax.f32 %v895, %v896
  %v898 = vrot.slane %v897, 1
  %v899 = vmax.f32 %v897, %v898
  %v900 = vmax.f32 %v853, %v856
  %v901 = vrot.slane %v900, 4
  %v902 = vmax.f32 %v900, %v901
  %v903 = vrot.slane %v902, 2
  %v904 = vmax.f32 %v902, %v903
  %v905 = vrot.slane %v904, 1
  %v906 = vmax.f32 %v904, %v905
  %v907 = vsel %vm362, %v854, -inf
  %v908 = vsel %vm362, %v857, -inf
  %v909 = vmax.f32 %v907, %v908
  %v910 = vrot.slane %v909, 4
  %v911 = vmax.f32 %v909, %v910
  %v912 = vrot.slane %v911, 2
  %v913 = vmax.f32 %v911, %v912
  %v914 = vrot.slane %v913, 1
  %v915 = vmax.f32 %v913, %v914
  %v916 = vmax.f32 %v858, %v861
  %v917 = vrot.slane %v916, 4
  %v918 = vmax.f32 %v916, %v917
  %v919 = vrot.slane %v918, 2
  %v920 = vmax.f32 %v918, %v919
  %v921 = vrot.slane %v920, 1
  %v922 = vmax.f32 %v920, %v921
  %v923 = vmax.f32 %v859, %v862
  %v924 = vrot.slane %v923, 4
  %v925 = vmax.f32 %v923, %v924
  %v926 = vrot.slane %v925, 2
  %v927 = vmax.f32 %v925, %v926
  %v928 = vrot.slane %v927, 1
  %v929 = vmax.f32 %v927, %v928
  %v930 = vsel %vm362, %v860, -inf
  %v931 = vsel %vm362, %v863, -inf
  %v932 = vmax.f32 %v930, %v931
  %v933 = vrot.slane %v932, 4
  %v934 = vmax.f32 %v932, %v933
  %v935 = vrot.slane %v934, 2
  %v936 = vmax.f32 %v934, %v935
  %v937 = vrot.slane %v936, 1
  %v938 = vmax.f32 %v936, %v937
  %v939 = vmax.f32 %v864, %v867
  %v940 = vrot.slane %v939, 4
  %v941 = vmax.f32 %v939, %v940
  %v942 = vrot.slane %v941, 2
  %v943 = vmax.f32 %v941, %v942
  %v944 = vrot.slane %v943, 1
  %v945 = vmax.f32 %v943, %v944
  %v946 = vmax.f32 %v865, %v868
  %v947 = vrot.slane %v946, 4
  %v948 = vmax.f32 %v946, %v947
  %v949 = vrot.slane %v948, 2
  %v950 = vmax.f32 %v948, %v949
  %v951 = vrot.slane %v950, 1
  %v952 = vmax.f32 %v950, %v951
  %v953 = vsel %vm362, %v866, -inf
  %v954 = vsel %vm362, %v869, -inf
  %v955 = vmax.f32 %v953, %v954
  %v956 = vrot.slane %v955, 4
  %v957 = vmax.f32 %v955, %v956
  %v958 = vrot.slane %v957, 2
  %v959 = vmax.f32 %v957, %v958
  %v960 = vrot.slane %v959, 1
  %v961 = vmax.f32 %v959, %v960
  %s962 = scalar_lea.vmem %s3, 3
  %v963 = vld [vmem:[%s962] ss:$8 sm:$0x7]
  %v965 = vlaneseq
  %v966 = vshrl.u32 %v965, 7
  %v967 = vsub.s32 0, %v966
  %v968 = vrot.slane %v963, %v967
  %v969 = vlaneseq
  %v970 = vshrl.u32 %v969, 7
  %v971 = vsub.s32 1, %v970
  %v972 = vrot.slane %v963, %v971
  %v973 = vlaneseq
  %v974 = vshrl.u32 %v973, 7
  %v975 = vsub.s32 2, %v974
  %v976 = vrot.slane %v963, %v975
  %v980 = vadd.f32 %v876, %v968
  %v981 = vadd.f32 %v883, %v972
  %v982 = vadd.f32 %v892, %v976
  %v983 = vadd.f32 %v899, %v968
  %v984 = vadd.f32 %v906, %v972
  %v985 = vadd.f32 %v915, %v976
  %v986 = vadd.f32 %v922, %v968
  %v987 = vadd.f32 %v929, %v972
  %v988 = vadd.f32 %v938, %v976
  %v989 = vadd.f32 %v945, %v968
  %v990 = vadd.f32 %v952, %v972
  %v991 = vadd.f32 %v961, %v976
  %v995 = vrot.slane %v548, 1
  %v996 = vrot.slane %v550, 1
  %v997 = vrot.slane %v619, 1
  %v998 = vrot.slane %v548, 2
  %v999 = vrot.slane %v550, 2
  %v1000 = vrot.slane %v619, 2
  %v1001 = vrot.slane %v548, 3
  %v1002 = vrot.slane %v550, 3
  %v1003 = vrot.slane %v619, 3
  %v1016 = vmul.f32 %v980, %v548
  %v1017 = vmul.f32 %v981, %v550
  %v1018 = vmul.f32 %v982, %v619
  %v1019 = vmul.f32 %v983, %v995
  %v1020 = vmul.f32 %v984, %v996
  %v1021 = vmul.f32 %v985, %v997
  %v1022 = vmul.f32 %v986, %v998
  %v1023 = vmul.f32 %v987, %v999
  %v1024 = vmul.f32 %v988, %v1000
  %v1025 = vmul.f32 %v989, %v1001
  %v1026 = vmul.f32 %v990, %v1002
  %v1027 = vmul.f32 %v991, %v1003
  %v1028 = vpack.c.bf16 %v1016, %v1016
  %v1029 = vpack.c.bf16 %v1017, %v1017
  %v1030 = vpack.c.bf16 %v1018, %v1018
  %v1031 = vpack.c.bf16 %v1019, %v1019
  %v1032 = vpack.c.bf16 %v1020, %v1020
  %v1033 = vpack.c.bf16 %v1021, %v1021
  %v1034 = vpack.c.bf16 %v1022, %v1022
  %v1035 = vpack.c.bf16 %v1023, %v1023
  %v1036 = vpack.c.bf16 %v1024, %v1024
  %v1037 = vpack.c.bf16 %v1025, %v1025
  %v1038 = vpack.c.bf16 %v1026, %v1026
  %v1039 = vpack.c.bf16 %v1027, %v1027
  %v1040 = vld [vmem:[%s5] sm:$0xf]
  %v1041 = vld [vmem:[%s5 + $0x4] sm:$0xf]
  %v1042 = vld [vmem:[%s5 + $0x8] sm:$0xf]
  %v1043 = vld [vmem:[%s5 + $0xc] sm:$0xf]
  %v1044 = vld [vmem:[%s5 + $0x10] sm:$0xf]
  %v1045 = vld [vmem:[%s5 + $0x14] sm:$0xf]
  %v1046 = vld [vmem:[%s5 + $0x18] sm:$0xf]
  %v1047 = vld [vmem:[%s5 + $0x1c] sm:$0xf]
  %v1048 = vld [vmem:[%s5 + $0x20] sm:$0xf]
  %v1049 = vld [vmem:[%s5 + $0x24] sm:$0xf]
  %v1050 = vld [vmem:[%s5 + $0x28] sm:$0xf]
  %v1051 = vld [vmem:[%s5 + $0x2c] sm:$0xf]
  %v1052 = vld [vmem:[%s5 + $0x30] sm:$0xf]
  %v1053 = vld [vmem:[%s5 + $0x34] sm:$0xf]
  %v1054 = vld [vmem:[%s5 + $0x38] sm:$0xf]
  %v1055 = vld [vmem:[%s5 + $0x3c] sm:$0xf]
  %v1056 = vld [vmem:[%s5 + $0x40] sm:$0xf]
  %v1057 = vld [vmem:[%s5 + $0x44] sm:$0xf]
  %v1058 = vld [vmem:[%s5 + $0x48] sm:$0xf]
  %v1059 = vld [vmem:[%s5 + $0x4c] sm:$0xf]
  %v1060 = vld [vmem:[%s5 + $0x50] sm:$0xf]
  %v1061 = vld [vmem:[%s5 + $0x54] sm:$0xf]
  %v1062 = vld [vmem:[%s5 + $0x58] sm:$0xf]
  %v1063 = vld [vmem:[%s5 + $0x5c] sm:$0xf]
  %v1064 = vld [vmem:[%s5 + $0x60] sm:$0xf]
  %v1065 = vld [vmem:[%s5 + $0x64] sm:$0xf]
  %v1066 = vld [vmem:[%s5 + $0x68] sm:$0xf]
  %v1067 = vld [vmem:[%s5 + $0x6c] sm:$0xf]
  %v1068 = vld [vmem:[%s5 + $0x70] sm:$0xf]
  %v1069 = vld [vmem:[%s5 + $0x74] sm:$0xf]
  %v1070 = vld [vmem:[%s5 + $0x78] sm:$0xf]
  %v1071 = vld [vmem:[%s5 + $0x7c] sm:$0xf]
  %v1072 = vld [vmem:[%s5 + $0x80] sm:$0xf]
  %v1073 = vld [vmem:[%s5 + $0x84] sm:$0xf]
  %v1074 = vld [vmem:[%s5 + $0x88] sm:$0xf]
  %v1075 = vld [vmem:[%s5 + $0x8c] sm:$0xf]
  %v1076 = vld [vmem:[%s5 + $0x90] sm:$0xf]
  %v1077 = vld [vmem:[%s5 + $0x94] sm:$0xf]
  %v1078 = vld [vmem:[%s5 + $0x98] sm:$0xf]
  %v1079 = vld [vmem:[%s5 + $0x9c] sm:$0xf]
  %v1092 = vunpack.c.l.b16 %v1028
  %v1093 = vunpack.c.l.b16 %v1029
  %v1094 = vunpack.c.l.b16 %v1030
  %v1095 = vunpack.c.l.b16 %v1031
  %v1096 = vunpack.c.l.b16 %v1032
  %v1097 = vunpack.c.l.b16 %v1033
  %v1098 = vunpack.c.l.b16 %v1034
  %v1099 = vunpack.c.l.b16 %v1035
  %v1100 = vunpack.c.l.b16 %v1036
  %v1101 = vunpack.c.l.b16 %v1037
  %v1102 = vunpack.c.l.b16 %v1038
  %v1103 = vunpack.c.l.b16 %v1039
  %v1104 = vrot.slane %v1095, 7
  %v1105 = vsel %vm129, %v1104, %v1092
  %v1106 = vrot.slane %v1098, 6
  %v1107 = vsel %vm131, %v1106, %v1105
  %v1108 = vrot.slane %v1101, 5
  %v1109 = vsel %vm133, %v1108, %v1107
  %v1110 = vrot.slane %v1096, 7
  %v1111 = vsel %vm129, %v1110, %v1093
  %v1112 = vrot.slane %v1099, 6
  %v1113 = vsel %vm131, %v1112, %v1111
  %v1114 = vrot.slane %v1102, 5
  %v1115 = vsel %vm133, %v1114, %v1113
  %v1116 = vrot.slane %v1097, 7
  %v1117 = vsel %vm129, %v1116, %v1094
  %v1118 = vrot.slane %v1100, 6
  %v1119 = vsel %vm131, %v1118, %v1117
  %v1120 = vrot.slane %v1103, 5
  %v1121 = vsel %vm133, %v1120, %v1119
  %v1122 = vpack.c.b16 %v1109, %v1109
  %v1123 = vpack.c.b16 %v1115, %v1115
  %v1124 = vpack.c.b16 %v1121, %v1121
  %v1167 = vunpack.c.l.b16 %v1040
  %v1168 = vunpack.c.l.b16 %v1041
  %v1169 = vunpack.c.l.b16 %v1042
  %v1170 = vunpack.c.l.b16 %v1043
  %v1171 = vunpack.c.l.b16 %v1044
  %v1172 = vunpack.c.l.b16 %v1045
  %v1173 = vunpack.c.l.b16 %v1046
  %v1174 = vunpack.c.l.b16 %v1047
  %v1175 = vunpack.c.l.b16 %v1048
  %v1176 = vunpack.c.l.b16 %v1049
  %v1177 = vunpack.c.l.b16 %v1050
  %v1178 = vunpack.c.l.b16 %v1051
  %v1179 = vunpack.c.l.b16 %v1052
  %v1180 = vunpack.c.l.b16 %v1053
  %v1181 = vunpack.c.l.b16 %v1054
  %v1182 = vunpack.c.l.b16 %v1055
  %v1183 = vunpack.c.l.b16 %v1056
  %v1184 = vunpack.c.l.b16 %v1057
  %v1185 = vunpack.c.l.b16 %v1058
  %v1186 = vunpack.c.l.b16 %v1059
  %v1187 = vunpack.c.l.b16 %v1060
  %v1188 = vunpack.c.l.b16 %v1061
  %v1189 = vunpack.c.l.b16 %v1062
  %v1190 = vunpack.c.l.b16 %v1063
  %v1191 = vunpack.c.l.b16 %v1064
  %v1192 = vunpack.c.l.b16 %v1065
  %v1193 = vunpack.c.l.b16 %v1066
  %v1194 = vunpack.c.l.b16 %v1067
  %v1195 = vunpack.c.l.b16 %v1068
  %v1196 = vunpack.c.l.b16 %v1069
  %v1197 = vunpack.c.l.b16 %v1070
  %v1198 = vunpack.c.l.b16 %v1071
  %v1199 = vunpack.c.l.b16 %v1072
  %v1200 = vunpack.c.l.b16 %v1073
  %v1201 = vunpack.c.l.b16 %v1074
  %v1202 = vunpack.c.l.b16 %v1075
  %v1203 = vunpack.c.l.b16 %v1076
  %v1204 = vunpack.c.l.b16 %v1077
  %v1205 = vunpack.c.l.b16 %v1078
  %v1206 = vunpack.c.l.b16 %v1079
  %v1207 = vpack.c.b16 %v1168, %v1167
  %v1208 = vpack.c.b16 %v1170, %v1169
  %v1209 = vpack.c.b16 %v1172, %v1171
  %v1210 = vpack.c.b16 %v1174, %v1173
  %v1211 = vpack.c.b16 %v1176, %v1175
  %v1212 = vpack.c.b16 %v1178, %v1177
  %v1213 = vpack.c.b16 %v1180, %v1179
  %v1214 = vpack.c.b16 %v1182, %v1181
  %v1215 = vpack.c.b16 %v1184, %v1183
  %v1216 = vpack.c.b16 %v1186, %v1185
  %v1217 = vpack.c.b16 %v1188, %v1187
  %v1218 = vpack.c.b16 %v1190, %v1189
  %v1219 = vpack.c.b16 %v1192, %v1191
  %v1220 = vpack.c.b16 %v1194, %v1193
  %v1221 = vpack.c.b16 %v1196, %v1195
  %v1222 = vpack.c.b16 %v1198, %v1197
  %v1223 = vpack.c.b16 %v1200, %v1199
  %v1224 = vpack.c.b16 %v1202, %v1201
  %v1225 = vpack.c.b16 %v1204, %v1203
  %v1226 = vpack.c.b16 %v1206, %v1205
  %v1248 = vsel %vm362, %v1124, 0
  %1250 = vmatprep.subr.bf16.mxu0 0
  %1251 = vmatpush1.bf16.msra.mxu0 %v1207
  %1252 = vmatprep.subr.bf16.mxu0 0
  %1253 = vmatpush1.bf16.msra.mxu0 %v1208
  %1254 = vmatprep.subr.bf16.mxu0 0
  %1255 = vmatpush1.bf16.msra.mxu0 %v1209
  %1256 = vmatprep.subr.bf16.mxu0 0
  %1257 = vmatpush1.bf16.msra.mxu0 %v1210
  %1258 = vmatprep.subr.bf16.mxu0 0
  %1259 = vmatpush1.bf16.msra.mxu0 %v1211
  %1260 = vmatprep.subr.bf16.mxu0 0
  %1261 = vmatpush1.bf16.msra.mxu0 %v1212
  %1262 = vmatprep.subr.bf16.mxu0 0
  %1263 = vmatpush1.bf16.msra.mxu0 %v1213
  %1264 = vmatprep.subr.bf16.mxu0 0
  %1265 = vmatpush1.bf16.msra.mxu0 %v1214
  %1266 = vmatprep.subr.bf16.mxu0 0
  %1267 = vmatpush1.bf16.msra.mxu0 %v1215
  %1268 = vmatprep.subr.bf16.mxu0 0
  %1269 = vmatpush1.bf16.msra.mxu0 %v1216
  %1270 = vmatprep.subr.bf16.mxu0 0
  %1271 = vmatpush1.bf16.msra.mxu0 %v1217
  %1272 = vmatprep.subr.bf16.mxu0 0
  %1273 = vmatpush1.bf16.msra.mxu0 %v1218
  %1274 = vmatprep.subr.bf16.mxu0 0
  %1275 = vmatpush1.bf16.msra.mxu0 %v1219
  %1276 = vmatprep.subr.bf16.mxu0 0
  %1277 = vmatpush1.bf16.msra.mxu0 %v1220
  %1278 = vmatprep.subr.bf16.mxu0 0
  %1279 = vmatpush1.bf16.msra.mxu0 %v1221
  %1280 = vmatprep.subr.bf16.mxu0 0
  %1281 = vmatpush1.bf16.msra.mxu0 %v1222
  %1282 = vmatprep.mubr.bf16.mxu0 %v1123
  %1283 = vmatmul.mubr.bf16.gmra.mrb[0].mxu0 %v1122
  %v1284 = vpop.f32.mrb[0].mxu0
  %v1285 = vadd.f32 0.0, %v1284
  %v1286 = vpop.f32.mrb[0].mxu0
  %v1287 = vpop.f32.mrb[0].mxu0
  %v1288 = vpop.f32.mrb[0].mxu0
  %1289 = vdwg.mxu0
  %1290 = vmatprep.subr.bf16.mxu0 0
  %1291 = vmatpush1.bf16.msra.mxu0 %v1223
  %1292 = vmatprep.subr.bf16.mxu0 0
  %1293 = vmatpush1.bf16.msra.mxu0 %v1224
  %1294 = vmatprep.subr.bf16.mxu0 0
  %1295 = vmatpush1.bf16.msra.mxu0 %v1225
  %1296 = vmatprep.subr.bf16.mxu0 0
  %1297 = vmatpush1.bf16.msra.mxu0 %v1226
  %1298 = vmatprep.subr.bf16.mxu0 0
  %1299 = vmatpush1.bf16.msra.mxu0 0
  %1300 = vmatprep.subr.bf16.mxu0 0
  %1301 = vmatpush1.bf16.msra.mxu0 0
  %1302 = vmatprep.subr.bf16.mxu0 0
  %1303 = vmatpush1.bf16.msra.mxu0 0
  %1304 = vmatprep.subr.bf16.mxu0 0
  %1305 = vmatpush1.bf16.msra.mxu0 0
  %1306 = vmatprep.subr.bf16.mxu0 0
  %1307 = vmatpush1.bf16.msra.mxu0 0
  %1308 = vmatprep.subr.bf16.mxu0 0
  %1309 = vmatpush1.bf16.msra.mxu0 0
  %1310 = vmatprep.subr.bf16.mxu0 0
  %1311 = vmatpush1.bf16.msra.mxu0 0
  %1312 = vmatprep.subr.bf16.mxu0 0
  %1313 = vmatpush1.bf16.msra.mxu0 0
  %1314 = vmatprep.subr.bf16.mxu0 0
  %1315 = vmatpush1.bf16.msra.mxu0 0
  %1316 = vmatprep.subr.bf16.mxu0 0
  %1317 = vmatpush1.bf16.msra.mxu0 0
  %1318 = vmatprep.subr.bf16.mxu0 0
  %1319 = vmatpush1.bf16.msra.mxu0 0
  %1320 = vmatprep.subr.bf16.mxu0 0
  %1321 = vmatpush1.bf16.msra.mxu0 0
  %1322 = vmatprep.mubr.bf16.mxu0 0
  %1323 = vmatmul.mubr.bf16.gmra.mrb[0].mxu0 %v1248
  %v1324 = vpop.f32.mrb[0].mxu0
  %v1325 = vadd.f32 %v1285, %v1324
  %v1326 = vpop.f32.mrb[0].mxu0
  %v1327 = vpop.f32.mrb[0].mxu0
  %v1328 = vpop.f32.mrb[0].mxu0
  %1329 = vdwg.mxu0
  %v1330 = vadd.f32 %v623, %v1325
  %v1331 = vld [vmem:[%s4 + $0x30] sm:$0xff]
  %v1332 = vld [vmem:[%s4 + $0x38] sm:$0xf]
  %v1333 = vld [vmem:[%s4 + $0x3c] sm:$0xff]
  %v1334 = vld [vmem:[%s4 + $0x44] sm:$0xf]
  %v1335 = vld [vmem:[%s4 + $0x48] sm:$0xff]
  %v1336 = vld [vmem:[%s4 + $0x50] sm:$0xf]
  %v1337 = vld [vmem:[%s4 + $0x54] sm:$0xff]
  %v1338 = vld [vmem:[%s4 + $0x5c] sm:$0xf]
  %v1339 = vld [vmem:[%s4 + $0x60] sm:$0xff]
  %v1340 = vld [vmem:[%s4 + $0x68] sm:$0xf]
  %v1341 = vld [vmem:[%s4 + $0x6c] sm:$0xff]
  %v1342 = vld [vmem:[%s4 + $0x74] sm:$0xf]
  %v1343 = vld [vmem:[%s4 + $0x78] sm:$0xff]
  %v1344 = vld [vmem:[%s4 + $0x80] sm:$0xf]
  %v1345 = vld [vmem:[%s4 + $0x84] sm:$0xff]
  %v1346 = vld [vmem:[%s4 + $0x8c] sm:$0xf]
  %v1363 = vunpack.c.l.b16 %v1331
  %v1364 = vunpack.c.h.b16 %v1331
  %v1365 = vunpack.c.l.b16 %v1332
  %v1366 = vunpack.c.l.b16 %v1333
  %v1367 = vunpack.c.h.b16 %v1333
  %v1368 = vunpack.c.l.b16 %v1334
  %v1369 = vunpack.c.l.b16 %v1335
  %v1370 = vunpack.c.h.b16 %v1335
  %v1371 = vunpack.c.l.b16 %v1336
  %v1372 = vunpack.c.l.b16 %v1337
  %v1373 = vunpack.c.h.b16 %v1337
  %v1374 = vunpack.c.l.b16 %v1338
  %v1375 = vunpack.c.l.b16 %v1339
  %v1376 = vunpack.c.h.b16 %v1339
  %v1377 = vunpack.c.l.b16 %v1340
  %v1378 = vunpack.c.l.b16 %v1341
  %v1379 = vunpack.c.h.b16 %v1341
  %v1380 = vunpack.c.l.b16 %v1342
  %v1381 = vunpack.c.l.b16 %v1343
  %v1382 = vunpack.c.h.b16 %v1343
  %v1383 = vunpack.c.l.b16 %v1344
  %v1384 = vunpack.c.l.b16 %v1345
  %v1385 = vunpack.c.h.b16 %v1345
  %v1386 = vunpack.c.l.b16 %v1346
  %v1387 = vpack.c.b16 %v1366, %v1363
  %v1388 = vpack.c.b16 %v1367, %v1364
  %v1389 = vpack.c.b16 %v1368, %v1365
  %v1390 = vpack.c.b16 %v1372, %v1369
  %v1391 = vpack.c.b16 %v1373, %v1370
  %v1392 = vpack.c.b16 %v1374, %v1371
  %v1393 = vpack.c.b16 %v1378, %v1375
  %v1394 = vpack.c.b16 %v1379, %v1376
  %v1395 = vpack.c.b16 %v1380, %v1377
  %v1396 = vpack.c.b16 %v1384, %v1381
  %v1397 = vpack.c.b16 %v1385, %v1382
  %v1398 = vpack.c.b16 %v1386, %v1383
  %v1411 = vsel %vm362, %v656, 0
  %v1413 = vsel %vm362, %v657, 0
  %v1415 = vsel %vm362, %v658, 0
  %v1417 = vsel %vm362, %v659, 0
  %1419 = vmatprep.subr.bf16.mxu0 %v1388
  %1420 = vmatpush1.bf16.msra.mxu0 %v1387
  %1421 = vmatprep.subr.bf16.mxu0 %v1391
  %1422 = vmatpush1.bf16.msra.mxu0 %v1390
  %1423 = vmatprep.subr.bf16.mxu0 %v1394
  %1424 = vmatpush1.bf16.msra.mxu0 %v1393
  %1425 = vmatprep.subr.bf16.mxu0 %v1397
  %1426 = vmatpush1.bf16.msra.mxu0 %v1396
  %1427 = vmatprep.subr.bf16.mxu0 0
  %1428 = vmatpush1.bf16.msra.mxu0 0
  %1429 = vmatprep.subr.bf16.mxu0 0
  %1430 = vmatpush1.bf16.msra.mxu0 0
  %1431 = vmatprep.subr.bf16.mxu0 0
  %1432 = vmatpush1.bf16.msra.mxu0 0
  %1433 = vmatprep.subr.bf16.mxu0 0
  %1434 = vmatpush1.bf16.msra.mxu0 0
  %1435 = vmatprep.subr.bf16.mxu0 0
  %1436 = vmatpush1.bf16.msra.mxu0 0
  %1437 = vmatprep.subr.bf16.mxu0 0
  %1438 = vmatpush1.bf16.msra.mxu0 0
  %1439 = vmatprep.subr.bf16.mxu0 0
  %1440 = vmatpush1.bf16.msra.mxu0 0
  %1441 = vmatprep.subr.bf16.mxu0 0
  %1442 = vmatpush1.bf16.msra.mxu0 0
  %1443 = vmatprep.subr.bf16.mxu0 0
  %1444 = vmatpush1.bf16.msra.mxu0 0
  %1445 = vmatprep.subr.bf16.mxu0 0
  %1446 = vmatpush1.bf16.msra.mxu0 0
  %1447 = vmatprep.subr.bf16.mxu0 0
  %1448 = vmatpush1.bf16.msra.mxu0 0
  %1449 = vmatprep.subr.bf16.mxu0 0
  %1450 = vmatpush1.bf16.msra.mxu0 0
  %1451 = vmatprep.mubr.bf16.mxu0 0
  %1452 = vmatmul.mubr.bf16.gmra.mrb[0].mxu0 %v1411
  %v1453 = vpop.f32.mrb[0].mxu0
  %v1454 = vadd.f32 0.0, %v1453
  %v1455 = vpop.f32.mrb[0].mxu0
  %v1456 = vadd.f32 0.0, %v1455
  %v1457 = vpop.f32.mrb[0].mxu0
  %v1458 = vadd.f32 0.0, %v1457
  %v1459 = vpop.f32.mrb[0].mxu0
  %v1460 = vadd.f32 0.0, %v1459
  %1461 = vmatprep.mubr.bf16.mxu0 0
  %1462 = vmatmul.mubr.bf16.gmra.mrb[0].mxu0 %v1413
  %v1463 = vpop.f32.mrb[0].mxu0
  %v1464 = vadd.f32 0.0, %v1463
  %v1465 = vpop.f32.mrb[0].mxu0
  %v1466 = vadd.f32 0.0, %v1465
  %v1467 = vpop.f32.mrb[0].mxu0
  %v1468 = vadd.f32 0.0, %v1467
  %v1469 = vpop.f32.mrb[0].mxu0
  %v1470 = vadd.f32 0.0, %v1469
  %1471 = vmatprep.mubr.bf16.mxu0 0
  %1472 = vmatmul.mubr.bf16.gmra.mrb[0].mxu0 %v1415
  %v1473 = vpop.f32.mrb[0].mxu0
  %v1474 = vadd.f32 0.0, %v1473
  %v1475 = vpop.f32.mrb[0].mxu0
  %v1476 = vadd.f32 0.0, %v1475
  %v1477 = vpop.f32.mrb[0].mxu0
  %v1478 = vadd.f32 0.0, %v1477
  %v1479 = vpop.f32.mrb[0].mxu0
  %v1480 = vadd.f32 0.0, %v1479
  %1481 = vmatprep.mubr.bf16.mxu0 0
  %1482 = vmatmul.mubr.bf16.gmra.mrb[0].mxu0 %v1417
  %v1483 = vpop.f32.mrb[0].mxu0
  %v1484 = vadd.f32 0.0, %v1483
  %v1485 = vpop.f32.mrb[0].mxu0
  %v1486 = vadd.f32 0.0, %v1485
  %v1487 = vpop.f32.mrb[0].mxu0
  %v1488 = vadd.f32 0.0, %v1487
  %v1489 = vpop.f32.mrb[0].mxu0
  %v1490 = vadd.f32 0.0, %v1489
  %1491 = vdwg.mxu0
  %1492 = vmatprep.subr.bf16.mxu0 0
  %1493 = vmatpush1.bf16.msra.mxu0 %v1389
  %1494 = vmatprep.subr.bf16.mxu0 0
  %1495 = vmatpush1.bf16.msra.mxu0 %v1392
  %1496 = vmatprep.subr.bf16.mxu0 0
  %1497 = vmatpush1.bf16.msra.mxu0 %v1395
  %1498 = vmatprep.subr.bf16.mxu0 0
  %1499 = vmatpush1.bf16.msra.mxu0 %v1398
  %1500 = vmatprep.subr.bf16.mxu0 0
  %1501 = vmatpush1.bf16.msra.mxu0 0
  %1502 = vmatprep.subr.bf16.mxu0 0
  %1503 = vmatpush1.bf16.msra.mxu0 0
  %1504 = vmatprep.subr.bf16.mxu0 0
  %1505 = vmatpush1.bf16.msra.mxu0 0
  %1506 = vmatprep.subr.bf16.mxu0 0
  %1507 = vmatpush1.bf16.msra.mxu0 0
  %1508 = vmatprep.subr.bf16.mxu0 0
  %1509 = vmatpush1.bf16.msra.mxu0 0
  %1510 = vmatprep.subr.bf16.mxu0 0
  %1511 = vmatpush1.bf16.msra.mxu0 0
  %1512 = vmatprep.subr.bf16.mxu0 0
  %1513 = vmatpush1.bf16.msra.mxu0 0
  %1514 = vmatprep.subr.bf16.mxu0 0
  %1515 = vmatpush1.bf16.msra.mxu0 0
  %1516 = vmatprep.subr.bf16.mxu0 0
  %1517 = vmatpush1.bf16.msra.mxu0 0
  %1518 = vmatprep.subr.bf16.mxu0 0
  %1519 = vmatpush1.bf16.msra.mxu0 0
  %1520 = vmatprep.subr.bf16.mxu0 0
  %1521 = vmatpush1.bf16.msra.mxu0 0
  %1522 = vmatprep.subr.bf16.mxu0 0
  %1523 = vmatpush1.bf16.msra.mxu0 0
  %1524 = vmatprep.mubr.bf16.mxu0 0
  %1525 = vmatmul.mubr.bf16.gmra.mrb[0].mxu0 %v1411
  %v1526 = vpop.f32.mrb[0].mxu0
  %v1527 = vadd.f32 0.0, %v1526
  %v1528 = vpop.f32.mrb[0].mxu0
  %v1529 = vpop.f32.mrb[0].mxu0
  %v1530 = vadd.f32 0.0, %v1529
  %v1531 = vpop.f32.mrb[0].mxu0
  %1532 = vmatprep.mubr.bf16.mxu0 0
  %1533 = vmatmul.mubr.bf16.gmra.mrb[0].mxu0 %v1413
  %v1534 = vpop.f32.mrb[0].mxu0
  %v1535 = vadd.f32 0.0, %v1534
  %v1536 = vpop.f32.mrb[0].mxu0
  %v1537 = vpop.f32.mrb[0].mxu0
  %v1538 = vadd.f32 0.0, %v1537
  %v1539 = vpop.f32.mrb[0].mxu0
  %1540 = vmatprep.mubr.bf16.mxu0 0
  %1541 = vmatmul.mubr.bf16.gmra.mrb[0].mxu0 %v1415
  %v1542 = vpop.f32.mrb[0].mxu0
  %v1543 = vadd.f32 0.0, %v1542
  %v1544 = vpop.f32.mrb[0].mxu0
  %v1545 = vpop.f32.mrb[0].mxu0
  %v1546 = vadd.f32 0.0, %v1545
  %v1547 = vpop.f32.mrb[0].mxu0
  %1548 = vmatprep.mubr.bf16.mxu0 0
  %1549 = vmatmul.mubr.bf16.gmra.mrb[0].mxu0 %v1417
  %v1550 = vpop.f32.mrb[0].mxu0
  %v1551 = vadd.f32 0.0, %v1550
  %v1552 = vpop.f32.mrb[0].mxu0
  %v1553 = vpop.f32.mrb[0].mxu0
  %v1554 = vadd.f32 0.0, %v1553
  %v1555 = vpop.f32.mrb[0].mxu0
  %1556 = vdwg.mxu0
  %vm1557 = vcmp.lt.s32.totalorder %v451, 15
  %vm1558 = vcmp.lt.s32.totalorder %v622, 15
  %v1559 = vsel %vm1557, 0.0, -1e+30
  %v1560 = vsel %vm1558, 0.0, -1e+30
  %v1561 = vadd.f32 %v1454, %v1559
  %v1562 = vadd.f32 %v1456, %v1559
  %v1563 = vadd.f32 %v1527, %v1559
  %v1564 = vadd.f32 %v1458, %v1560
  %v1565 = vadd.f32 %v1460, %v1560
  %v1566 = vadd.f32 %v1530, %v1560
  %v1567 = vadd.f32 %v1464, %v1559
  %v1568 = vadd.f32 %v1466, %v1559
  %v1569 = vadd.f32 %v1535, %v1559
  %v1570 = vadd.f32 %v1468, %v1560
  %v1571 = vadd.f32 %v1470, %v1560
  %v1572 = vadd.f32 %v1538, %v1560
  %v1573 = vadd.f32 %v1474, %v1559
  %v1574 = vadd.f32 %v1476, %v1559
  %v1575 = vadd.f32 %v1543, %v1559
  %v1576 = vadd.f32 %v1478, %v1560
  %v1577 = vadd.f32 %v1480, %v1560
  %v1578 = vadd.f32 %v1546, %v1560
  %v1579 = vadd.f32 %v1484, %v1559
  %v1580 = vadd.f32 %v1486, %v1559
  %v1581 = vadd.f32 %v1551, %v1559
  %v1582 = vadd.f32 %v1488, %v1560
  %v1583 = vadd.f32 %v1490, %v1560
  %v1584 = vadd.f32 %v1554, %v1560
  %v1585 = vmax.f32 %v1561, %v1564
  %v1586 = vrot.slane %v1585, 4
  %v1587 = vmax.f32 %v1585, %v1586
  %v1588 = vrot.slane %v1587, 2
  %v1589 = vmax.f32 %v1587, %v1588
  %v1590 = vrot.slane %v1589, 1
  %v1591 = vmax.f32 %v1589, %v1590
  %v1592 = vmax.f32 %v1562, %v1565
  %v1593 = vrot.slane %v1592, 4
  %v1594 = vmax.f32 %v1592, %v1593
  %v1595 = vrot.slane %v1594, 2
  %v1596 = vmax.f32 %v1594, %v1595
  %v1597 = vrot.slane %v1596, 1
  %v1598 = vmax.f32 %v1596, %v1597
  %v1599 = vsel %vm362, %v1563, -inf
  %v1600 = vsel %vm362, %v1566, -inf
  %v1601 = vmax.f32 %v1599, %v1600
  %v1602 = vrot.slane %v1601, 4
  %v1603 = vmax.f32 %v1601, %v1602
  %v1604 = vrot.slane %v1603, 2
  %v1605 = vmax.f32 %v1603, %v1604
  %v1606 = vrot.slane %v1605, 1
  %v1607 = vmax.f32 %v1605, %v1606
  %v1608 = vmax.f32 %v1567, %v1570
  %v1609 = vrot.slane %v1608, 4
  %v1610 = vmax.f32 %v1608, %v1609
  %v1611 = vrot.slane %v1610, 2
  %v1612 = vmax.f32 %v1610, %v1611
  %v1613 = vrot.slane %v1612, 1
  %v1614 = vmax.f32 %v1612, %v1613
  %v1615 = vmax.f32 %v1568, %v1571
  %v1616 = vrot.slane %v1615, 4
  %v1617 = vmax.f32 %v1615, %v1616
  %v1618 = vrot.slane %v1617, 2
  %v1619 = vmax.f32 %v1617, %v1618
  %v1620 = vrot.slane %v1619, 1
  %v1621 = vmax.f32 %v1619, %v1620
  %v1622 = vsel %vm362, %v1569, -inf
  %v1623 = vsel %vm362, %v1572, -inf
  %v1624 = vmax.f32 %v1622, %v1623
  %v1625 = vrot.slane %v1624, 4
  %v1626 = vmax.f32 %v1624, %v1625
  %v1627 = vrot.slane %v1626, 2
  %v1628 = vmax.f32 %v1626, %v1627
  %v1629 = vrot.slane %v1628, 1
  %v1630 = vmax.f32 %v1628, %v1629
  %v1631 = vmax.f32 %v1573, %v1576
  %v1632 = vrot.slane %v1631, 4
  %v1633 = vmax.f32 %v1631, %v1632
  %v1634 = vrot.slane %v1633, 2
  %v1635 = vmax.f32 %v1633, %v1634
  %v1636 = vrot.slane %v1635, 1
  %v1637 = vmax.f32 %v1635, %v1636
  %v1638 = vmax.f32 %v1574, %v1577
  %v1639 = vrot.slane %v1638, 4
  %v1640 = vmax.f32 %v1638, %v1639
  %v1641 = vrot.slane %v1640, 2
  %v1642 = vmax.f32 %v1640, %v1641
  %v1643 = vrot.slane %v1642, 1
  %v1644 = vmax.f32 %v1642, %v1643
  %v1645 = vsel %vm362, %v1575, -inf
  %v1646 = vsel %vm362, %v1578, -inf
  %v1647 = vmax.f32 %v1645, %v1646
  %v1648 = vrot.slane %v1647, 4
  %v1649 = vmax.f32 %v1647, %v1648
  %v1650 = vrot.slane %v1649, 2
  %v1651 = vmax.f32 %v1649, %v1650
  %v1652 = vrot.slane %v1651, 1
  %v1653 = vmax.f32 %v1651, %v1652
  %v1654 = vmax.f32 %v1579, %v1582
  %v1655 = vrot.slane %v1654, 4
  %v1656 = vmax.f32 %v1654, %v1655
  %v1657 = vrot.slane %v1656, 2
  %v1658 = vmax.f32 %v1656, %v1657
  %v1659 = vrot.slane %v1658, 1
  %v1660 = vmax.f32 %v1658, %v1659
  %v1661 = vmax.f32 %v1580, %v1583
  %v1662 = vrot.slane %v1661, 4
  %v1663 = vmax.f32 %v1661, %v1662
  %v1664 = vrot.slane %v1663, 2
  %v1665 = vmax.f32 %v1663, %v1664
  %v1666 = vrot.slane %v1665, 1
  %v1667 = vmax.f32 %v1665, %v1666
  %v1668 = vsel %vm362, %v1581, -inf
  %v1669 = vsel %vm362, %v1584, -inf
  %v1670 = vmax.f32 %v1668, %v1669
  %v1671 = vrot.slane %v1670, 4
  %v1672 = vmax.f32 %v1670, %v1671
  %v1673 = vrot.slane %v1672, 2
  %v1674 = vmax.f32 %v1672, %v1673
  %v1675 = vrot.slane %v1674, 1
  %v1676 = vmax.f32 %v1674, %v1675
  %s1677 = scalar_lea.vmem %s3, 4
  %v1678 = vld [vmem:[%s1677] ss:$8 sm:$0x7]
  %v1680 = vlaneseq
  %v1681 = vshrl.u32 %v1680, 7
  %v1682 = vsub.s32 0, %v1681
  %v1683 = vrot.slane %v1678, %v1682
  %v1684 = vlaneseq
  %v1685 = vshrl.u32 %v1684, 7
  %v1686 = vsub.s32 1, %v1685
  %v1687 = vrot.slane %v1678, %v1686
  %v1688 = vlaneseq
  %v1689 = vshrl.u32 %v1688, 7
  %v1690 = vsub.s32 2, %v1689
  %v1691 = vrot.slane %v1678, %v1690
  %v1695 = vadd.f32 %v1591, %v1683
  %v1696 = vadd.f32 %v1598, %v1687
  %v1697 = vadd.f32 %v1607, %v1691
  %v1698 = vadd.f32 %v1614, %v1683
  %v1699 = vadd.f32 %v1621, %v1687
  %v1700 = vadd.f32 %v1630, %v1691
  %v1701 = vadd.f32 %v1637, %v1683
  %v1702 = vadd.f32 %v1644, %v1687
  %v1703 = vadd.f32 %v1653, %v1691
  %v1704 = vadd.f32 %v1660, %v1683
  %v1705 = vadd.f32 %v1667, %v1687
  %v1706 = vadd.f32 %v1676, %v1691
  %v1707 = vmul.f32 %v1695, %v548
  %v1708 = vmul.f32 %v1696, %v550
  %v1709 = vmul.f32 %v1697, %v619
  %v1710 = vmul.f32 %v1698, %v995
  %v1711 = vmul.f32 %v1699, %v996
  %v1712 = vmul.f32 %v1700, %v997
  %v1713 = vmul.f32 %v1701, %v998
  %v1714 = vmul.f32 %v1702, %v999
  %v1715 = vmul.f32 %v1703, %v1000
  %v1716 = vmul.f32 %v1704, %v1001
  %v1717 = vmul.f32 %v1705, %v1002
  %v1718 = vmul.f32 %v1706, %v1003
  %v1719 = vpack.c.bf16 %v1707, %v1707
  %v1720 = vpack.c.bf16 %v1708, %v1708
  %v1721 = vpack.c.bf16 %v1709, %v1709
  %v1722 = vpack.c.bf16 %v1710, %v1710
  %v1723 = vpack.c.bf16 %v1711, %v1711
  %v1724 = vpack.c.bf16 %v1712, %v1712
  %v1725 = vpack.c.bf16 %v1713, %v1713
  %v1726 = vpack.c.bf16 %v1714, %v1714
  %v1727 = vpack.c.bf16 %v1715, %v1715
  %v1728 = vpack.c.bf16 %v1716, %v1716
  %v1729 = vpack.c.bf16 %v1717, %v1717
  %v1730 = vpack.c.bf16 %v1718, %v1718
  %s1731 = scalar_lea.vmem %s5, 160
  %v1732 = vld [vmem:[%s1731] sm:$0xf]
  %v1733 = vld [vmem:[%s1731 + $0x4] sm:$0xf]
  %v1734 = vld [vmem:[%s1731 + $0x8] sm:$0xf]
  %v1735 = vld [vmem:[%s1731 + $0xc] sm:$0xf]
  %v1736 = vld [vmem:[%s1731 + $0x10] sm:$0xf]
  %v1737 = vld [vmem:[%s1731 + $0x14] sm:$0xf]
  %v1738 = vld [vmem:[%s1731 + $0x18] sm:$0xf]
  %v1739 = vld [vmem:[%s1731 + $0x1c] sm:$0xf]
  %v1740 = vld [vmem:[%s1731 + $0x20] sm:$0xf]
  %v1741 = vld [vmem:[%s1731 + $0x24] sm:$0xf]
  %v1742 = vld [vmem:[%s1731 + $0x28] sm:$0xf]
  %v1743 = vld [vmem:[%s1731 + $0x2c] sm:$0xf]
  %v1744 = vld [vmem:[%s1731 + $0x30] sm:$0xf]
  %v1745 = vld [vmem:[%s1731 + $0x34] sm:$0xf]
  %v1746 = vld [vmem:[%s1731 + $0x38] sm:$0xf]
  %v1747 = vld [vmem:[%s1731 + $0x3c] sm:$0xf]
  %v1748 = vld [vmem:[%s1731 + $0x40] sm:$0xf]
  %v1749 = vld [vmem:[%s1731 + $0x44] sm:$0xf]
  %v1750 = vld [vmem:[%s1731 + $0x48] sm:$0xf]
  %v1751 = vld [vmem:[%s1731 + $0x4c] sm:$0xf]
  %v1752 = vld [vmem:[%s1731 + $0x50] sm:$0xf]
  %v1753 = vld [vmem:[%s1731 + $0x54] sm:$0xf]
  %v1754 = vld [vmem:[%s1731 + $0x58] sm:$0xf]
  %v1755 = vld [vmem:[%s1731 + $0x5c] sm:$0xf]
  %v1756 = vld [vmem:[%s1731 + $0x60] sm:$0xf]
  %v1757 = vld [vmem:[%s1731 + $0x64] sm:$0xf]
  %v1758 = vld [vmem:[%s1731 + $0x68] sm:$0xf]
  %v1759 = vld [vmem:[%s1731 + $0x6c] sm:$0xf]
  %v1760 = vld [vmem:[%s1731 + $0x70] sm:$0xf]
  %v1761 = vld [vmem:[%s1731 + $0x74] sm:$0xf]
  %v1762 = vld [vmem:[%s1731 + $0x78] sm:$0xf]
  %v1763 = vld [vmem:[%s1731 + $0x7c] sm:$0xf]
  %v1764 = vld [vmem:[%s1731 + $0x80] sm:$0xf]
  %v1765 = vld [vmem:[%s1731 + $0x84] sm:$0xf]
  %v1766 = vld [vmem:[%s1731 + $0x88] sm:$0xf]
  %v1767 = vld [vmem:[%s1731 + $0x8c] sm:$0xf]
  %v1768 = vld [vmem:[%s1731 + $0x90] sm:$0xf]
  %v1769 = vld [vmem:[%s1731 + $0x94] sm:$0xf]
  %v1770 = vld [vmem:[%s1731 + $0x98] sm:$0xf]
  %v1771 = vld [vmem:[%s1731 + $0x9c] sm:$0xf]
  %v1784 = vunpack.c.l.b16 %v1719
  %v1785 = vunpack.c.l.b16 %v1720
  %v1786 = vunpack.c.l.b16 %v1721
  %v1787 = vunpack.c.l.b16 %v1722
  %v1788 = vunpack.c.l.b16 %v1723
  %v1789 = vunpack.c.l.b16 %v1724
  %v1790 = vunpack.c.l.b16 %v1725
  %v1791 = vunpack.c.l.b16 %v1726
  %v1792 = vunpack.c.l.b16 %v1727
  %v1793 = vunpack.c.l.b16 %v1728
  %v1794 = vunpack.c.l.b16 %v1729
  %v1795 = vunpack.c.l.b16 %v1730
  %v1796 = vrot.slane %v1787, 7
  %v1797 = vsel %vm129, %v1796, %v1784
  %v1798 = vrot.slane %v1790, 6
  %v1799 = vsel %vm131, %v1798, %v1797
  %v1800 = vrot.slane %v1793, 5
  %v1801 = vsel %vm133, %v1800, %v1799
  %v1802 = vrot.slane %v1788, 7
  %v1803 = vsel %vm129, %v1802, %v1785
  %v1804 = vrot.slane %v1791, 6
  %v1805 = vsel %vm131, %v1804, %v1803
  %v1806 = vrot.slane %v1794, 5
  %v1807 = vsel %vm133, %v1806, %v1805
  %v1808 = vrot.slane %v1789, 7
  %v1809 = vsel %vm129, %v1808, %v1786
  %v1810 = vrot.slane %v1792, 6
  %v1811 = vsel %vm131, %v1810, %v1809
  %v1812 = vrot.slane %v1795, 5
  %v1813 = vsel %vm133, %v1812, %v1811
  %v1814 = vpack.c.b16 %v1801, %v1801
  %v1815 = vpack.c.b16 %v1807, %v1807
  %v1816 = vpack.c.b16 %v1813, %v1813
  %v1859 = vunpack.c.l.b16 %v1732
  %v1860 = vunpack.c.l.b16 %v1733
  %v1861 = vunpack.c.l.b16 %v1734
  %v1862 = vunpack.c.l.b16 %v1735
  %v1863 = vunpack.c.l.b16 %v1736
  %v1864 = vunpack.c.l.b16 %v1737
  %v1865 = vunpack.c.l.b16 %v1738
  %v1866 = vunpack.c.l.b16 %v1739
  %v1867 = vunpack.c.l.b16 %v1740
  %v1868 = vunpack.c.l.b16 %v1741
  %v1869 = vunpack.c.l.b16 %v1742
  %v1870 = vunpack.c.l.b16 %v1743
  %v1871 = vunpack.c.l.b16 %v1744
  %v1872 = vunpack.c.l.b16 %v1745
  %v1873 = vunpack.c.l.b16 %v1746
  %v1874 = vunpack.c.l.b16 %v1747
  %v1875 = vunpack.c.l.b16 %v1748
  %v1876 = vunpack.c.l.b16 %v1749
  %v1877 = vunpack.c.l.b16 %v1750
  %v1878 = vunpack.c.l.b16 %v1751
  %v1879 = vunpack.c.l.b16 %v1752
  %v1880 = vunpack.c.l.b16 %v1753
  %v1881 = vunpack.c.l.b16 %v1754
  %v1882 = vunpack.c.l.b16 %v1755
  %v1883 = vunpack.c.l.b16 %v1756
  %v1884 = vunpack.c.l.b16 %v1757
  %v1885 = vunpack.c.l.b16 %v1758
  %v1886 = vunpack.c.l.b16 %v1759
  %v1887 = vunpack.c.l.b16 %v1760
  %v1888 = vunpack.c.l.b16 %v1761
  %v1889 = vunpack.c.l.b16 %v1762
  %v1890 = vunpack.c.l.b16 %v1763
  %v1891 = vunpack.c.l.b16 %v1764
  %v1892 = vunpack.c.l.b16 %v1765
  %v1893 = vunpack.c.l.b16 %v1766
  %v1894 = vunpack.c.l.b16 %v1767
  %v1895 = vunpack.c.l.b16 %v1768
  %v1896 = vunpack.c.l.b16 %v1769
  %v1897 = vunpack.c.l.b16 %v1770
  %v1898 = vunpack.c.l.b16 %v1771
  %v1899 = vpack.c.b16 %v1860, %v1859
  %v1900 = vpack.c.b16 %v1862, %v1861
  %v1901 = vpack.c.b16 %v1864, %v1863
  %v1902 = vpack.c.b16 %v1866, %v1865
  %v1903 = vpack.c.b16 %v1868, %v1867
  %v1904 = vpack.c.b16 %v1870, %v1869
  %v1905 = vpack.c.b16 %v1872, %v1871
  %v1906 = vpack.c.b16 %v1874, %v1873
  %v1907 = vpack.c.b16 %v1876, %v1875
  %v1908 = vpack.c.b16 %v1878, %v1877
  %v1909 = vpack.c.b16 %v1880, %v1879
  %v1910 = vpack.c.b16 %v1882, %v1881
  %v1911 = vpack.c.b16 %v1884, %v1883
  %v1912 = vpack.c.b16 %v1886, %v1885
  %v1913 = vpack.c.b16 %v1888, %v1887
  %v1914 = vpack.c.b16 %v1890, %v1889
  %v1915 = vpack.c.b16 %v1892, %v1891
  %v1916 = vpack.c.b16 %v1894, %v1893
  %v1917 = vpack.c.b16 %v1896, %v1895
  %v1918 = vpack.c.b16 %v1898, %v1897
  %v1940 = vsel %vm362, %v1816, 0
  %1942 = vmatprep.subr.bf16.mxu0 0
  %1943 = vmatpush1.bf16.msra.mxu0 %v1899
  %1944 = vmatprep.subr.bf16.mxu0 0
  %1945 = vmatpush1.bf16.msra.mxu0 %v1900
  %1946 = vmatprep.subr.bf16.mxu0 0
  %1947 = vmatpush1.bf16.msra.mxu0 %v1901
  %1948 = vmatprep.subr.bf16.mxu0 0
  %1949 = vmatpush1.bf16.msra.mxu0 %v1902
  %1950 = vmatprep.subr.bf16.mxu0 0
  %1951 = vmatpush1.bf16.msra.mxu0 %v1903
  %1952 = vmatprep.subr.bf16.mxu0 0
  %1953 = vmatpush1.bf16.msra.mxu0 %v1904
  %1954 = vmatprep.subr.bf16.mxu0 0
  %1955 = vmatpush1.bf16.msra.mxu0 %v1905
  %1956 = vmatprep.subr.bf16.mxu0 0
  %1957 = vmatpush1.bf16.msra.mxu0 %v1906
  %1958 = vmatprep.subr.bf16.mxu0 0
  %1959 = vmatpush1.bf16.msra.mxu0 %v1907
  %1960 = vmatprep.subr.bf16.mxu0 0
  %1961 = vmatpush1.bf16.msra.mxu0 %v1908
  %1962 = vmatprep.subr.bf16.mxu0 0
  %1963 = vmatpush1.bf16.msra.mxu0 %v1909
  %1964 = vmatprep.subr.bf16.mxu0 0
  %1965 = vmatpush1.bf16.msra.mxu0 %v1910
  %1966 = vmatprep.subr.bf16.mxu0 0
  %1967 = vmatpush1.bf16.msra.mxu0 %v1911
  %1968 = vmatprep.subr.bf16.mxu0 0
  %1969 = vmatpush1.bf16.msra.mxu0 %v1912
  %1970 = vmatprep.subr.bf16.mxu0 0
  %1971 = vmatpush1.bf16.msra.mxu0 %v1913
  %1972 = vmatprep.subr.bf16.mxu0 0
  %1973 = vmatpush1.bf16.msra.mxu0 %v1914
  %1974 = vmatprep.mubr.bf16.mxu0 %v1815
  %1975 = vmatmul.mubr.bf16.gmra.mrb[0].mxu0 %v1814
  %v1976 = vpop.f32.mrb[0].mxu0
  %v1977 = vadd.f32 0.0, %v1976
  %v1978 = vpop.f32.mrb[0].mxu0
  %v1979 = vpop.f32.mrb[0].mxu0
  %v1980 = vpop.f32.mrb[0].mxu0
  %1981 = vdwg.mxu0
  %1982 = vmatprep.subr.bf16.mxu0 0
  %1983 = vmatpush1.bf16.msra.mxu0 %v1915
  %1984 = vmatprep.subr.bf16.mxu0 0
  %1985 = vmatpush1.bf16.msra.mxu0 %v1916
  %1986 = vmatprep.subr.bf16.mxu0 0
  %1987 = vmatpush1.bf16.msra.mxu0 %v1917
  %1988 = vmatprep.subr.bf16.mxu0 0
  %1989 = vmatpush1.bf16.msra.mxu0 %v1918
  %1990 = vmatprep.subr.bf16.mxu0 0
  %1991 = vmatpush1.bf16.msra.mxu0 0
  %1992 = vmatprep.subr.bf16.mxu0 0
  %1993 = vmatpush1.bf16.msra.mxu0 0
  %1994 = vmatprep.subr.bf16.mxu0 0
  %1995 = vmatpush1.bf16.msra.mxu0 0
  %1996 = vmatprep.subr.bf16.mxu0 0
  %1997 = vmatpush1.bf16.msra.mxu0 0
  %1998 = vmatprep.subr.bf16.mxu0 0
  %1999 = vmatpush1.bf16.msra.mxu0 0
  %2000 = vmatprep.subr.bf16.mxu0 0
  %2001 = vmatpush1.bf16.msra.mxu0 0
  %2002 = vmatprep.subr.bf16.mxu0 0
  %2003 = vmatpush1.bf16.msra.mxu0 0
  %2004 = vmatprep.subr.bf16.mxu0 0
  %2005 = vmatpush1.bf16.msra.mxu0 0
  %2006 = vmatprep.subr.bf16.mxu0 0
  %2007 = vmatpush1.bf16.msra.mxu0 0
  %2008 = vmatprep.subr.bf16.mxu0 0
  %2009 = vmatpush1.bf16.msra.mxu0 0
  %2010 = vmatprep.subr.bf16.mxu0 0
  %2011 = vmatpush1.bf16.msra.mxu0 0
  %2012 = vmatprep.subr.bf16.mxu0 0
  %2013 = vmatpush1.bf16.msra.mxu0 0
  %2014 = vmatprep.mubr.bf16.mxu0 0
  %2015 = vmatmul.mubr.bf16.gmra.mrb[0].mxu0 %v1940
  %v2016 = vpop.f32.mrb[0].mxu0
  %v2017 = vadd.f32 %v1977, %v2016
  %v2018 = vpop.f32.mrb[0].mxu0
  %v2019 = vpop.f32.mrb[0].mxu0
  %v2020 = vpop.f32.mrb[0].mxu0
  %2021 = vdwg.mxu0
  %v2022 = vadd.f32 %v1330, %v2017
  %v2023 = vld [vmem:[%s4 + $0x90] sm:$0xff]
  %v2024 = vld [vmem:[%s4 + $0x98] sm:$0xf]
  %v2025 = vld [vmem:[%s4 + $0x9c] sm:$0xff]
  %v2026 = vld [vmem:[%s4 + $0xa4] sm:$0xf]
  %v2027 = vld [vmem:[%s4 + $0xa8] sm:$0xff]
  %v2028 = vld [vmem:[%s4 + $0xb0] sm:$0xf]
  %v2029 = vld [vmem:[%s4 + $0xb4] sm:$0xff]
  %v2030 = vld [vmem:[%s4 + $0xbc] sm:$0xf]
  %v2031 = vld [vmem:[%s4 + $0xc0] sm:$0xff]
  %v2032 = vld [vmem:[%s4 + $0xc8] sm:$0xf]
  %v2033 = vld [vmem:[%s4 + $0xcc] sm:$0xff]
  %v2034 = vld [vmem:[%s4 + $0xd4] sm:$0xf]
  %v2035 = vld [vmem:[%s4 + $0xd8] sm:$0xff]
  %v2036 = vld [vmem:[%s4 + $0xe0] sm:$0xf]
  %v2037 = vld [vmem:[%s4 + $0xe4] sm:$0xff]
  %v2038 = vld [vmem:[%s4 + $0xec] sm:$0xf]
  %v2039 = vld [vmem:[%s4 + $0xf0] sm:$0xff]
  %v2040 = vld [vmem:[%s4 + $0xf8] sm:$0xf]
  %v2041 = vld [vmem:[%s4 + $0xfc] sm:$0xff]
  %v2042 = vld [vmem:[%s4 + $0x104] sm:$0xf]
  %v2043 = vld [vmem:[%s4 + $0x108] sm:$0xff]
  %v2044 = vld [vmem:[%s4 + $0x110] sm:$0xf]
  %v2045 = vld [vmem:[%s4 + $0x114] sm:$0xff]
  %v2046 = vld [vmem:[%s4 + $0x11c] sm:$0xf]
  %v2071 = vunpack.c.l.b16 %v2023
  %v2072 = vunpack.c.h.b16 %v2023
  %v2073 = vunpack.c.l.b16 %v2024
  %v2074 = vunpack.c.l.b16 %v2025
  %v2075 = vunpack.c.h.b16 %v2025
  %v2076 = vunpack.c.l.b16 %v2026
  %v2077 = vunpack.c.l.b16 %v2027
  %v2078 = vunpack.c.h.b16 %v2027
  %v2079 = vunpack.c.l.b16 %v2028
  %v2080 = vunpack.c.l.b16 %v2029
  %v2081 = vunpack.c.h.b16 %v2029
  %v2082 = vunpack.c.l.b16 %v2030
  %v2083 = vunpack.c.l.b16 %v2031
  %v2084 = vunpack.c.h.b16 %v2031
  %v2085 = vunpack.c.l.b16 %v2032
  %v2086 = vunpack.c.l.b16 %v2033
  %v2087 = vunpack.c.h.b16 %v2033
  %v2088 = vunpack.c.l.b16 %v2034
  %v2089 = vunpack.c.l.b16 %v2035
  %v2090 = vunpack.c.h.b16 %v2035
  %v2091 = vunpack.c.l.b16 %v2036
  %v2092 = vunpack.c.l.b16 %v2037
  %v2093 = vunpack.c.h.b16 %v2037
  %v2094 = vunpack.c.l.b16 %v2038
  %v2095 = vunpack.c.l.b16 %v2039
  %v2096 = vunpack.c.h.b16 %v2039
  %v2097 = vunpack.c.l.b16 %v2040
  %v2098 = vunpack.c.l.b16 %v2041
  %v2099 = vunpack.c.h.b16 %v2041
  %v2100 = vunpack.c.l.b16 %v2042
  %v2101 = vunpack.c.l.b16 %v2043
  %v2102 = vunpack.c.h.b16 %v2043
  %v2103 = vunpack.c.l.b16 %v2044
  %v2104 = vunpack.c.l.b16 %v2045
  %v2105 = vunpack.c.h.b16 %v2045
  %v2106 = vunpack.c.l.b16 %v2046
  %v2107 = vpack.c.b16 %v2074, %v2071
  %v2108 = vpack.c.b16 %v2075, %v2072
  %v2109 = vpack.c.b16 %v2076, %v2073
  %v2110 = vpack.c.b16 %v2080, %v2077
  %v2111 = vpack.c.b16 %v2081, %v2078
  %v2112 = vpack.c.b16 %v2082, %v2079
  %v2113 = vpack.c.b16 %v2086, %v2083
  %v2114 = vpack.c.b16 %v2087, %v2084
  %v2115 = vpack.c.b16 %v2088, %v2085
  %v2116 = vpack.c.b16 %v2092, %v2089
  %v2117 = vpack.c.b16 %v2093, %v2090
  %v2118 = vpack.c.b16 %v2094, %v2091
  %v2119 = vpack.c.b16 %v2098, %v2095
  %v2120 = vpack.c.b16 %v2099, %v2096
  %v2121 = vpack.c.b16 %v2100, %v2097
  %v2122 = vpack.c.b16 %v2104, %v2101
  %v2123 = vpack.c.b16 %v2105, %v2102
  %v2124 = vpack.c.b16 %v2106, %v2103
  %vm2143 = vcmask 785408
  %v2144 = vsel %vm2143, %v656, 0
  %v2146 = vsel %vm2143, %v657, 0
  %v2148 = vsel %vm2143, %v658, 0
  %v2150 = vsel %vm2143, %v659, 0
  %2152 = vmatprep.subr.bf16.mxu0 %v2108
  %2153 = vmatpush1.bf16.msra.mxu0 %v2107
  %2154 = vmatprep.subr.bf16.mxu0 %v2111
  %2155 = vmatpush1.bf16.msra.mxu0 %v2110
  %2156 = vmatprep.subr.bf16.mxu0 %v2114
  %2157 = vmatpush1.bf16.msra.mxu0 %v2113
  %2158 = vmatprep.subr.bf16.mxu0 %v2117
  %2159 = vmatpush1.bf16.msra.mxu0 %v2116
  %2160 = vmatprep.subr.bf16.mxu0 %v2120
  %2161 = vmatpush1.bf16.msra.mxu0 %v2119
  %2162 = vmatprep.subr.bf16.mxu0 %v2123
  %2163 = vmatpush1.bf16.msra.mxu0 %v2122
  %2164 = vmatprep.subr.bf16.mxu0 0
  %2165 = vmatpush1.bf16.msra.mxu0 0
  %2166 = vmatprep.subr.bf16.mxu0 0
  %2167 = vmatpush1.bf16.msra.mxu0 0
  %2168 = vmatprep.subr.bf16.mxu0 0
  %2169 = vmatpush1.bf16.msra.mxu0 0
  %2170 = vmatprep.subr.bf16.mxu0 0
  %2171 = vmatpush1.bf16.msra.mxu0 0
  %2172 = vmatprep.subr.bf16.mxu0 0
  %2173 = vmatpush1.bf16.msra.mxu0 0
  %2174 = vmatprep.subr.bf16.mxu0 0
  %2175 = vmatpush1.bf16.msra.mxu0 0
  %2176 = vmatprep.subr.bf16.mxu0 0
  %2177 = vmatpush1.bf16.msra.mxu0 0
  %2178 = vmatprep.subr.bf16.mxu0 0
  %2179 = vmatpush1.bf16.msra.mxu0 0
  %2180 = vmatprep.subr.bf16.mxu0 0
  %2181 = vmatpush1.bf16.msra.mxu0 0
  %2182 = vmatprep.subr.bf16.mxu0 0
  %2183 = vmatpush1.bf16.msra.mxu0 0
  %2184 = vmatprep.mubr.bf16.mxu0 0
  %2185 = vmatmul.mubr.bf16.gmra.mrb[0].mxu0 %v2144
  %v2186 = vpop.f32.mrb[0].mxu0
  %v2187 = vadd.f32 0.0, %v2186
  %v2188 = vpop.f32.mrb[0].mxu0
  %v2189 = vadd.f32 0.0, %v2188
  %v2190 = vpop.f32.mrb[0].mxu0
  %v2191 = vadd.f32 0.0, %v2190
  %v2192 = vpop.f32.mrb[0].mxu0
  %v2193 = vadd.f32 0.0, %v2192
  %2194 = vmatprep.mubr.bf16.mxu0 0
  %2195 = vmatmul.mubr.bf16.gmra.mrb[0].mxu0 %v2146
  %v2196 = vpop.f32.mrb[0].mxu0
  %v2197 = vadd.f32 0.0, %v2196
  %v2198 = vpop.f32.mrb[0].mxu0
  %v2199 = vadd.f32 0.0, %v2198
  %v2200 = vpop.f32.mrb[0].mxu0
  %v2201 = vadd.f32 0.0, %v2200
  %v2202 = vpop.f32.mrb[0].mxu0
  %v2203 = vadd.f32 0.0, %v2202
  %2204 = vmatprep.mubr.bf16.mxu0 0
  %2205 = vmatmul.mubr.bf16.gmra.mrb[0].mxu0 %v2148
  %v2206 = vpop.f32.mrb[0].mxu0
  %v2207 = vadd.f32 0.0, %v2206
  %v2208 = vpop.f32.mrb[0].mxu0
  %v2209 = vadd.f32 0.0, %v2208
  %v2210 = vpop.f32.mrb[0].mxu0
  %v2211 = vadd.f32 0.0, %v2210
  %v2212 = vpop.f32.mrb[0].mxu0
  %v2213 = vadd.f32 0.0, %v2212
  %2214 = vmatprep.mubr.bf16.mxu0 0
  %2215 = vmatmul.mubr.bf16.gmra.mrb[0].mxu0 %v2150
  %v2216 = vpop.f32.mrb[0].mxu0
  %v2217 = vadd.f32 0.0, %v2216
  %v2218 = vpop.f32.mrb[0].mxu0
  %v2219 = vadd.f32 0.0, %v2218
  %v2220 = vpop.f32.mrb[0].mxu0
  %v2221 = vadd.f32 0.0, %v2220
  %v2222 = vpop.f32.mrb[0].mxu0
  %v2223 = vadd.f32 0.0, %v2222
  %2224 = vdwg.mxu0
  %2225 = vmatprep.subr.bf16.mxu0 0
  %2226 = vmatpush1.bf16.msra.mxu0 %v2109
  %2227 = vmatprep.subr.bf16.mxu0 0
  %2228 = vmatpush1.bf16.msra.mxu0 %v2112
  %2229 = vmatprep.subr.bf16.mxu0 0
  %2230 = vmatpush1.bf16.msra.mxu0 %v2115
  %2231 = vmatprep.subr.bf16.mxu0 0
  %2232 = vmatpush1.bf16.msra.mxu0 %v2118
  %2233 = vmatprep.subr.bf16.mxu0 0
  %2234 = vmatpush1.bf16.msra.mxu0 %v2121
  %2235 = vmatprep.subr.bf16.mxu0 0
  %2236 = vmatpush1.bf16.msra.mxu0 %v2124
  %2237 = vmatprep.subr.bf16.mxu0 0
  %2238 = vmatpush1.bf16.msra.mxu0 0
  %2239 = vmatprep.subr.bf16.mxu0 0
  %2240 = vmatpush1.bf16.msra.mxu0 0
  %2241 = vmatprep.subr.bf16.mxu0 0
  %2242 = vmatpush1.bf16.msra.mxu0 0
  %2243 = vmatprep.subr.bf16.mxu0 0
  %2244 = vmatpush1.bf16.msra.mxu0 0
  %2245 = vmatprep.subr.bf16.mxu0 0
  %2246 = vmatpush1.bf16.msra.mxu0 0
  %2247 = vmatprep.subr.bf16.mxu0 0
  %2248 = vmatpush1.bf16.msra.mxu0 0
  %2249 = vmatprep.subr.bf16.mxu0 0
  %2250 = vmatpush1.bf16.msra.mxu0 0
  %2251 = vmatprep.subr.bf16.mxu0 0
  %2252 = vmatpush1.bf16.msra.mxu0 0
  %2253 = vmatprep.subr.bf16.mxu0 0
  %2254 = vmatpush1.bf16.msra.mxu0 0
  %2255 = vmatprep.subr.bf16.mxu0 0
  %2256 = vmatpush1.bf16.msra.mxu0 0
  %2257 = vmatprep.mubr.bf16.mxu0 0
  %2258 = vmatmul.mubr.bf16.gmra.mrb[0].mxu0 %v2144
  %v2259 = vpop.f32.mrb[0].mxu0
  %v2260 = vadd.f32 0.0, %v2259
  %v2261 = vpop.f32.mrb[0].mxu0
  %v2262 = vpop.f32.mrb[0].mxu0
  %v2263 = vadd.f32 0.0, %v2262
  %v2264 = vpop.f32.mrb[0].mxu0
  %2265 = vmatprep.mubr.bf16.mxu0 0
  %2266 = vmatmul.mubr.bf16.gmra.mrb[0].mxu0 %v2146
  %v2267 = vpop.f32.mrb[0].mxu0
  %v2268 = vadd.f32 0.0, %v2267
  %v2269 = vpop.f32.mrb[0].mxu0
  %v2270 = vpop.f32.mrb[0].mxu0
  %v2271 = vadd.f32 0.0, %v2270
  %v2272 = vpop.f32.mrb[0].mxu0
  %2273 = vmatprep.mubr.bf16.mxu0 0
  %2274 = vmatmul.mubr.bf16.gmra.mrb[0].mxu0 %v2148
  %v2275 = vpop.f32.mrb[0].mxu0
  %v2276 = vadd.f32 0.0, %v2275
  %v2277 = vpop.f32.mrb[0].mxu0
  %v2278 = vpop.f32.mrb[0].mxu0
  %v2279 = vadd.f32 0.0, %v2278
  %v2280 = vpop.f32.mrb[0].mxu0
  %2281 = vmatprep.mubr.bf16.mxu0 0
  %2282 = vmatmul.mubr.bf16.gmra.mrb[0].mxu0 %v2150
  %v2283 = vpop.f32.mrb[0].mxu0
  %v2284 = vadd.f32 0.0, %v2283
  %v2285 = vpop.f32.mrb[0].mxu0
  %v2286 = vpop.f32.mrb[0].mxu0
  %v2287 = vadd.f32 0.0, %v2286
  %v2288 = vpop.f32.mrb[0].mxu0
  %2289 = vdwg.mxu0
  %vm2290 = vcmp.lt.s32.totalorder %v451, 14
  %vm2291 = vcmp.lt.s32.totalorder %v622, 14
  %v2292 = vsel %vm2290, 0.0, -1e+30
  %v2293 = vsel %vm2291, 0.0, -1e+30
  %v2294 = vadd.f32 %v2187, %v2292
  %v2295 = vadd.f32 %v2189, %v2292
  %v2296 = vadd.f32 %v2260, %v2292
  %v2297 = vadd.f32 %v2191, %v2293
  %v2298 = vadd.f32 %v2193, %v2293
  %v2299 = vadd.f32 %v2263, %v2293
  %v2300 = vadd.f32 %v2197, %v2292
  %v2301 = vadd.f32 %v2199, %v2292
  %v2302 = vadd.f32 %v2268, %v2292
  %v2303 = vadd.f32 %v2201, %v2293
  %v2304 = vadd.f32 %v2203, %v2293
  %v2305 = vadd.f32 %v2271, %v2293
  %v2306 = vadd.f32 %v2207, %v2292
  %v2307 = vadd.f32 %v2209, %v2292
  %v2308 = vadd.f32 %v2276, %v2292
  %v2309 = vadd.f32 %v2211, %v2293
  %v2310 = vadd.f32 %v2213, %v2293
  %v2311 = vadd.f32 %v2279, %v2293
  %v2312 = vadd.f32 %v2217, %v2292
  %v2313 = vadd.f32 %v2219, %v2292
  %v2314 = vadd.f32 %v2284, %v2292
  %v2315 = vadd.f32 %v2221, %v2293
  %v2316 = vadd.f32 %v2223, %v2293
  %v2317 = vadd.f32 %v2287, %v2293
  %v2318 = vmax.f32 %v2294, %v2297
  %v2319 = vrot.slane %v2318, 4
  %v2320 = vmax.f32 %v2318, %v2319
  %v2321 = vrot.slane %v2320, 2
  %v2322 = vmax.f32 %v2320, %v2321
  %v2323 = vrot.slane %v2322, 1
  %v2324 = vmax.f32 %v2322, %v2323
  %v2325 = vmax.f32 %v2295, %v2298
  %v2326 = vrot.slane %v2325, 4
  %v2327 = vmax.f32 %v2325, %v2326
  %v2328 = vrot.slane %v2327, 2
  %v2329 = vmax.f32 %v2327, %v2328
  %v2330 = vrot.slane %v2329, 1
  %v2331 = vmax.f32 %v2329, %v2330
  %v2332 = vsel %vm362, %v2296, -inf
  %v2333 = vsel %vm362, %v2299, -inf
  %v2334 = vmax.f32 %v2332, %v2333
  %v2335 = vrot.slane %v2334, 4
  %v2336 = vmax.f32 %v2334, %v2335
  %v2337 = vrot.slane %v2336, 2
  %v2338 = vmax.f32 %v2336, %v2337
  %v2339 = vrot.slane %v2338, 1
  %v2340 = vmax.f32 %v2338, %v2339
  %v2341 = vmax.f32 %v2300, %v2303
  %v2342 = vrot.slane %v2341, 4
  %v2343 = vmax.f32 %v2341, %v2342
  %v2344 = vrot.slane %v2343, 2
  %v2345 = vmax.f32 %v2343, %v2344
  %v2346 = vrot.slane %v2345, 1
  %v2347 = vmax.f32 %v2345, %v2346
  %v2348 = vmax.f32 %v2301, %v2304
  %v2349 = vrot.slane %v2348, 4
  %v2350 = vmax.f32 %v2348, %v2349
  %v2351 = vrot.slane %v2350, 2
  %v2352 = vmax.f32 %v2350, %v2351
  %v2353 = vrot.slane %v2352, 1
  %v2354 = vmax.f32 %v2352, %v2353
  %v2355 = vsel %vm362, %v2302, -inf
  %v2356 = vsel %vm362, %v2305, -inf
  %v2357 = vmax.f32 %v2355, %v2356
  %v2358 = vrot.slane %v2357, 4
  %v2359 = vmax.f32 %v2357, %v2358
  %v2360 = vrot.slane %v2359, 2
  %v2361 = vmax.f32 %v2359, %v2360
  %v2362 = vrot.slane %v2361, 1
  %v2363 = vmax.f32 %v2361, %v2362
  %v2364 = vmax.f32 %v2306, %v2309
  %v2365 = vrot.slane %v2364, 4
  %v2366 = vmax.f32 %v2364, %v2365
  %v2367 = vrot.slane %v2366, 2
  %v2368 = vmax.f32 %v2366, %v2367
  %v2369 = vrot.slane %v2368, 1
  %v2370 = vmax.f32 %v2368, %v2369
  %v2371 = vmax.f32 %v2307, %v2310
  %v2372 = vrot.slane %v2371, 4
  %v2373 = vmax.f32 %v2371, %v2372
  %v2374 = vrot.slane %v2373, 2
  %v2375 = vmax.f32 %v2373, %v2374
  %v2376 = vrot.slane %v2375, 1
  %v2377 = vmax.f32 %v2375, %v2376
  %v2378 = vsel %vm362, %v2308, -inf
  %v2379 = vsel %vm362, %v2311, -inf
  %v2380 = vmax.f32 %v2378, %v2379
  %v2381 = vrot.slane %v2380, 4
  %v2382 = vmax.f32 %v2380, %v2381
  %v2383 = vrot.slane %v2382, 2
  %v2384 = vmax.f32 %v2382, %v2383
  %v2385 = vrot.slane %v2384, 1
  %v2386 = vmax.f32 %v2384, %v2385
  %v2387 = vmax.f32 %v2312, %v2315
  %v2388 = vrot.slane %v2387, 4
  %v2389 = vmax.f32 %v2387, %v2388
  %v2390 = vrot.slane %v2389, 2
  %v2391 = vmax.f32 %v2389, %v2390
  %v2392 = vrot.slane %v2391, 1
  %v2393 = vmax.f32 %v2391, %v2392
  %v2394 = vmax.f32 %v2313, %v2316
  %v2395 = vrot.slane %v2394, 4
  %v2396 = vmax.f32 %v2394, %v2395
  %v2397 = vrot.slane %v2396, 2
  %v2398 = vmax.f32 %v2396, %v2397
  %v2399 = vrot.slane %v2398, 1
  %v2400 = vmax.f32 %v2398, %v2399
  %v2401 = vsel %vm362, %v2314, -inf
  %v2402 = vsel %vm362, %v2317, -inf
  %v2403 = vmax.f32 %v2401, %v2402
  %v2404 = vrot.slane %v2403, 4
  %v2405 = vmax.f32 %v2403, %v2404
  %v2406 = vrot.slane %v2405, 2
  %v2407 = vmax.f32 %v2405, %v2406
  %v2408 = vrot.slane %v2407, 1
  %v2409 = vmax.f32 %v2407, %v2408
  %s2410 = scalar_lea.vmem %s3, 5
  %v2411 = vld [vmem:[%s2410] ss:$8 sm:$0x7]
  %v2413 = vlaneseq
  %v2414 = vshrl.u32 %v2413, 7
  %v2415 = vsub.s32 0, %v2414
  %v2416 = vrot.slane %v2411, %v2415
  %v2417 = vlaneseq
  %v2418 = vshrl.u32 %v2417, 7
  %v2419 = vsub.s32 1, %v2418
  %v2420 = vrot.slane %v2411, %v2419
  %v2421 = vlaneseq
  %v2422 = vshrl.u32 %v2421, 7
  %v2423 = vsub.s32 2, %v2422
  %v2424 = vrot.slane %v2411, %v2423
  %v2428 = vadd.f32 %v2324, %v2416
  %v2429 = vadd.f32 %v2331, %v2420
  %v2430 = vadd.f32 %v2340, %v2424
  %v2431 = vadd.f32 %v2347, %v2416
  %v2432 = vadd.f32 %v2354, %v2420
  %v2433 = vadd.f32 %v2363, %v2424
  %v2434 = vadd.f32 %v2370, %v2416
  %v2435 = vadd.f32 %v2377, %v2420
  %v2436 = vadd.f32 %v2386, %v2424
  %v2437 = vadd.f32 %v2393, %v2416
  %v2438 = vadd.f32 %v2400, %v2420
  %v2439 = vadd.f32 %v2409, %v2424
  %v2440 = vmul.f32 %v2428, %v548
  %v2441 = vmul.f32 %v2429, %v550
  %v2442 = vmul.f32 %v2430, %v619
  %v2443 = vmul.f32 %v2431, %v995
  %v2444 = vmul.f32 %v2432, %v996
  %v2445 = vmul.f32 %v2433, %v997
  %v2446 = vmul.f32 %v2434, %v998
  %v2447 = vmul.f32 %v2435, %v999
  %v2448 = vmul.f32 %v2436, %v1000
  %v2449 = vmul.f32 %v2437, %v1001
  %v2450 = vmul.f32 %v2438, %v1002
  %v2451 = vmul.f32 %v2439, %v1003
  %v2452 = vpack.c.bf16 %v2440, %v2440
  %v2453 = vpack.c.bf16 %v2441, %v2441
  %v2454 = vpack.c.bf16 %v2442, %v2442
  %v2455 = vpack.c.bf16 %v2443, %v2443
  %v2456 = vpack.c.bf16 %v2444, %v2444
  %v2457 = vpack.c.bf16 %v2445, %v2445
  %v2458 = vpack.c.bf16 %v2446, %v2446
  %v2459 = vpack.c.bf16 %v2447, %v2447
  %v2460 = vpack.c.bf16 %v2448, %v2448
  %v2461 = vpack.c.bf16 %v2449, %v2449
  %v2462 = vpack.c.bf16 %v2450, %v2450
  %v2463 = vpack.c.bf16 %v2451, %v2451
  %s2464 = scalar_lea.vmem %s5, 320
  %v2465 = vld [vmem:[%s2464] sm:$0xf]
  %v2466 = vld [vmem:[%s2464 + $0x4] sm:$0xf]
  %v2467 = vld [vmem:[%s2464 + $0x8] sm:$0xf]
  %v2468 = vld [vmem:[%s2464 + $0xc] sm:$0xf]
  %v2469 = vld [vmem:[%s2464 + $0x10] sm:$0xf]
  %v2470 = vld [vmem:[%s2464 + $0x14] sm:$0xf]
  %v2471 = vld [vmem:[%s2464 + $0x18] sm:$0xf]
  %v2472 = vld [vmem:[%s2464 + $0x1c] sm:$0xf]
  %v2473 = vld [vmem:[%s2464 + $0x20] sm:$0xf]
  %v2474 = vld [vmem:[%s2464 + $0x24] sm:$0xf]
  %v2475 = vld [vmem:[%s2464 + $0x28] sm:$0xf]
  %v2476 = vld [vmem:[%s2464 + $0x2c] sm:$0xf]
  %v2477 = vld [vmem:[%s2464 + $0x30] sm:$0xf]
  %v2478 = vld [vmem:[%s2464 + $0x34] sm:$0xf]
  %v2479 = vld [vmem:[%s2464 + $0x38] sm:$0xf]
  %v2480 = vld [vmem:[%s2464 + $0x3c] sm:$0xf]
  %v2481 = vld [vmem:[%s2464 + $0x40] sm:$0xf]
  %v2482 = vld [vmem:[%s2464 + $0x44] sm:$0xf]
  %v2483 = vld [vmem:[%s2464 + $0x48] sm:$0xf]
  %v2484 = vld [vmem:[%s2464 + $0x4c] sm:$0xf]
  %v2485 = vld [vmem:[%s2464 + $0x50] sm:$0xf]
  %v2486 = vld [vmem:[%s2464 + $0x54] sm:$0xf]
  %v2487 = vld [vmem:[%s2464 + $0x58] sm:$0xf]
  %v2488 = vld [vmem:[%s2464 + $0x5c] sm:$0xf]
  %v2489 = vld [vmem:[%s2464 + $0x60] sm:$0xf]
  %v2490 = vld [vmem:[%s2464 + $0x64] sm:$0xf]
  %v2491 = vld [vmem:[%s2464 + $0x68] sm:$0xf]
  %v2492 = vld [vmem:[%s2464 + $0x6c] sm:$0xf]
  %v2493 = vld [vmem:[%s2464 + $0x70] sm:$0xf]
  %v2494 = vld [vmem:[%s2464 + $0x74] sm:$0xf]
  %v2495 = vld [vmem:[%s2464 + $0x78] sm:$0xf]
  %v2496 = vld [vmem:[%s2464 + $0x7c] sm:$0xf]
  %v2497 = vld [vmem:[%s2464 + $0x80] sm:$0xf]
  %v2498 = vld [vmem:[%s2464 + $0x84] sm:$0xf]
  %v2499 = vld [vmem:[%s2464 + $0x88] sm:$0xf]
  %v2500 = vld [vmem:[%s2464 + $0x8c] sm:$0xf]
  %v2501 = vld [vmem:[%s2464 + $0x90] sm:$0xf]
  %v2502 = vld [vmem:[%s2464 + $0x94] sm:$0xf]
  %v2503 = vld [vmem:[%s2464 + $0x98] sm:$0xf]
  %v2504 = vld [vmem:[%s2464 + $0x9c] sm:$0xf]
  %v2517 = vunpack.c.l.b16 %v2452
  %v2518 = vunpack.c.l.b16 %v2453
  %v2519 = vunpack.c.l.b16 %v2454
  %v2520 = vunpack.c.l.b16 %v2455
  %v2521 = vunpack.c.l.b16 %v2456
  %v2522 = vunpack.c.l.b16 %v2457
  %v2523 = vunpack.c.l.b16 %v2458
  %v2524 = vunpack.c.l.b16 %v2459
  %v2525 = vunpack.c.l.b16 %v2460
  %v2526 = vunpack.c.l.b16 %v2461
  %v2527 = vunpack.c.l.b16 %v2462
  %v2528 = vunpack.c.l.b16 %v2463
  %v2529 = vrot.slane %v2520, 7
  %v2530 = vsel %vm129, %v2529, %v2517
  %v2531 = vrot.slane %v2523, 6
  %v2532 = vsel %vm131, %v2531, %v2530
  %v2533 = vrot.slane %v2526, 5
  %v2534 = vsel %vm133, %v2533, %v2532
  %v2535 = vrot.slane %v2521, 7
  %v2536 = vsel %vm129, %v2535, %v2518
  %v2537 = vrot.slane %v2524, 6
  %v2538 = vsel %vm131, %v2537, %v2536
  %v2539 = vrot.slane %v2527, 5
  %v2540 = vsel %vm133, %v2539, %v2538
  %v2541 = vrot.slane %v2522, 7
  %v2542 = vsel %vm129, %v2541, %v2519
  %v2543 = vrot.slane %v2525, 6
  %v2544 = vsel %vm131, %v2543, %v2542
  %v2545 = vrot.slane %v2528, 5
  %v2546 = vsel %vm133, %v2545, %v2544
  %v2547 = vpack.c.b16 %v2534, %v2534
  %v2548 = vpack.c.b16 %v2540, %v2540
  %v2549 = vpack.c.b16 %v2546, %v2546
  %v2592 = vunpack.c.l.b16 %v2465
  %v2593 = vunpack.c.l.b16 %v2466
  %v2594 = vunpack.c.l.b16 %v2467
  %v2595 = vunpack.c.l.b16 %v2468
  %v2596 = vunpack.c.l.b16 %v2469
  %v2597 = vunpack.c.l.b16 %v2470
  %v2598 = vunpack.c.l.b16 %v2471
  %v2599 = vunpack.c.l.b16 %v2472
  %v2600 = vunpack.c.l.b16 %v2473
  %v2601 = vunpack.c.l.b16 %v2474
  %v2602 = vunpack.c.l.b16 %v2475
  %v2603 = vunpack.c.l.b16 %v2476
  %v2604 = vunpack.c.l.b16 %v2477
  %v2605 = vunpack.c.l.b16 %v2478
  %v2606 = vunpack.c.l.b16 %v2479
  %v2607 = vunpack.c.l.b16 %v2480
  %v2608 = vunpack.c.l.b16 %v2481
  %v2609 = vunpack.c.l.b16 %v2482
  %v2610 = vunpack.c.l.b16 %v2483
  %v2611 = vunpack.c.l.b16 %v2484
  %v2612 = vunpack.c.l.b16 %v2485
  %v2613 = vunpack.c.l.b16 %v2486
  %v2614 = vunpack.c.l.b16 %v2487
  %v2615 = vunpack.c.l.b16 %v2488
  %v2616 = vunpack.c.l.b16 %v2489
  %v2617 = vunpack.c.l.b16 %v2490
  %v2618 = vunpack.c.l.b16 %v2491
  %v2619 = vunpack.c.l.b16 %v2492
  %v2620 = vunpack.c.l.b16 %v2493
  %v2621 = vunpack.c.l.b16 %v2494
  %v2622 = vunpack.c.l.b16 %v2495
  %v2623 = vunpack.c.l.b16 %v2496
  %v2624 = vunpack.c.l.b16 %v2497
  %v2625 = vunpack.c.l.b16 %v2498
  %v2626 = vunpack.c.l.b16 %v2499
  %v2627 = vunpack.c.l.b16 %v2500
  %v2628 = vunpack.c.l.b16 %v2501
  %v2629 = vunpack.c.l.b16 %v2502
  %v2630 = vunpack.c.l.b16 %v2503
  %v2631 = vunpack.c.l.b16 %v2504
  %v2632 = vpack.c.b16 %v2593, %v2592
  %v2633 = vpack.c.b16 %v2595, %v2594
  %v2634 = vpack.c.b16 %v2597, %v2596
  %v2635 = vpack.c.b16 %v2599, %v2598
  %v2636 = vpack.c.b16 %v2601, %v2600
  %v2637 = vpack.c.b16 %v2603, %v2602
  %v2638 = vpack.c.b16 %v2605, %v2604
  %v2639 = vpack.c.b16 %v2607, %v2606
  %v2640 = vpack.c.b16 %v2609, %v2608
  %v2641 = vpack.c.b16 %v2611, %v2610
  %v2642 = vpack.c.b16 %v2613, %v2612
  %v2643 = vpack.c.b16 %v2615, %v2614
  %v2644 = vpack.c.b16 %v2617, %v2616
  %v2645 = vpack.c.b16 %v2619, %v2618
  %v2646 = vpack.c.b16 %v2621, %v2620
  %v2647 = vpack.c.b16 %v2623, %v2622
  %v2648 = vpack.c.b16 %v2625, %v2624
  %v2649 = vpack.c.b16 %v2627, %v2626
  %v2650 = vpack.c.b16 %v2629, %v2628
  %v2651 = vpack.c.b16 %v2631, %v2630
  %v2673 = vsel %vm362, %v2549, 0
  %2675 = vmatprep.subr.bf16.mxu0 0
  %2676 = vmatpush1.bf16.msra.mxu0 %v2632
  %2677 = vmatprep.subr.bf16.mxu0 0
  %2678 = vmatpush1.bf16.msra.mxu0 %v2633
  %2679 = vmatprep.subr.bf16.mxu0 0
  %2680 = vmatpush1.bf16.msra.mxu0 %v2634
  %2681 = vmatprep.subr.bf16.mxu0 0
  %2682 = vmatpush1.bf16.msra.mxu0 %v2635
  %2683 = vmatprep.subr.bf16.mxu0 0
  %2684 = vmatpush1.bf16.msra.mxu0 %v2636
  %2685 = vmatprep.subr.bf16.mxu0 0
  %2686 = vmatpush1.bf16.msra.mxu0 %v2637
  %2687 = vmatprep.subr.bf16.mxu0 0
  %2688 = vmatpush1.bf16.msra.mxu0 %v2638
  %2689 = vmatprep.subr.bf16.mxu0 0
  %2690 = vmatpush1.bf16.msra.mxu0 %v2639
  %2691 = vmatprep.subr.bf16.mxu0 0
  %2692 = vmatpush1.bf16.msra.mxu0 %v2640
  %2693 = vmatprep.subr.bf16.mxu0 0
  %2694 = vmatpush1.bf16.msra.mxu0 %v2641
  %2695 = vmatprep.subr.bf16.mxu0 0
  %2696 = vmatpush1.bf16.msra.mxu0 %v2642
  %2697 = vmatprep.subr.bf16.mxu0 0
  %2698 = vmatpush1.bf16.msra.mxu0 %v2643
  %2699 = vmatprep.subr.bf16.mxu0 0
  %2700 = vmatpush1.bf16.msra.mxu0 %v2644
  %2701 = vmatprep.subr.bf16.mxu0 0
  %2702 = vmatpush1.bf16.msra.mxu0 %v2645
  %2703 = vmatprep.subr.bf16.mxu0 0
  %2704 = vmatpush1.bf16.msra.mxu0 %v2646
  %2705 = vmatprep.subr.bf16.mxu0 0
  %2706 = vmatpush1.bf16.msra.mxu0 %v2647
  %2707 = vmatprep.mubr.bf16.mxu0 %v2548
  %2708 = vmatmul.mubr.bf16.gmra.mrb[0].mxu0 %v2547
  %v2709 = vpop.f32.mrb[0].mxu0
  %v2710 = vadd.f32 0.0, %v2709
  %v2711 = vpop.f32.mrb[0].mxu0
  %v2712 = vpop.f32.mrb[0].mxu0
  %v2713 = vpop.f32.mrb[0].mxu0
  %2714 = vdwg.mxu0
  %2715 = vmatprep.subr.bf16.mxu0 0
  %2716 = vmatpush1.bf16.msra.mxu0 %v2648
  %2717 = vmatprep.subr.bf16.mxu0 0
  %2718 = vmatpush1.bf16.msra.mxu0 %v2649
  %2719 = vmatprep.subr.bf16.mxu0 0
  %2720 = vmatpush1.bf16.msra.mxu0 %v2650
  %2721 = vmatprep.subr.bf16.mxu0 0
  %2722 = vmatpush1.bf16.msra.mxu0 %v2651
  %2723 = vmatprep.subr.bf16.mxu0 0
  %2724 = vmatpush1.bf16.msra.mxu0 0
  %2725 = vmatprep.subr.bf16.mxu0 0
  %2726 = vmatpush1.bf16.msra.mxu0 0
  %2727 = vmatprep.subr.bf16.mxu0 0
  %2728 = vmatpush1.bf16.msra.mxu0 0
  %2729 = vmatprep.subr.bf16.mxu0 0
  %2730 = vmatpush1.bf16.msra.mxu0 0
  %2731 = vmatprep.subr.bf16.mxu0 0
  %2732 = vmatpush1.bf16.msra.mxu0 0
  %2733 = vmatprep.subr.bf16.mxu0 0
  %2734 = vmatpush1.bf16.msra.mxu0 0
  %2735 = vmatprep.subr.bf16.mxu0 0
  %2736 = vmatpush1.bf16.msra.mxu0 0
  %2737 = vmatprep.subr.bf16.mxu0 0
  %2738 = vmatpush1.bf16.msra.mxu0 0
  %2739 = vmatprep.subr.bf16.mxu0 0
  %2740 = vmatpush1.bf16.msra.mxu0 0
  %2741 = vmatprep.subr.bf16.mxu0 0
  %2742 = vmatpush1.bf16.msra.mxu0 0
  %2743 = vmatprep.subr.bf16.mxu0 0
  %2744 = vmatpush1.bf16.msra.mxu0 0
  %2745 = vmatprep.subr.bf16.mxu0 0
  %2746 = vmatpush1.bf16.msra.mxu0 0
  %2747 = vmatprep.mubr.bf16.mxu0 0
  %2748 = vmatmul.mubr.bf16.gmra.mrb[0].mxu0 %v2673
  %v2749 = vpop.f32.mrb[0].mxu0
  %v2750 = vadd.f32 %v2710, %v2749
  %v2751 = vpop.f32.mrb[0].mxu0
  %v2752 = vpop.f32.mrb[0].mxu0
  %v2753 = vpop.f32.mrb[0].mxu0
  %2754 = vdwg.mxu0
  %v2755 = vadd.f32 %v2022, %v2750
  %v2756 = vld [vmem:[%s4 + $0x120] sm:$0xff]
  %v2757 = vld [vmem:[%s4 + $0x128] sm:$0xf]
  %v2758 = vld [vmem:[%s4 + $0x12c] sm:$0xff]
  %v2759 = vld [vmem:[%s4 + $0x134] sm:$0xf]
  %v2760 = vld [vmem:[%s4 + $0x138] sm:$0xff]
  %v2761 = vld [vmem:[%s4 + $0x140] sm:$0xf]
  %v2762 = vld [vmem:[%s4 + $0x144] sm:$0xff]
  %v2763 = vld [vmem:[%s4 + $0x14c] sm:$0xf]
  %v2764 = vld [vmem:[%s4 + $0x150] sm:$0xff]
  %v2765 = vld [vmem:[%s4 + $0x158] sm:$0xf]
  %v2766 = vld [vmem:[%s4 + $0x15c] sm:$0xff]
  %v2767 = vld [vmem:[%s4 + $0x164] sm:$0xf]
  %v2768 = vld [vmem:[%s4 + $0x168] sm:$0xff]
  %v2769 = vld [vmem:[%s4 + $0x170] sm:$0xf]
  %v2770 = vld [vmem:[%s4 + $0x174] sm:$0xff]
  %v2771 = vld [vmem:[%s4 + $0x17c] sm:$0xf]
  %v2772 = vld [vmem:[%s4 + $0x180] sm:$0xff]
  %v2773 = vld [vmem:[%s4 + $0x188] sm:$0xf]
  %v2774 = vld [vmem:[%s4 + $0x18c] sm:$0xff]
  %v2775 = vld [vmem:[%s4 + $0x194] sm:$0xf]
  %v2776 = vld [vmem:[%s4 + $0x198] sm:$0xff]
  %v2777 = vld [vmem:[%s4 + $0x1a0] sm:$0xf]
  %v2778 = vld [vmem:[%s4 + $0x1a4] sm:$0xff]
  %v2779 = vld [vmem:[%s4 + $0x1ac] sm:$0xf]
  %v2780 = vld [vmem:[%s4 + $0x1b0] sm:$0xff]
  %v2781 = vld [vmem:[%s4 + $0x1b8] sm:$0xf]
  %v2782 = vld [vmem:[%s4 + $0x1bc] sm:$0xff]
  %v2783 = vld [vmem:[%s4 + $0x1c4] sm:$0xf]
  %v2784 = vld [vmem:[%s4 + $0x1c8] sm:$0xff]
  %v2785 = vld [vmem:[%s4 + $0x1d0] sm:$0xf]
  %v2786 = vld [vmem:[%s4 + $0x1d4] sm:$0xff]
  %v2787 = vld [vmem:[%s4 + $0x1dc] sm:$0xf]
  %v2788 = vld [vmem:[%s4 + $0x1e0] sm:$0xff]
  %v2789 = vld [vmem:[%s4 + $0x1e8] sm:$0xf]
  %v2790 = vld [vmem:[%s4 + $0x1ec] sm:$0xff]
  %v2791 = vld [vmem:[%s4 + $0x1f4] sm:$0xf]
  %v2792 = vld [vmem:[%s4 + $0x1f8] sm:$0xff]
  %v2793 = vld [vmem:[%s4 + $0x200] sm:$0xf]
  %v2794 = vld [vmem:[%s4 + $0x204] sm:$0xff]
  %v2795 = vld [vmem:[%s4 + $0x20c] sm:$0xf]
  %v2796 = vld [vmem:[%s2] sm:$0xff]
  %v2797 = vld [vmem:[%s2 + $0xc] sm:$0xff]
  %v2798 = vld [vmem:[%s2 + $0x18] sm:$0xff]
  %v2799 = vld [vmem:[%s2 + $0x24] sm:$0xff]
  %v2800 = vld [vmem:[%s2 + $0x30] sm:$0xff]
  %v2801 = vld [vmem:[%s2 + $0x3c] sm:$0xff]
  %v2802 = vld [vmem:[%s2 + $0x48] sm:$0xff]
  %v2803 = vld [vmem:[%s2 + $0x54] sm:$0xff]
  %v2812 = vunpack.c.l.b16 %v2796
  %v2813 = vunpack.c.h.b16 %v2796
  %v2814 = vunpack.c.l.b16 %v2797
  %v2815 = vunpack.c.h.b16 %v2797
  %v2816 = vunpack.c.l.b16 %v2798
  %v2817 = vunpack.c.h.b16 %v2798
  %v2818 = vunpack.c.l.b16 %v2799
  %v2819 = vunpack.c.h.b16 %v2799
  %v2820 = vunpack.c.l.b16 %v2800
  %v2821 = vunpack.c.h.b16 %v2800
  %v2822 = vunpack.c.l.b16 %v2801
  %v2823 = vunpack.c.h.b16 %v2801
  %v2824 = vunpack.c.l.b16 %v2802
  %v2825 = vunpack.c.h.b16 %v2802
  %v2826 = vunpack.c.l.b16 %v2803
  %v2827 = vunpack.c.h.b16 %v2803
  %v2828 = vpack.c.b16 %v2814, %v2812
  %v2829 = vpack.c.b16 %v2815, %v2813
  %v2830 = vpack.c.b16 %v2818, %v2816
  %v2831 = vpack.c.b16 %v2819, %v2817
  %v2832 = vpack.c.b16 %v2822, %v2820
  %v2833 = vpack.c.b16 %v2823, %v2821
  %v2834 = vpack.c.b16 %v2826, %v2824
  %v2835 = vpack.c.b16 %v2827, %v2825
  %v2880 = vunpack.c.l.b16 %v2756
  %v2881 = vunpack.c.h.b16 %v2756
  %v2882 = vunpack.c.l.b16 %v2757
  %v2883 = vunpack.c.l.b16 %v2758
  %v2884 = vunpack.c.h.b16 %v2758
  %v2885 = vunpack.c.l.b16 %v2759
  %v2886 = vunpack.c.l.b16 %v2760
  %v2887 = vunpack.c.h.b16 %v2760
  %v2888 = vunpack.c.l.b16 %v2761
  %v2889 = vunpack.c.l.b16 %v2762
  %v2890 = vunpack.c.h.b16 %v2762
  %v2891 = vunpack.c.l.b16 %v2763
  %v2892 = vunpack.c.l.b16 %v2764
  %v2893 = vunpack.c.h.b16 %v2764
  %v2894 = vunpack.c.l.b16 %v2765
  %v2895 = vunpack.c.l.b16 %v2766
  %v2896 = vunpack.c.h.b16 %v2766
  %v2897 = vunpack.c.l.b16 %v2767
  %v2898 = vunpack.c.l.b16 %v2768
  %v2899 = vunpack.c.h.b16 %v2768
  %v2900 = vunpack.c.l.b16 %v2769
  %v2901 = vunpack.c.l.b16 %v2770
  %v2902 = vunpack.c.h.b16 %v2770
  %v2903 = vunpack.c.l.b16 %v2771
  %v2904 = vunpack.c.l.b16 %v2772
  %v2905 = vunpack.c.h.b16 %v2772
  %v2906 = vunpack.c.l.b16 %v2773
  %v2907 = vunpack.c.l.b16 %v2774
  %v2908 = vunpack.c.h.b16 %v2774
  %v2909 = vunpack.c.l.b16 %v2775
  %v2910 = vunpack.c.l.b16 %v2776
  %v2911 = vunpack.c.h.b16 %v2776
  %v2912 = vunpack.c.l.b16 %v2777
  %v2913 = vunpack.c.l.b16 %v2778
  %v2914 = vunpack.c.h.b16 %v2778
  %v2915 = vunpack.c.l.b16 %v2779
  %v2916 = vunpack.c.l.b16 %v2780
  %v2917 = vunpack.c.h.b16 %v2780
  %v2918 = vunpack.c.l.b16 %v2781
  %v2919 = vunpack.c.l.b16 %v2782
  %v2920 = vunpack.c.h.b16 %v2782
  %v2921 = vunpack.c.l.b16 %v2783
  %v2922 = vunpack.c.l.b16 %v2784
  %v2923 = vunpack.c.h.b16 %v2784
  %v2924 = vunpack.c.l.b16 %v2785
  %v2925 = vunpack.c.l.b16 %v2786
  %v2926 = vunpack.c.h.b16 %v2786
  %v2927 = vunpack.c.l.b16 %v2787
  %v2928 = vunpack.c.l.b16 %v2788
  %v2929 = vunpack.c.h.b16 %v2788
  %v2930 = vunpack.c.l.b16 %v2789
  %v2931 = vunpack.c.l.b16 %v2790
  %v2932 = vunpack.c.h.b16 %v2790
  %v2933 = vunpack.c.l.b16 %v2791
  %v2934 = vunpack.c.l.b16 %v2792
  %v2935 = vunpack.c.h.b16 %v2792
  %v2936 = vunpack.c.l.b16 %v2793
  %v2937 = vunpack.c.l.b16 %v2794
  %v2938 = vunpack.c.h.b16 %v2794
  %v2939 = vunpack.c.l.b16 %v2795
  %v2940 = vpack.c.b16 %v2883, %v2880
  %v2941 = vpack.c.b16 %v2884, %v2881
  %v2942 = vpack.c.b16 %v2885, %v2882
  %v2943 = vpack.c.b16 %v2889, %v2886
  %v2944 = vpack.c.b16 %v2890, %v2887
  %v2945 = vpack.c.b16 %v2891, %v2888
  %v2946 = vpack.c.b16 %v2895, %v2892
  %v2947 = vpack.c.b16 %v2896, %v2893
  %v2948 = vpack.c.b16 %v2897, %v2894
  %v2949 = vpack.c.b16 %v2901, %v2898
  %v2950 = vpack.c.b16 %v2902, %v2899
  %v2951 = vpack.c.b16 %v2903, %v2900
  %v2952 = vpack.c.b16 %v2907, %v2904
  %v2953 = vpack.c.b16 %v2908, %v2905
  %v2954 = vpack.c.b16 %v2909, %v2906
  %v2955 = vpack.c.b16 %v2913, %v2910
  %v2956 = vpack.c.b16 %v2914, %v2911
  %v2957 = vpack.c.b16 %v2915, %v2912
  %v2958 = vpack.c.b16 %v2919, %v2916
  %v2959 = vpack.c.b16 %v2920, %v2917
  %v2960 = vpack.c.b16 %v2921, %v2918
  %v2961 = vpack.c.b16 %v2925, %v2922
  %v2962 = vpack.c.b16 %v2926, %v2923
  %v2963 = vpack.c.b16 %v2927, %v2924
  %v2964 = vpack.c.b16 %v2931, %v2928
  %v2965 = vpack.c.b16 %v2932, %v2929
  %v2966 = vpack.c.b16 %v2933, %v2930
  %v2967 = vpack.c.b16 %v2937, %v2934
  %v2968 = vpack.c.b16 %v2938, %v2935
  %v2969 = vpack.c.b16 %v2939, %v2936
  %v3001 = vsel %vm42, %v2829, 0
  %v3004 = vsel %vm42, %v2831, 0
  %v3007 = vsel %vm42, %v2833, 0
  %v3010 = vsel %vm42, %v2835, 0
  %3012 = vmatprep.subr.bf16.mxu0 %v2941
  %3013 = vmatpush1.bf16.msra.mxu0 %v2940
  %3014 = vmatprep.subr.bf16.mxu0 %v2944
  %3015 = vmatpush1.bf16.msra.mxu0 %v2943
  %3016 = vmatprep.subr.bf16.mxu0 %v2947
  %3017 = vmatpush1.bf16.msra.mxu0 %v2946
  %3018 = vmatprep.subr.bf16.mxu0 %v2950
  %3019 = vmatpush1.bf16.msra.mxu0 %v2949
  %3020 = vmatprep.subr.bf16.mxu0 %v2953
  %3021 = vmatpush1.bf16.msra.mxu0 %v2952
  %3022 = vmatprep.subr.bf16.mxu0 %v2956
  %3023 = vmatpush1.bf16.msra.mxu0 %v2955
  %3024 = vmatprep.subr.bf16.mxu0 %v2959
  %3025 = vmatpush1.bf16.msra.mxu0 %v2958
  %3026 = vmatprep.subr.bf16.mxu0 %v2962
  %3027 = vmatpush1.bf16.msra.mxu0 %v2961
  %3028 = vmatprep.subr.bf16.mxu0 %v2965
  %3029 = vmatpush1.bf16.msra.mxu0 %v2964
  %3030 = vmatprep.subr.bf16.mxu0 %v2968
  %3031 = vmatpush1.bf16.msra.mxu0 %v2967
  %3032 = vmatprep.subr.bf16.mxu0 0
  %3033 = vmatpush1.bf16.msra.mxu0 0
  %3034 = vmatprep.subr.bf16.mxu0 0
  %3035 = vmatpush1.bf16.msra.mxu0 0
  %3036 = vmatprep.subr.bf16.mxu0 0
  %3037 = vmatpush1.bf16.msra.mxu0 0
  %3038 = vmatprep.subr.bf16.mxu0 0
  %3039 = vmatpush1.bf16.msra.mxu0 0
  %3040 = vmatprep.subr.bf16.mxu0 0
  %3041 = vmatpush1.bf16.msra.mxu0 0
  %3042 = vmatprep.subr.bf16.mxu0 0
  %3043 = vmatpush1.bf16.msra.mxu0 0
  %3044 = vmatprep.mubr.bf16.mxu0 %v3001
  %3045 = vmatmul.mubr.bf16.gmra.mrb[0].mxu0 %v2828
  %v3046 = vpop.f32.mrb[0].mxu0
  %v3047 = vadd.f32 0.0, %v3046
  %v3048 = vpop.f32.mrb[0].mxu0
  %v3049 = vadd.f32 0.0, %v3048
  %v3050 = vpop.f32.mrb[0].mxu0
  %v3051 = vadd.f32 0.0, %v3050
  %v3052 = vpop.f32.mrb[0].mxu0
  %v3053 = vadd.f32 0.0, %v3052
  %3054 = vmatprep.mubr.bf16.mxu0 %v3004
  %3055 = vmatmul.mubr.bf16.gmra.mrb[0].mxu0 %v2830
  %v3056 = vpop.f32.mrb[0].mxu0
  %v3057 = vadd.f32 0.0, %v3056
  %v3058 = vpop.f32.mrb[0].mxu0
  %v3059 = vadd.f32 0.0, %v3058
  %v3060 = vpop.f32.mrb[0].mxu0
  %v3061 = vadd.f32 0.0, %v3060
  %v3062 = vpop.f32.mrb[0].mxu0
  %v3063 = vadd.f32 0.0, %v3062
  %3064 = vmatprep.mubr.bf16.mxu0 %v3007
  %3065 = vmatmul.mubr.bf16.gmra.mrb[0].mxu0 %v2832
  %v3066 = vpop.f32.mrb[0].mxu0
  %v3067 = vadd.f32 0.0, %v3066
  %v3068 = vpop.f32.mrb[0].mxu0
  %v3069 = vadd.f32 0.0, %v3068
  %v3070 = vpop.f32.mrb[0].mxu0
  %v3071 = vadd.f32 0.0, %v3070
  %v3072 = vpop.f32.mrb[0].mxu0
  %v3073 = vadd.f32 0.0, %v3072
  %3074 = vmatprep.mubr.bf16.mxu0 %v3010
  %3075 = vmatmul.mubr.bf16.gmra.mrb[0].mxu0 %v2834
  %v3076 = vpop.f32.mrb[0].mxu0
  %v3077 = vadd.f32 0.0, %v3076
  %v3078 = vpop.f32.mrb[0].mxu0
  %v3079 = vadd.f32 0.0, %v3078
  %v3080 = vpop.f32.mrb[0].mxu0
  %v3081 = vadd.f32 0.0, %v3080
  %v3082 = vpop.f32.mrb[0].mxu0
  %v3083 = vadd.f32 0.0, %v3082
  %3084 = vdwg.mxu0
  %3085 = vmatprep.subr.bf16.mxu0 0
  %3086 = vmatpush1.bf16.msra.mxu0 %v2942
  %3087 = vmatprep.subr.bf16.mxu0 0
  %3088 = vmatpush1.bf16.msra.mxu0 %v2945
  %3089 = vmatprep.subr.bf16.mxu0 0
  %3090 = vmatpush1.bf16.msra.mxu0 %v2948
  %3091 = vmatprep.subr.bf16.mxu0 0
  %3092 = vmatpush1.bf16.msra.mxu0 %v2951
  %3093 = vmatprep.subr.bf16.mxu0 0
  %3094 = vmatpush1.bf16.msra.mxu0 %v2954
  %3095 = vmatprep.subr.bf16.mxu0 0
  %3096 = vmatpush1.bf16.msra.mxu0 %v2957
  %3097 = vmatprep.subr.bf16.mxu0 0
  %3098 = vmatpush1.bf16.msra.mxu0 %v2960
  %3099 = vmatprep.subr.bf16.mxu0 0
  %3100 = vmatpush1.bf16.msra.mxu0 %v2963
  %3101 = vmatprep.subr.bf16.mxu0 0
  %3102 = vmatpush1.bf16.msra.mxu0 %v2966
  %3103 = vmatprep.subr.bf16.mxu0 0
  %3104 = vmatpush1.bf16.msra.mxu0 %v2969
  %3105 = vmatprep.subr.bf16.mxu0 0
  %3106 = vmatpush1.bf16.msra.mxu0 0
  %3107 = vmatprep.subr.bf16.mxu0 0
  %3108 = vmatpush1.bf16.msra.mxu0 0
  %3109 = vmatprep.subr.bf16.mxu0 0
  %3110 = vmatpush1.bf16.msra.mxu0 0
  %3111 = vmatprep.subr.bf16.mxu0 0
  %3112 = vmatpush1.bf16.msra.mxu0 0
  %3113 = vmatprep.subr.bf16.mxu0 0
  %3114 = vmatpush1.bf16.msra.mxu0 0
  %3115 = vmatprep.subr.bf16.mxu0 0
  %3116 = vmatpush1.bf16.msra.mxu0 0
  %3117 = vmatprep.mubr.bf16.mxu0 %v3001
  %3118 = vmatmul.mubr.bf16.gmra.mrb[0].mxu0 %v2828
  %v3119 = vpop.f32.mrb[0].mxu0
  %v3120 = vadd.f32 0.0, %v3119
  %v3121 = vpop.f32.mrb[0].mxu0
  %v3122 = vpop.f32.mrb[0].mxu0
  %v3123 = vadd.f32 0.0, %v3122
  %v3124 = vpop.f32.mrb[0].mxu0
  %3125 = vmatprep.mubr.bf16.mxu0 %v3004
  %3126 = vmatmul.mubr.bf16.gmra.mrb[0].mxu0 %v2830
  %v3127 = vpop.f32.mrb[0].mxu0
  %v3128 = vadd.f32 0.0, %v3127
  %v3129 = vpop.f32.mrb[0].mxu0
  %v3130 = vpop.f32.mrb[0].mxu0
  %v3131 = vadd.f32 0.0, %v3130
  %v3132 = vpop.f32.mrb[0].mxu0
  %3133 = vmatprep.mubr.bf16.mxu0 %v3007
  %3134 = vmatmul.mubr.bf16.gmra.mrb[0].mxu0 %v2832
  %v3135 = vpop.f32.mrb[0].mxu0
  %v3136 = vadd.f32 0.0, %v3135
  %v3137 = vpop.f32.mrb[0].mxu0
  %v3138 = vpop.f32.mrb[0].mxu0
  %v3139 = vadd.f32 0.0, %v3138
  %v3140 = vpop.f32.mrb[0].mxu0
  %3141 = vmatprep.mubr.bf16.mxu0 %v3010
  %3142 = vmatmul.mubr.bf16.gmra.mrb[0].mxu0 %v2834
  %v3143 = vpop.f32.mrb[0].mxu0
  %v3144 = vadd.f32 0.0, %v3143
  %v3145 = vpop.f32.mrb[0].mxu0
  %v3146 = vpop.f32.mrb[0].mxu0
  %v3147 = vadd.f32 0.0, %v3146
  %v3148 = vpop.f32.mrb[0].mxu0
  %3149 = vdwg.mxu0
  %vm3150 = vcmp.lt.s32.totalorder %v451, 12
  %vm3151 = vcmp.lt.s32.totalorder %v622, 12
  %v3152 = vsel %vm3150, 0.0, -1e+30
  %v3153 = vsel %vm3151, 0.0, -1e+30
  %v3154 = vadd.f32 %v3047, %v3152
  %v3155 = vadd.f32 %v3049, %v3152
  %v3156 = vadd.f32 %v3120, %v3152
  %v3157 = vadd.f32 %v3051, %v3153
  %v3158 = vadd.f32 %v3053, %v3153
  %v3159 = vadd.f32 %v3123, %v3153
  %v3160 = vadd.f32 %v3057, %v3152
  %v3161 = vadd.f32 %v3059, %v3152
  %v3162 = vadd.f32 %v3128, %v3152
  %v3163 = vadd.f32 %v3061, %v3153
  %v3164 = vadd.f32 %v3063, %v3153
  %v3165 = vadd.f32 %v3131, %v3153
  %v3166 = vadd.f32 %v3067, %v3152
  %v3167 = vadd.f32 %v3069, %v3152
  %v3168 = vadd.f32 %v3136, %v3152
  %v3169 = vadd.f32 %v3071, %v3153
  %v3170 = vadd.f32 %v3073, %v3153
  %v3171 = vadd.f32 %v3139, %v3153
  %v3172 = vadd.f32 %v3077, %v3152
  %v3173 = vadd.f32 %v3079, %v3152
  %v3174 = vadd.f32 %v3144, %v3152
  %v3175 = vadd.f32 %v3081, %v3153
  %v3176 = vadd.f32 %v3083, %v3153
  %v3177 = vadd.f32 %v3147, %v3153
  %v3178 = vmax.f32 %v3154, %v3157
  %v3179 = vrot.slane %v3178, 4
  %v3180 = vmax.f32 %v3178, %v3179
  %v3181 = vrot.slane %v3180, 2
  %v3182 = vmax.f32 %v3180, %v3181
  %v3183 = vrot.slane %v3182, 1
  %v3184 = vmax.f32 %v3182, %v3183
  %v3185 = vmax.f32 %v3155, %v3158
  %v3186 = vrot.slane %v3185, 4
  %v3187 = vmax.f32 %v3185, %v3186
  %v3188 = vrot.slane %v3187, 2
  %v3189 = vmax.f32 %v3187, %v3188
  %v3190 = vrot.slane %v3189, 1
  %v3191 = vmax.f32 %v3189, %v3190
  %v3192 = vsel %vm362, %v3156, -inf
  %v3193 = vsel %vm362, %v3159, -inf
  %v3194 = vmax.f32 %v3192, %v3193
  %v3195 = vrot.slane %v3194, 4
  %v3196 = vmax.f32 %v3194, %v3195
  %v3197 = vrot.slane %v3196, 2
  %v3198 = vmax.f32 %v3196, %v3197
  %v3199 = vrot.slane %v3198, 1
  %v3200 = vmax.f32 %v3198, %v3199
  %v3201 = vmax.f32 %v3160, %v3163
  %v3202 = vrot.slane %v3201, 4
  %v3203 = vmax.f32 %v3201, %v3202
  %v3204 = vrot.slane %v3203, 2
  %v3205 = vmax.f32 %v3203, %v3204
  %v3206 = vrot.slane %v3205, 1
  %v3207 = vmax.f32 %v3205, %v3206
  %v3208 = vmax.f32 %v3161, %v3164
  %v3209 = vrot.slane %v3208, 4
  %v3210 = vmax.f32 %v3208, %v3209
  %v3211 = vrot.slane %v3210, 2
  %v3212 = vmax.f32 %v3210, %v3211
  %v3213 = vrot.slane %v3212, 1
  %v3214 = vmax.f32 %v3212, %v3213
  %v3215 = vsel %vm362, %v3162, -inf
  %v3216 = vsel %vm362, %v3165, -inf
  %v3217 = vmax.f32 %v3215, %v3216
  %v3218 = vrot.slane %v3217, 4
  %v3219 = vmax.f32 %v3217, %v3218
  %v3220 = vrot.slane %v3219, 2
  %v3221 = vmax.f32 %v3219, %v3220
  %v3222 = vrot.slane %v3221, 1
  %v3223 = vmax.f32 %v3221, %v3222
  %v3224 = vmax.f32 %v3166, %v3169
  %v3225 = vrot.slane %v3224, 4
  %v3226 = vmax.f32 %v3224, %v3225
  %v3227 = vrot.slane %v3226, 2
  %v3228 = vmax.f32 %v3226, %v3227
  %v3229 = vrot.slane %v3228, 1
  %v3230 = vmax.f32 %v3228, %v3229
  %v3231 = vmax.f32 %v3167, %v3170
  %v3232 = vrot.slane %v3231, 4
  %v3233 = vmax.f32 %v3231, %v3232
  %v3234 = vrot.slane %v3233, 2
  %v3235 = vmax.f32 %v3233, %v3234
  %v3236 = vrot.slane %v3235, 1
  %v3237 = vmax.f32 %v3235, %v3236
  %v3238 = vsel %vm362, %v3168, -inf
  %v3239 = vsel %vm362, %v3171, -inf
  %v3240 = vmax.f32 %v3238, %v3239
  %v3241 = vrot.slane %v3240, 4
  %v3242 = vmax.f32 %v3240, %v3241
  %v3243 = vrot.slane %v3242, 2
  %v3244 = vmax.f32 %v3242, %v3243
  %v3245 = vrot.slane %v3244, 1
  %v3246 = vmax.f32 %v3244, %v3245
  %v3247 = vmax.f32 %v3172, %v3175
  %v3248 = vrot.slane %v3247, 4
  %v3249 = vmax.f32 %v3247, %v3248
  %v3250 = vrot.slane %v3249, 2
  %v3251 = vmax.f32 %v3249, %v3250
  %v3252 = vrot.slane %v3251, 1
  %v3253 = vmax.f32 %v3251, %v3252
  %v3254 = vmax.f32 %v3173, %v3176
  %v3255 = vrot.slane %v3254, 4
  %v3256 = vmax.f32 %v3254, %v3255
  %v3257 = vrot.slane %v3256, 2
  %v3258 = vmax.f32 %v3256, %v3257
  %v3259 = vrot.slane %v3258, 1
  %v3260 = vmax.f32 %v3258, %v3259
  %v3261 = vsel %vm362, %v3174, -inf
  %v3262 = vsel %vm362, %v3177, -inf
  %v3263 = vmax.f32 %v3261, %v3262
  %v3264 = vrot.slane %v3263, 4
  %v3265 = vmax.f32 %v3263, %v3264
  %v3266 = vrot.slane %v3265, 2
  %v3267 = vmax.f32 %v3265, %v3266
  %v3268 = vrot.slane %v3267, 1
  %v3269 = vmax.f32 %v3267, %v3268
  %s3270 = scalar_lea.vmem %s3, 6
  %v3271 = vld [vmem:[%s3270] ss:$8 sm:$0x7]
  %v3273 = vlaneseq
  %v3274 = vshrl.u32 %v3273, 7
  %v3275 = vsub.s32 0, %v3274
  %v3276 = vrot.slane %v3271, %v3275
  %v3277 = vlaneseq
  %v3278 = vshrl.u32 %v3277, 7
  %v3279 = vsub.s32 1, %v3278
  %v3280 = vrot.slane %v3271, %v3279
  %v3281 = vlaneseq
  %v3282 = vshrl.u32 %v3281, 7
  %v3283 = vsub.s32 2, %v3282
  %v3284 = vrot.slane %v3271, %v3283
  %v3288 = vadd.f32 %v3184, %v3276
  %v3289 = vadd.f32 %v3191, %v3280
  %v3290 = vadd.f32 %v3200, %v3284
  %v3291 = vadd.f32 %v3207, %v3276
  %v3292 = vadd.f32 %v3214, %v3280
  %v3293 = vadd.f32 %v3223, %v3284
  %v3294 = vadd.f32 %v3230, %v3276
  %v3295 = vadd.f32 %v3237, %v3280
  %v3296 = vadd.f32 %v3246, %v3284
  %v3297 = vadd.f32 %v3253, %v3276
  %v3298 = vadd.f32 %v3260, %v3280
  %v3299 = vadd.f32 %v3269, %v3284
  %v3300 = vmul.f32 %v3288, %v548
  %v3301 = vmul.f32 %v3289, %v550
  %v3302 = vmul.f32 %v3290, %v619
  %v3303 = vmul.f32 %v3291, %v995
  %v3304 = vmul.f32 %v3292, %v996
  %v3305 = vmul.f32 %v3293, %v997
  %v3306 = vmul.f32 %v3294, %v998
  %v3307 = vmul.f32 %v3295, %v999
  %v3308 = vmul.f32 %v3296, %v1000
  %v3309 = vmul.f32 %v3297, %v1001
  %v3310 = vmul.f32 %v3298, %v1002
  %v3311 = vmul.f32 %v3299, %v1003
  %v3312 = vpack.c.bf16 %v3300, %v3300
  %v3313 = vpack.c.bf16 %v3301, %v3301
  %v3314 = vpack.c.bf16 %v3302, %v3302
  %v3315 = vpack.c.bf16 %v3303, %v3303
  %v3316 = vpack.c.bf16 %v3304, %v3304
  %v3317 = vpack.c.bf16 %v3305, %v3305
  %v3318 = vpack.c.bf16 %v3306, %v3306
  %v3319 = vpack.c.bf16 %v3307, %v3307
  %v3320 = vpack.c.bf16 %v3308, %v3308
  %v3321 = vpack.c.bf16 %v3309, %v3309
  %v3322 = vpack.c.bf16 %v3310, %v3310
  %v3323 = vpack.c.bf16 %v3311, %v3311
  %s3324 = scalar_lea.vmem %s5, 480
  %v3325 = vld [vmem:[%s3324] sm:$0xf]
  %v3326 = vld [vmem:[%s3324 + $0x4] sm:$0xf]
  %v3327 = vld [vmem:[%s3324 + $0x8] sm:$0xf]
  %v3328 = vld [vmem:[%s3324 + $0xc] sm:$0xf]
  %v3329 = vld [vmem:[%s3324 + $0x10] sm:$0xf]
  %v3330 = vld [vmem:[%s3324 + $0x14] sm:$0xf]
  %v3331 = vld [vmem:[%s3324 + $0x18] sm:$0xf]
  %v3332 = vld [vmem:[%s3324 + $0x1c] sm:$0xf]
  %v3333 = vld [vmem:[%s3324 + $0x20] sm:$0xf]
  %v3334 = vld [vmem:[%s3324 + $0x24] sm:$0xf]
  %v3335 = vld [vmem:[%s3324 + $0x28] sm:$0xf]
  %v3336 = vld [vmem:[%s3324 + $0x2c] sm:$0xf]
  %v3337 = vld [vmem:[%s3324 + $0x30] sm:$0xf]
  %v3338 = vld [vmem:[%s3324 + $0x34] sm:$0xf]
  %v3339 = vld [vmem:[%s3324 + $0x38] sm:$0xf]
  %v3340 = vld [vmem:[%s3324 + $0x3c] sm:$0xf]
  %v3341 = vld [vmem:[%s3324 + $0x40] sm:$0xf]
  %v3342 = vld [vmem:[%s3324 + $0x44] sm:$0xf]
  %v3343 = vld [vmem:[%s3324 + $0x48] sm:$0xf]
  %v3344 = vld [vmem:[%s3324 + $0x4c] sm:$0xf]
  %v3345 = vld [vmem:[%s3324 + $0x50] sm:$0xf]
  %v3346 = vld [vmem:[%s3324 + $0x54] sm:$0xf]
  %v3347 = vld [vmem:[%s3324 + $0x58] sm:$0xf]
  %v3348 = vld [vmem:[%s3324 + $0x5c] sm:$0xf]
  %v3349 = vld [vmem:[%s3324 + $0x60] sm:$0xf]
  %v3350 = vld [vmem:[%s3324 + $0x64] sm:$0xf]
  %v3351 = vld [vmem:[%s3324 + $0x68] sm:$0xf]
  %v3352 = vld [vmem:[%s3324 + $0x6c] sm:$0xf]
  %v3353 = vld [vmem:[%s3324 + $0x70] sm:$0xf]
  %v3354 = vld [vmem:[%s3324 + $0x74] sm:$0xf]
  %v3355 = vld [vmem:[%s3324 + $0x78] sm:$0xf]
  %v3356 = vld [vmem:[%s3324 + $0x7c] sm:$0xf]
  %v3357 = vld [vmem:[%s3324 + $0x80] sm:$0xf]
  %v3358 = vld [vmem:[%s3324 + $0x84] sm:$0xf]
  %v3359 = vld [vmem:[%s3324 + $0x88] sm:$0xf]
  %v3360 = vld [vmem:[%s3324 + $0x8c] sm:$0xf]
  %v3361 = vld [vmem:[%s3324 + $0x90] sm:$0xf]
  %v3362 = vld [vmem:[%s3324 + $0x94] sm:$0xf]
  %v3363 = vld [vmem:[%s3324 + $0x98] sm:$0xf]
  %v3364 = vld [vmem:[%s3324 + $0x9c] sm:$0xf]
  %v3377 = vunpack.c.l.b16 %v3312
  %v3378 = vunpack.c.l.b16 %v3313
  %v3379 = vunpack.c.l.b16 %v3314
  %v3380 = vunpack.c.l.b16 %v3315
  %v3381 = vunpack.c.l.b16 %v3316
  %v3382 = vunpack.c.l.b16 %v3317
  %v3383 = vunpack.c.l.b16 %v3318
  %v3384 = vunpack.c.l.b16 %v3319
  %v3385 = vunpack.c.l.b16 %v3320
  %v3386 = vunpack.c.l.b16 %v3321
  %v3387 = vunpack.c.l.b16 %v3322
  %v3388 = vunpack.c.l.b16 %v3323
  %v3389 = vrot.slane %v3380, 7
  %v3390 = vsel %vm129, %v3389, %v3377
  %v3391 = vrot.slane %v3383, 6
  %v3392 = vsel %vm131, %v3391, %v3390
  %v3393 = vrot.slane %v3386, 5
  %v3394 = vsel %vm133, %v3393, %v3392
  %v3395 = vrot.slane %v3381, 7
  %v3396 = vsel %vm129, %v3395, %v3378
  %v3397 = vrot.slane %v3384, 6
  %v3398 = vsel %vm131, %v3397, %v3396
  %v3399 = vrot.slane %v3387, 5
  %v3400 = vsel %vm133, %v3399, %v3398
  %v3401 = vrot.slane %v3382, 7
  %v3402 = vsel %vm129, %v3401, %v3379
  %v3403 = vrot.slane %v3385, 6
  %v3404 = vsel %vm131, %v3403, %v3402
  %v3405 = vrot.slane %v3388, 5
  %v3406 = vsel %vm133, %v3405, %v3404
  %v3407 = vpack.c.b16 %v3394, %v3394
  %v3408 = vpack.c.b16 %v3400, %v3400
  %v3409 = vpack.c.b16 %v3406, %v3406
  %v3452 = vunpack.c.l.b16 %v3325
  %v3453 = vunpack.c.l.b16 %v3326
  %v3454 = vunpack.c.l.b16 %v3327
  %v3455 = vunpack.c.l.b16 %v3328
  %v3456 = vunpack.c.l.b16 %v3329
  %v3457 = vunpack.c.l.b16 %v3330
  %v3458 = vunpack.c.l.b16 %v3331
  %v3459 = vunpack.c.l.b16 %v3332
  %v3460 = vunpack.c.l.b16 %v3333
  %v3461 = vunpack.c.l.b16 %v3334
  %v3462 = vunpack.c.l.b16 %v3335
  %v3463 = vunpack.c.l.b16 %v3336
  %v3464 = vunpack.c.l.b16 %v3337
  %v3465 = vunpack.c.l.b16 %v3338
  %v3466 = vunpack.c.l.b16 %v3339
  %v3467 = vunpack.c.l.b16 %v3340
  %v3468 = vunpack.c.l.b16 %v3341
  %v3469 = vunpack.c.l.b16 %v3342
  %v3470 = vunpack.c.l.b16 %v3343
  %v3471 = vunpack.c.l.b16 %v3344
  %v3472 = vunpack.c.l.b16 %v3345
  %v3473 = vunpack.c.l.b16 %v3346
  %v3474 = vunpack.c.l.b16 %v3347
  %v3475 = vunpack.c.l.b16 %v3348
  %v3476 = vunpack.c.l.b16 %v3349
  %v3477 = vunpack.c.l.b16 %v3350
  %v3478 = vunpack.c.l.b16 %v3351
  %v3479 = vunpack.c.l.b16 %v3352
  %v3480 = vunpack.c.l.b16 %v3353
  %v3481 = vunpack.c.l.b16 %v3354
  %v3482 = vunpack.c.l.b16 %v3355
  %v3483 = vunpack.c.l.b16 %v3356
  %v3484 = vunpack.c.l.b16 %v3357
  %v3485 = vunpack.c.l.b16 %v3358
  %v3486 = vunpack.c.l.b16 %v3359
  %v3487 = vunpack.c.l.b16 %v3360
  %v3488 = vunpack.c.l.b16 %v3361
  %v3489 = vunpack.c.l.b16 %v3362
  %v3490 = vunpack.c.l.b16 %v3363
  %v3491 = vunpack.c.l.b16 %v3364
  %v3492 = vpack.c.b16 %v3453, %v3452
  %v3493 = vpack.c.b16 %v3455, %v3454
  %v3494 = vpack.c.b16 %v3457, %v3456
  %v3495 = vpack.c.b16 %v3459, %v3458
  %v3496 = vpack.c.b16 %v3461, %v3460
  %v3497 = vpack.c.b16 %v3463, %v3462
  %v3498 = vpack.c.b16 %v3465, %v3464
  %v3499 = vpack.c.b16 %v3467, %v3466
  %v3500 = vpack.c.b16 %v3469, %v3468
  %v3501 = vpack.c.b16 %v3471, %v3470
  %v3502 = vpack.c.b16 %v3473, %v3472
  %v3503 = vpack.c.b16 %v3475, %v3474
  %v3504 = vpack.c.b16 %v3477, %v3476
  %v3505 = vpack.c.b16 %v3479, %v3478
  %v3506 = vpack.c.b16 %v3481, %v3480
  %v3507 = vpack.c.b16 %v3483, %v3482
  %v3508 = vpack.c.b16 %v3485, %v3484
  %v3509 = vpack.c.b16 %v3487, %v3486
  %v3510 = vpack.c.b16 %v3489, %v3488
  %v3511 = vpack.c.b16 %v3491, %v3490
  %v3533 = vsel %vm362, %v3409, 0
  %3535 = vmatprep.subr.bf16.mxu0 0
  %3536 = vmatpush1.bf16.msra.mxu0 %v3492
  %3537 = vmatprep.subr.bf16.mxu0 0
  %3538 = vmatpush1.bf16.msra.mxu0 %v3493
  %3539 = vmatprep.subr.bf16.mxu0 0
  %3540 = vmatpush1.bf16.msra.mxu0 %v3494
  %3541 = vmatprep.subr.bf16.mxu0 0
  %3542 = vmatpush1.bf16.msra.mxu0 %v3495
  %3543 = vmatprep.subr.bf16.mxu0 0
  %3544 = vmatpush1.bf16.msra.mxu0 %v3496
  %3545 = vmatprep.subr.bf16.mxu0 0
  %3546 = vmatpush1.bf16.msra.mxu0 %v3497
  %3547 = vmatprep.subr.bf16.mxu0 0
  %3548 = vmatpush1.bf16.msra.mxu0 %v3498
  %3549 = vmatprep.subr.bf16.mxu0 0
  %3550 = vmatpush1.bf16.msra.mxu0 %v3499
  %3551 = vmatprep.subr.bf16.mxu0 0
  %3552 = vmatpush1.bf16.msra.mxu0 %v3500
  %3553 = vmatprep.subr.bf16.mxu0 0
  %3554 = vmatpush1.bf16.msra.mxu0 %v3501
  %3555 = vmatprep.subr.bf16.mxu0 0
  %3556 = vmatpush1.bf16.msra.mxu0 %v3502
  %3557 = vmatprep.subr.bf16.mxu0 0
  %3558 = vmatpush1.bf16.msra.mxu0 %v3503
  %3559 = vmatprep.subr.bf16.mxu0 0
  %3560 = vmatpush1.bf16.msra.mxu0 %v3504
  %3561 = vmatprep.subr.bf16.mxu0 0
  %3562 = vmatpush1.bf16.msra.mxu0 %v3505
  %3563 = vmatprep.subr.bf16.mxu0 0
  %3564 = vmatpush1.bf16.msra.mxu0 %v3506
  %3565 = vmatprep.subr.bf16.mxu0 0
  %3566 = vmatpush1.bf16.msra.mxu0 %v3507
  %3567 = vmatprep.mubr.bf16.mxu0 %v3408
  %3568 = vmatmul.mubr.bf16.gmra.mrb[0].mxu0 %v3407
  %v3569 = vpop.f32.mrb[0].mxu0
  %v3570 = vadd.f32 0.0, %v3569
  %v3571 = vpop.f32.mrb[0].mxu0
  %v3572 = vpop.f32.mrb[0].mxu0
  %v3573 = vpop.f32.mrb[0].mxu0
  %3574 = vdwg.mxu0
  %3575 = vmatprep.subr.bf16.mxu0 0
  %3576 = vmatpush1.bf16.msra.mxu0 %v3508
  %3577 = vmatprep.subr.bf16.mxu0 0
  %3578 = vmatpush1.bf16.msra.mxu0 %v3509
  %3579 = vmatprep.subr.bf16.mxu0 0
  %3580 = vmatpush1.bf16.msra.mxu0 %v3510
  %3581 = vmatprep.subr.bf16.mxu0 0
  %3582 = vmatpush1.bf16.msra.mxu0 %v3511
  %3583 = vmatprep.subr.bf16.mxu0 0
  %3584 = vmatpush1.bf16.msra.mxu0 0
  %3585 = vmatprep.subr.bf16.mxu0 0
  %3586 = vmatpush1.bf16.msra.mxu0 0
  %3587 = vmatprep.subr.bf16.mxu0 0
  %3588 = vmatpush1.bf16.msra.mxu0 0
  %3589 = vmatprep.subr.bf16.mxu0 0
  %3590 = vmatpush1.bf16.msra.mxu0 0
  %3591 = vmatprep.subr.bf16.mxu0 0
  %3592 = vmatpush1.bf16.msra.mxu0 0
  %3593 = vmatprep.subr.bf16.mxu0 0
  %3594 = vmatpush1.bf16.msra.mxu0 0
  %3595 = vmatprep.subr.bf16.mxu0 0
  %3596 = vmatpush1.bf16.msra.mxu0 0
  %3597 = vmatprep.subr.bf16.mxu0 0
  %3598 = vmatpush1.bf16.msra.mxu0 0
  %3599 = vmatprep.subr.bf16.mxu0 0
  %3600 = vmatpush1.bf16.msra.mxu0 0
  %3601 = vmatprep.subr.bf16.mxu0 0
  %3602 = vmatpush1.bf16.msra.mxu0 0
  %3603 = vmatprep.subr.bf16.mxu0 0
  %3604 = vmatpush1.bf16.msra.mxu0 0
  %3605 = vmatprep.subr.bf16.mxu0 0
  %3606 = vmatpush1.bf16.msra.mxu0 0
  %3607 = vmatprep.mubr.bf16.mxu0 0
  %3608 = vmatmul.mubr.bf16.gmra.mrb[0].mxu0 %v3533
  %v3609 = vpop.f32.mrb[0].mxu0
  %v3610 = vadd.f32 %v3570, %v3609
  %v3611 = vpop.f32.mrb[0].mxu0
  %v3612 = vpop.f32.mrb[0].mxu0
  %v3613 = vpop.f32.mrb[0].mxu0
  %3614 = vdwg.mxu0
  %v3615 = vadd.f32 %v2755, %v3610
  %v3616 = vld [vmem:[%s4 + $0x210] sm:$0xff]
  %v3617 = vld [vmem:[%s4 + $0x218] sm:$0xf]
  %v3618 = vld [vmem:[%s4 + $0x21c] sm:$0xff]
  %v3619 = vld [vmem:[%s4 + $0x224] sm:$0xf]
  %v3620 = vld [vmem:[%s4 + $0x228] sm:$0xff]
  %v3621 = vld [vmem:[%s4 + $0x230] sm:$0xf]
  %v3622 = vld [vmem:[%s4 + $0x234] sm:$0xff]
  %v3623 = vld [vmem:[%s4 + $0x23c] sm:$0xf]
  %v3624 = vld [vmem:[%s4 + $0x240] sm:$0xff]
  %v3625 = vld [vmem:[%s4 + $0x248] sm:$0xf]
  %v3626 = vld [vmem:[%s4 + $0x24c] sm:$0xff]
  %v3627 = vld [vmem:[%s4 + $0x254] sm:$0xf]
  %v3628 = vld [vmem:[%s4 + $0x258] sm:$0xff]
  %v3629 = vld [vmem:[%s4 + $0x260] sm:$0xf]
  %v3630 = vld [vmem:[%s4 + $0x264] sm:$0xff]
  %v3631 = vld [vmem:[%s4 + $0x26c] sm:$0xf]
  %v3632 = vld [vmem:[%s4 + $0x270] sm:$0xff]
  %v3633 = vld [vmem:[%s4 + $0x278] sm:$0xf]
  %v3634 = vld [vmem:[%s4 + $0x27c] sm:$0xff]
  %v3635 = vld [vmem:[%s4 + $0x284] sm:$0xf]
  %v3636 = vld [vmem:[%s4 + $0x288] sm:$0xff]
  %v3637 = vld [vmem:[%s4 + $0x290] sm:$0xf]
  %v3638 = vld [vmem:[%s4 + $0x294] sm:$0xff]
  %v3639 = vld [vmem:[%s4 + $0x29c] sm:$0xf]
  %v3640 = vld [vmem:[%s4 + $0x2a0] sm:$0xff]
  %v3641 = vld [vmem:[%s4 + $0x2a8] sm:$0xf]
  %v3642 = vld [vmem:[%s4 + $0x2ac] sm:$0xff]
  %v3643 = vld [vmem:[%s4 + $0x2b4] sm:$0xf]
  %v3644 = vld [vmem:[%s4 + $0x2b8] sm:$0xff]
  %v3645 = vld [vmem:[%s4 + $0x2c0] sm:$0xf]
  %v3646 = vld [vmem:[%s4 + $0x2c4] sm:$0xff]
  %v3647 = vld [vmem:[%s4 + $0x2cc] sm:$0xf]
  %v3648 = vld [vmem:[%s4 + $0x2d0] sm:$0xff]
  %v3649 = vld [vmem:[%s4 + $0x2d8] sm:$0xf]
  %v3650 = vld [vmem:[%s4 + $0x2dc] sm:$0xff]
  %v3651 = vld [vmem:[%s4 + $0x2e4] sm:$0xf]
  %v3652 = vld [vmem:[%s4 + $0x2e8] sm:$0xff]
  %v3653 = vld [vmem:[%s4 + $0x2f0] sm:$0xf]
  %v3654 = vld [vmem:[%s4 + $0x2f4] sm:$0xff]
  %v3655 = vld [vmem:[%s4 + $0x2fc] sm:$0xf]
  %v3656 = vld [vmem:[%s4 + $0x300] sm:$0xff]
  %v3657 = vld [vmem:[%s4 + $0x308] sm:$0xf]
  %v3658 = vld [vmem:[%s4 + $0x30c] sm:$0xff]
  %v3659 = vld [vmem:[%s4 + $0x314] sm:$0xf]
  %v3660 = vld [vmem:[%s4 + $0x318] sm:$0xff]
  %v3661 = vld [vmem:[%s4 + $0x320] sm:$0xf]
  %v3662 = vld [vmem:[%s4 + $0x324] sm:$0xff]
  %v3663 = vld [vmem:[%s4 + $0x32c] sm:$0xf]
  %v3664 = vld [vmem:[%s4 + $0x330] sm:$0xff]
  %v3665 = vld [vmem:[%s4 + $0x338] sm:$0xf]
  %v3666 = vld [vmem:[%s4 + $0x33c] sm:$0xff]
  %v3667 = vld [vmem:[%s4 + $0x344] sm:$0xf]
  %v3668 = vld [vmem:[%s4 + $0x348] sm:$0xff]
  %v3669 = vld [vmem:[%s4 + $0x350] sm:$0xf]
  %v3670 = vld [vmem:[%s4 + $0x354] sm:$0xff]
  %v3671 = vld [vmem:[%s4 + $0x35c] sm:$0xf]
  %v3672 = vld [vmem:[%s4 + $0x360] sm:$0xff]
  %v3673 = vld [vmem:[%s4 + $0x368] sm:$0xf]
  %v3674 = vld [vmem:[%s4 + $0x36c] sm:$0xff]
  %v3675 = vld [vmem:[%s4 + $0x374] sm:$0xf]
  %v3676 = vld [vmem:[%s4 + $0x378] sm:$0xff]
  %v3677 = vld [vmem:[%s4 + $0x380] sm:$0xf]
  %v3678 = vld [vmem:[%s4 + $0x384] sm:$0xff]
  %v3679 = vld [vmem:[%s4 + $0x38c] sm:$0xf]
  %v3680 = vld [vmem:[%s4 + $0x390] sm:$0xff]
  %v3681 = vld [vmem:[%s4 + $0x398] sm:$0xf]
  %v3682 = vld [vmem:[%s4 + $0x39c] sm:$0xff]
  %v3683 = vld [vmem:[%s4 + $0x3a4] sm:$0xf]
  %v3684 = vld [vmem:[%s4 + $0x3a8] sm:$0xff]
  %v3685 = vld [vmem:[%s4 + $0x3b0] sm:$0xf]
  %v3686 = vld [vmem:[%s4 + $0x3b4] sm:$0xff]
  %v3687 = vld [vmem:[%s4 + $0x3bc] sm:$0xf]
  %v3688 = vld [vmem:[%s4 + $0x3c0] sm:$0xff]
  %v3689 = vld [vmem:[%s4 + $0x3c8] sm:$0xf]
  %v3690 = vld [vmem:[%s4 + $0x3cc] sm:$0xff]
  %v3691 = vld [vmem:[%s4 + $0x3d4] sm:$0xf]
  %v3692 = vld [vmem:[%s4 + $0x3d8] sm:$0xff]
  %v3693 = vld [vmem:[%s4 + $0x3e0] sm:$0xf]
  %v3694 = vld [vmem:[%s4 + $0x3e4] sm:$0xff]
  %v3695 = vld [vmem:[%s4 + $0x3ec] sm:$0xf]
  %v3696 = vld [vmem:[%s2] sm:$0xff]
  %v3697 = vld [vmem:[%s2 + $0x8] sm:$0xf]
  %v3698 = vld [vmem:[%s2 + $0xc] sm:$0xff]
  %v3699 = vld [vmem:[%s2 + $0x14] sm:$0xf]
  %v3700 = vld [vmem:[%s2 + $0x18] sm:$0xff]
  %v3701 = vld [vmem:[%s2 + $0x20] sm:$0xf]
  %v3702 = vld [vmem:[%s2 + $0x24] sm:$0xff]
  %v3703 = vld [vmem:[%s2 + $0x2c] sm:$0xf]
  %v3704 = vld [vmem:[%s2 + $0x30] sm:$0xff]
  %v3705 = vld [vmem:[%s2 + $0x38] sm:$0xf]
  %v3706 = vld [vmem:[%s2 + $0x3c] sm:$0xff]
  %v3707 = vld [vmem:[%s2 + $0x44] sm:$0xf]
  %v3708 = vld [vmem:[%s2 + $0x48] sm:$0xff]
  %v3709 = vld [vmem:[%s2 + $0x50] sm:$0xf]
  %v3710 = vld [vmem:[%s2 + $0x54] sm:$0xff]
  %v3711 = vld [vmem:[%s2 + $0x5c] sm:$0xf]
  %v3728 = vunpack.c.l.b16 %v3696
  %v3729 = vunpack.c.h.b16 %v3696
  %v3730 = vunpack.c.l.b16 %v3697
  %v3731 = vunpack.c.l.b16 %v3698
  %v3732 = vunpack.c.h.b16 %v3698
  %v3733 = vunpack.c.l.b16 %v3699
  %v3734 = vunpack.c.l.b16 %v3700
  %v3735 = vunpack.c.h.b16 %v3700
  %v3736 = vunpack.c.l.b16 %v3701
  %v3737 = vunpack.c.l.b16 %v3702
  %v3738 = vunpack.c.h.b16 %v3702
  %v3739 = vunpack.c.l.b16 %v3703
  %v3740 = vunpack.c.l.b16 %v3704
  %v3741 = vunpack.c.h.b16 %v3704
  %v3742 = vunpack.c.l.b16 %v3705
  %v3743 = vunpack.c.l.b16 %v3706
  %v3744 = vunpack.c.h.b16 %v3706
  %v3745 = vunpack.c.l.b16 %v3707
  %v3746 = vunpack.c.l.b16 %v3708
  %v3747 = vunpack.c.h.b16 %v3708
  %v3748 = vunpack.c.l.b16 %v3709
  %v3749 = vunpack.c.l.b16 %v3710
  %v3750 = vunpack.c.h.b16 %v3710
  %v3751 = vunpack.c.l.b16 %v3711
  %v3752 = vpack.c.b16 %v3731, %v3728
  %v3753 = vpack.c.b16 %v3732, %v3729
  %v3754 = vpack.c.b16 %v3733, %v3730
  %v3755 = vpack.c.b16 %v3737, %v3734
  %v3756 = vpack.c.b16 %v3738, %v3735
  %v3757 = vpack.c.b16 %v3739, %v3736
  %v3758 = vpack.c.b16 %v3743, %v3740
  %v3759 = vpack.c.b16 %v3744, %v3741
  %v3760 = vpack.c.b16 %v3745, %v3742
  %v3761 = vpack.c.b16 %v3749, %v3746
  %v3762 = vpack.c.b16 %v3750, %v3747
  %v3763 = vpack.c.b16 %v3751, %v3748
  %v3852 = vunpack.c.l.b16 %v3616
  %v3853 = vunpack.c.h.b16 %v3616
  %v3854 = vunpack.c.l.b16 %v3617
  %v3855 = vunpack.c.l.b16 %v3618
  %v3856 = vunpack.c.h.b16 %v3618
  %v3857 = vunpack.c.l.b16 %v3619
  %v3858 = vunpack.c.l.b16 %v3620
  %v3859 = vunpack.c.h.b16 %v3620
  %v3860 = vunpack.c.l.b16 %v3621
  %v3861 = vunpack.c.l.b16 %v3622
  %v3862 = vunpack.c.h.b16 %v3622
  %v3863 = vunpack.c.l.b16 %v3623
  %v3864 = vunpack.c.l.b16 %v3624
  %v3865 = vunpack.c.h.b16 %v3624
  %v3866 = vunpack.c.l.b16 %v3625
  %v3867 = vunpack.c.l.b16 %v3626
  %v3868 = vunpack.c.h.b16 %v3626
  %v3869 = vunpack.c.l.b16 %v3627
  %v3870 = vunpack.c.l.b16 %v3628
  %v3871 = vunpack.c.h.b16 %v3628
  %v3872 = vunpack.c.l.b16 %v3629
  %v3873 = vunpack.c.l.b16 %v3630
  %v3874 = vunpack.c.h.b16 %v3630
  %v3875 = vunpack.c.l.b16 %v3631
  %v3876 = vunpack.c.l.b16 %v3632
  %v3877 = vunpack.c.h.b16 %v3632
  %v3878 = vunpack.c.l.b16 %v3633
  %v3879 = vunpack.c.l.b16 %v3634
  %v3880 = vunpack.c.h.b16 %v3634
  %v3881 = vunpack.c.l.b16 %v3635
  %v3882 = vunpack.c.l.b16 %v3636
  %v3883 = vunpack.c.h.b16 %v3636
  %v3884 = vunpack.c.l.b16 %v3637
  %v3885 = vunpack.c.l.b16 %v3638
  %v3886 = vunpack.c.h.b16 %v3638
  %v3887 = vunpack.c.l.b16 %v3639
  %v3888 = vunpack.c.l.b16 %v3640
  %v3889 = vunpack.c.h.b16 %v3640
  %v3890 = vunpack.c.l.b16 %v3641
  %v3891 = vunpack.c.l.b16 %v3642
  %v3892 = vunpack.c.h.b16 %v3642
  %v3893 = vunpack.c.l.b16 %v3643
  %v3894 = vunpack.c.l.b16 %v3644
  %v3895 = vunpack.c.h.b16 %v3644
  %v3896 = vunpack.c.l.b16 %v3645
  %v3897 = vunpack.c.l.b16 %v3646
  %v3898 = vunpack.c.h.b16 %v3646
  %v3899 = vunpack.c.l.b16 %v3647
  %v3900 = vunpack.c.l.b16 %v3648
  %v3901 = vunpack.c.h.b16 %v3648
  %v3902 = vunpack.c.l.b16 %v3649
  %v3903 = vunpack.c.l.b16 %v3650
  %v3904 = vunpack.c.h.b16 %v3650
  %v3905 = vunpack.c.l.b16 %v3651
  %v3906 = vunpack.c.l.b16 %v3652
  %v3907 = vunpack.c.h.b16 %v3652
  %v3908 = vunpack.c.l.b16 %v3653
  %v3909 = vunpack.c.l.b16 %v3654
  %v3910 = vunpack.c.h.b16 %v3654
  %v3911 = vunpack.c.l.b16 %v3655
  %v3912 = vunpack.c.l.b16 %v3656
  %v3913 = vunpack.c.h.b16 %v3656
  %v3914 = vunpack.c.l.b16 %v3657
  %v3915 = vunpack.c.l.b16 %v3658
  %v3916 = vunpack.c.h.b16 %v3658
  %v3917 = vunpack.c.l.b16 %v3659
  %v3918 = vunpack.c.l.b16 %v3660
  %v3919 = vunpack.c.h.b16 %v3660
  %v3920 = vunpack.c.l.b16 %v3661
  %v3921 = vunpack.c.l.b16 %v3662
  %v3922 = vunpack.c.h.b16 %v3662
  %v3923 = vunpack.c.l.b16 %v3663
  %v3924 = vunpack.c.l.b16 %v3664
  %v3925 = vunpack.c.h.b16 %v3664
  %v3926 = vunpack.c.l.b16 %v3665
  %v3927 = vunpack.c.l.b16 %v3666
  %v3928 = vunpack.c.h.b16 %v3666
  %v3929 = vunpack.c.l.b16 %v3667
  %v3930 = vunpack.c.l.b16 %v3668
  %v3931 = vunpack.c.h.b16 %v3668
  %v3932 = vunpack.c.l.b16 %v3669
  %v3933 = vunpack.c.l.b16 %v3670
  %v3934 = vunpack.c.h.b16 %v3670
  %v3935 = vunpack.c.l.b16 %v3671
  %v3936 = vunpack.c.l.b16 %v3672
  %v3937 = vunpack.c.h.b16 %v3672
  %v3938 = vunpack.c.l.b16 %v3673
  %v3939 = vunpack.c.l.b16 %v3674
  %v3940 = vunpack.c.h.b16 %v3674
  %v3941 = vunpack.c.l.b16 %v3675
  %v3942 = vunpack.c.l.b16 %v3676
  %v3943 = vunpack.c.h.b16 %v3676
  %v3944 = vunpack.c.l.b16 %v3677
  %v3945 = vunpack.c.l.b16 %v3678
  %v3946 = vunpack.c.h.b16 %v3678
  %v3947 = vunpack.c.l.b16 %v3679
  %v3948 = vunpack.c.l.b16 %v3680
  %v3949 = vunpack.c.h.b16 %v3680
  %v3950 = vunpack.c.l.b16 %v3681
  %v3951 = vunpack.c.l.b16 %v3682
  %v3952 = vunpack.c.h.b16 %v3682
  %v3953 = vunpack.c.l.b16 %v3683
  %v3954 = vunpack.c.l.b16 %v3684
  %v3955 = vunpack.c.h.b16 %v3684
  %v3956 = vunpack.c.l.b16 %v3685
  %v3957 = vunpack.c.l.b16 %v3686
  %v3958 = vunpack.c.h.b16 %v3686
  %v3959 = vunpack.c.l.b16 %v3687
  %v3960 = vunpack.c.l.b16 %v3688
  %v3961 = vunpack.c.h.b16 %v3688
  %v3962 = vunpack.c.l.b16 %v3689
  %v3963 = vunpack.c.l.b16 %v3690
  %v3964 = vunpack.c.h.b16 %v3690
  %v3965 = vunpack.c.l.b16 %v3691
  %v3966 = vunpack.c.l.b16 %v3692
  %v3967 = vunpack.c.h.b16 %v3692
  %v3968 = vunpack.c.l.b16 %v3693
  %v3969 = vunpack.c.l.b16 %v3694
  %v3970 = vunpack.c.h.b16 %v3694
  %v3971 = vunpack.c.l.b16 %v3695
  %v3972 = vpack.c.b16 %v3855, %v3852
  %v3973 = vpack.c.b16 %v3856, %v3853
  %v3974 = vpack.c.b16 %v3857, %v3854
  %v3975 = vpack.c.b16 %v3861, %v3858
  %v3976 = vpack.c.b16 %v3862, %v3859
  %v3977 = vpack.c.b16 %v3863, %v3860
  %v3978 = vpack.c.b16 %v3867, %v3864
  %v3979 = vpack.c.b16 %v3868, %v3865
  %v3980 = vpack.c.b16 %v3869, %v3866
  %v3981 = vpack.c.b16 %v3873, %v3870
  %v3982 = vpack.c.b16 %v3874, %v3871
  %v3983 = vpack.c.b16 %v3875, %v3872
  %v3984 = vpack.c.b16 %v3879, %v3876
  %v3985 = vpack.c.b16 %v3880, %v3877
  %v3986 = vpack.c.b16 %v3881, %v3878
  %v3987 = vpack.c.b16 %v3885, %v3882
  %v3988 = vpack.c.b16 %v3886, %v3883
  %v3989 = vpack.c.b16 %v3887, %v3884
  %v3990 = vpack.c.b16 %v3891, %v3888
  %v3991 = vpack.c.b16 %v3892, %v3889
  %v3992 = vpack.c.b16 %v3893, %v3890
  %v3993 = vpack.c.b16 %v3897, %v3894
  %v3994 = vpack.c.b16 %v3898, %v3895
  %v3995 = vpack.c.b16 %v3899, %v3896
  %v3996 = vpack.c.b16 %v3903, %v3900
  %v3997 = vpack.c.b16 %v3904, %v3901
  %v3998 = vpack.c.b16 %v3905, %v3902
  %v3999 = vpack.c.b16 %v3909, %v3906
  %v4000 = vpack.c.b16 %v3910, %v3907
  %v4001 = vpack.c.b16 %v3911, %v3908
  %v4002 = vpack.c.b16 %v3915, %v3912
  %v4003 = vpack.c.b16 %v3916, %v3913
  %v4004 = vpack.c.b16 %v3917, %v3914
  %v4005 = vpack.c.b16 %v3921, %v3918
  %v4006 = vpack.c.b16 %v3922, %v3919
  %v4007 = vpack.c.b16 %v3923, %v3920
  %v4008 = vpack.c.b16 %v3927, %v3924
  %v4009 = vpack.c.b16 %v3928, %v3925
  %v4010 = vpack.c.b16 %v3929, %v3926
  %v4011 = vpack.c.b16 %v3933, %v3930
  %v4012 = vpack.c.b16 %v3934, %v3931
  %v4013 = vpack.c.b16 %v3935, %v3932
  %v4014 = vpack.c.b16 %v3939, %v3936
  %v4015 = vpack.c.b16 %v3940, %v3937
  %v4016 = vpack.c.b16 %v3941, %v3938
  %v4017 = vpack.c.b16 %v3945, %v3942
  %v4018 = vpack.c.b16 %v3946, %v3943
  %v4019 = vpack.c.b16 %v3947, %v3944
  %v4020 = vpack.c.b16 %v3951, %v3948
  %v4021 = vpack.c.b16 %v3952, %v3949
  %v4022 = vpack.c.b16 %v3953, %v3950
  %v4023 = vpack.c.b16 %v3957, %v3954
  %v4024 = vpack.c.b16 %v3958, %v3955
  %v4025 = vpack.c.b16 %v3959, %v3956
  %v4026 = vpack.c.b16 %v3963, %v3960
  %v4027 = vpack.c.b16 %v3964, %v3961
  %v4028 = vpack.c.b16 %v3965, %v3962
  %v4029 = vpack.c.b16 %v3969, %v3966
  %v4030 = vpack.c.b16 %v3970, %v3967
  %v4031 = vpack.c.b16 %v3971, %v3968
  %v4093 = vsel %vm362, %v3754, 0
  %v4096 = vsel %vm362, %v3757, 0
  %v4099 = vsel %vm362, %v3760, 0
  %v4102 = vsel %vm362, %v3763, 0
  %4104 = vmatprep.subr.bf16.mxu0 %v3973
  %4105 = vmatpush1.bf16.msra.mxu0 %v3972
  %4106 = vmatprep.subr.bf16.mxu0 %v3976
  %4107 = vmatpush1.bf16.msra.mxu0 %v3975
  %4108 = vmatprep.subr.bf16.mxu0 %v3979
  %4109 = vmatpush1.bf16.msra.mxu0 %v3978
  %4110 = vmatprep.subr.bf16.mxu0 %v3982
  %4111 = vmatpush1.bf16.msra.mxu0 %v3981
  %4112 = vmatprep.subr.bf16.mxu0 %v3985
  %4113 = vmatpush1.bf16.msra.mxu0 %v3984
  %4114 = vmatprep.subr.bf16.mxu0 %v3988
  %4115 = vmatpush1.bf16.msra.mxu0 %v3987
  %4116 = vmatprep.subr.bf16.mxu0 %v3991
  %4117 = vmatpush1.bf16.msra.mxu0 %v3990
  %4118 = vmatprep.subr.bf16.mxu0 %v3994
  %4119 = vmatpush1.bf16.msra.mxu0 %v3993
  %4120 = vmatprep.subr.bf16.mxu0 %v3997
  %4121 = vmatpush1.bf16.msra.mxu0 %v3996
  %4122 = vmatprep.subr.bf16.mxu0 %v4000
  %4123 = vmatpush1.bf16.msra.mxu0 %v3999
  %4124 = vmatprep.subr.bf16.mxu0 %v4003
  %4125 = vmatpush1.bf16.msra.mxu0 %v4002
  %4126 = vmatprep.subr.bf16.mxu0 %v4006
  %4127 = vmatpush1.bf16.msra.mxu0 %v4005
  %4128 = vmatprep.subr.bf16.mxu0 %v4009
  %4129 = vmatpush1.bf16.msra.mxu0 %v4008
  %4130 = vmatprep.subr.bf16.mxu0 %v4012
  %4131 = vmatpush1.bf16.msra.mxu0 %v4011
  %4132 = vmatprep.subr.bf16.mxu0 %v4015
  %4133 = vmatpush1.bf16.msra.mxu0 %v4014
  %4134 = vmatprep.subr.bf16.mxu0 %v4018
  %4135 = vmatpush1.bf16.msra.mxu0 %v4017
  %4136 = vmatprep.mubr.bf16.mxu0 %v3753
  %4137 = vmatmul.mubr.bf16.gmra.mrb[0].mxu0 %v3752
  %v4138 = vpop.f32.mrb[0].mxu0
  %v4139 = vadd.f32 0.0, %v4138
  %v4140 = vpop.f32.mrb[0].mxu0
  %v4141 = vadd.f32 0.0, %v4140
  %v4142 = vpop.f32.mrb[0].mxu0
  %v4143 = vadd.f32 0.0, %v4142
  %v4144 = vpop.f32.mrb[0].mxu0
  %v4145 = vadd.f32 0.0, %v4144
  %4146 = vmatprep.mubr.bf16.mxu0 %v3756
  %4147 = vmatmul.mubr.bf16.gmra.mrb[0].mxu0 %v3755
  %v4148 = vpop.f32.mrb[0].mxu0
  %v4149 = vadd.f32 0.0, %v4148
  %v4150 = vpop.f32.mrb[0].mxu0
  %v4151 = vadd.f32 0.0, %v4150
  %v4152 = vpop.f32.mrb[0].mxu0
  %v4153 = vadd.f32 0.0, %v4152
  %v4154 = vpop.f32.mrb[0].mxu0
  %v4155 = vadd.f32 0.0, %v4154
  %4156 = vmatprep.mubr.bf16.mxu0 %v3759
  %4157 = vmatmul.mubr.bf16.gmra.mrb[0].mxu0 %v3758
  %v4158 = vpop.f32.mrb[0].mxu0
  %v4159 = vadd.f32 0.0, %v4158
  %v4160 = vpop.f32.mrb[0].mxu0
  %v4161 = vadd.f32 0.0, %v4160
  %v4162 = vpop.f32.mrb[0].mxu0
  %v4163 = vadd.f32 0.0, %v4162
  %v4164 = vpop.f32.mrb[0].mxu0
  %v4165 = vadd.f32 0.0, %v4164
  %4166 = vmatprep.mubr.bf16.mxu0 %v3762
  %4167 = vmatmul.mubr.bf16.gmra.mrb[0].mxu0 %v3761
  %v4168 = vpop.f32.mrb[0].mxu0
  %v4169 = vadd.f32 0.0, %v4168
  %v4170 = vpop.f32.mrb[0].mxu0
  %v4171 = vadd.f32 0.0, %v4170
  %v4172 = vpop.f32.mrb[0].mxu0
  %v4173 = vadd.f32 0.0, %v4172
  %v4174 = vpop.f32.mrb[0].mxu0
  %v4175 = vadd.f32 0.0, %v4174
  %4176 = vdwg.mxu0
  %4177 = vmatprep.subr.bf16.mxu0 %v4021
  %4178 = vmatpush1.bf16.msra.mxu0 %v4020
  %4179 = vmatprep.subr.bf16.mxu0 %v4024
  %4180 = vmatpush1.bf16.msra.mxu0 %v4023
  %4181 = vmatprep.subr.bf16.mxu0 %v4027
  %4182 = vmatpush1.bf16.msra.mxu0 %v4026
  %4183 = vmatprep.subr.bf16.mxu0 %v4030
  %4184 = vmatpush1.bf16.msra.mxu0 %v4029
  %4185 = vmatprep.subr.bf16.mxu0 0
  %4186 = vmatpush1.bf16.msra.mxu0 0
  %4187 = vmatprep.subr.bf16.mxu0 0
  %4188 = vmatpush1.bf16.msra.mxu0 0
  %4189 = vmatprep.subr.bf16.mxu0 0
  %4190 = vmatpush1.bf16.msra.mxu0 0
  %4191 = vmatprep.subr.bf16.mxu0 0
  %4192 = vmatpush1.bf16.msra.mxu0 0
  %4193 = vmatprep.subr.bf16.mxu0 0
  %4194 = vmatpush1.bf16.msra.mxu0 0
  %4195 = vmatprep.subr.bf16.mxu0 0
  %4196 = vmatpush1.bf16.msra.mxu0 0
  %4197 = vmatprep.subr.bf16.mxu0 0
  %4198 = vmatpush1.bf16.msra.mxu0 0
  %4199 = vmatprep.subr.bf16.mxu0 0
  %4200 = vmatpush1.bf16.msra.mxu0 0
  %4201 = vmatprep.subr.bf16.mxu0 0
  %4202 = vmatpush1.bf16.msra.mxu0 0
  %4203 = vmatprep.subr.bf16.mxu0 0
  %4204 = vmatpush1.bf16.msra.mxu0 0
  %4205 = vmatprep.subr.bf16.mxu0 0
  %4206 = vmatpush1.bf16.msra.mxu0 0
  %4207 = vmatprep.subr.bf16.mxu0 0
  %4208 = vmatpush1.bf16.msra.mxu0 0
  %4209 = vmatprep.mubr.bf16.mxu0 0
  %4210 = vmatmul.mubr.bf16.gmra.mrb[0].mxu0 %v4093
  %v4211 = vpop.f32.mrb[0].mxu0
  %v4212 = vadd.f32 %v4139, %v4211
  %v4213 = vpop.f32.mrb[0].mxu0
  %v4214 = vadd.f32 %v4141, %v4213
  %v4215 = vpop.f32.mrb[0].mxu0
  %v4216 = vadd.f32 %v4143, %v4215
  %v4217 = vpop.f32.mrb[0].mxu0
  %v4218 = vadd.f32 %v4145, %v4217
  %4219 = vmatprep.mubr.bf16.mxu0 0
  %4220 = vmatmul.mubr.bf16.gmra.mrb[0].mxu0 %v4096
  %v4221 = vpop.f32.mrb[0].mxu0
  %v4222 = vadd.f32 %v4149, %v4221
  %v4223 = vpop.f32.mrb[0].mxu0
  %v4224 = vadd.f32 %v4151, %v4223
  %v4225 = vpop.f32.mrb[0].mxu0
  %v4226 = vadd.f32 %v4153, %v4225
  %v4227 = vpop.f32.mrb[0].mxu0
  %v4228 = vadd.f32 %v4155, %v4227
  %4229 = vmatprep.mubr.bf16.mxu0 0
  %4230 = vmatmul.mubr.bf16.gmra.mrb[0].mxu0 %v4099
  %v4231 = vpop.f32.mrb[0].mxu0
  %v4232 = vadd.f32 %v4159, %v4231
  %v4233 = vpop.f32.mrb[0].mxu0
  %v4234 = vadd.f32 %v4161, %v4233
  %v4235 = vpop.f32.mrb[0].mxu0
  %v4236 = vadd.f32 %v4163, %v4235
  %v4237 = vpop.f32.mrb[0].mxu0
  %v4238 = vadd.f32 %v4165, %v4237
  %4239 = vmatprep.mubr.bf16.mxu0 0
  %4240 = vmatmul.mubr.bf16.gmra.mrb[0].mxu0 %v4102
  %v4241 = vpop.f32.mrb[0].mxu0
  %v4242 = vadd.f32 %v4169, %v4241
  %v4243 = vpop.f32.mrb[0].mxu0
  %v4244 = vadd.f32 %v4171, %v4243
  %v4245 = vpop.f32.mrb[0].mxu0
  %v4246 = vadd.f32 %v4173, %v4245
  %v4247 = vpop.f32.mrb[0].mxu0
  %v4248 = vadd.f32 %v4175, %v4247
  %4249 = vdwg.mxu0
  %4250 = vmatprep.subr.bf16.mxu0 0
  %4251 = vmatpush1.bf16.msra.mxu0 %v3974
  %4252 = vmatprep.subr.bf16.mxu0 0
  %4253 = vmatpush1.bf16.msra.mxu0 %v3977
  %4254 = vmatprep.subr.bf16.mxu0 0
  %4255 = vmatpush1.bf16.msra.mxu0 %v3980
  %4256 = vmatprep.subr.bf16.mxu0 0
  %4257 = vmatpush1.bf16.msra.mxu0 %v3983
  %4258 = vmatprep.subr.bf16.mxu0 0
  %4259 = vmatpush1.bf16.msra.mxu0 %v3986
  %4260 = vmatprep.subr.bf16.mxu0 0
  %4261 = vmatpush1.bf16.msra.mxu0 %v3989
  %4262 = vmatprep.subr.bf16.mxu0 0
  %4263 = vmatpush1.bf16.msra.mxu0 %v3992
  %4264 = vmatprep.subr.bf16.mxu0 0
  %4265 = vmatpush1.bf16.msra.mxu0 %v3995
  %4266 = vmatprep.subr.bf16.mxu0 0
  %4267 = vmatpush1.bf16.msra.mxu0 %v3998
  %4268 = vmatprep.subr.bf16.mxu0 0
  %4269 = vmatpush1.bf16.msra.mxu0 %v4001
  %4270 = vmatprep.subr.bf16.mxu0 0
  %4271 = vmatpush1.bf16.msra.mxu0 %v4004
  %4272 = vmatprep.subr.bf16.mxu0 0
  %4273 = vmatpush1.bf16.msra.mxu0 %v4007
  %4274 = vmatprep.subr.bf16.mxu0 0
  %4275 = vmatpush1.bf16.msra.mxu0 %v4010
  %4276 = vmatprep.subr.bf16.mxu0 0
  %4277 = vmatpush1.bf16.msra.mxu0 %v4013
  %4278 = vmatprep.subr.bf16.mxu0 0
  %4279 = vmatpush1.bf16.msra.mxu0 %v4016
  %4280 = vmatprep.subr.bf16.mxu0 0
  %4281 = vmatpush1.bf16.msra.mxu0 %v4019
  %4282 = vmatprep.mubr.bf16.mxu0 %v3753
  %4283 = vmatmul.mubr.bf16.gmra.mrb[0].mxu0 %v3752
  %v4284 = vpop.f32.mrb[0].mxu0
  %v4285 = vadd.f32 0.0, %v4284
  %v4286 = vpop.f32.mrb[0].mxu0
  %v4287 = vpop.f32.mrb[0].mxu0
  %v4288 = vadd.f32 0.0, %v4287
  %v4289 = vpop.f32.mrb[0].mxu0
  %4290 = vmatprep.mubr.bf16.mxu0 %v3756
  %4291 = vmatmul.mubr.bf16.gmra.mrb[0].mxu0 %v3755
  %v4292 = vpop.f32.mrb[0].mxu0
  %v4293 = vadd.f32 0.0, %v4292
  %v4294 = vpop.f32.mrb[0].mxu0
  %v4295 = vpop.f32.mrb[0].mxu0
  %v4296 = vadd.f32 0.0, %v4295
  %v4297 = vpop.f32.mrb[0].mxu0
  %4298 = vmatprep.mubr.bf16.mxu0 %v3759
  %4299 = vmatmul.mubr.bf16.gmra.mrb[0].mxu0 %v3758
  %v4300 = vpop.f32.mrb[0].mxu0
  %v4301 = vadd.f32 0.0, %v4300
  %v4302 = vpop.f32.mrb[0].mxu0
  %v4303 = vpop.f32.mrb[0].mxu0
  %v4304 = vadd.f32 0.0, %v4303
  %v4305 = vpop.f32.mrb[0].mxu0
  %4306 = vmatprep.mubr.bf16.mxu0 %v3762
  %4307 = vmatmul.mubr.bf16.gmra.mrb[0].mxu0 %v3761
  %v4308 = vpop.f32.mrb[0].mxu0
  %v4309 = vadd.f32 0.0, %v4308
  %v4310 = vpop.f32.mrb[0].mxu0
  %v4311 = vpop.f32.mrb[0].mxu0
  %v4312 = vadd.f32 0.0, %v4311
  %v4313 = vpop.f32.mrb[0].mxu0
  %4314 = vdwg.mxu0
  %4315 = vmatprep.subr.bf16.mxu0 0
  %4316 = vmatpush1.bf16.msra.mxu0 %v4022
  %4317 = vmatprep.subr.bf16.mxu0 0
  %4318 = vmatpush1.bf16.msra.mxu0 %v4025
  %4319 = vmatprep.subr.bf16.mxu0 0
  %4320 = vmatpush1.bf16.msra.mxu0 %v4028
  %4321 = vmatprep.subr.bf16.mxu0 0
  %4322 = vmatpush1.bf16.msra.mxu0 %v4031
  %4323 = vmatprep.subr.bf16.mxu0 0
  %4324 = vmatpush1.bf16.msra.mxu0 0
  %4325 = vmatprep.subr.bf16.mxu0 0
  %4326 = vmatpush1.bf16.msra.mxu0 0
  %4327 = vmatprep.subr.bf16.mxu0 0
  %4328 = vmatpush1.bf16.msra.mxu0 0
  %4329 = vmatprep.subr.bf16.mxu0 0
  %4330 = vmatpush1.bf16.msra.mxu0 0
  %4331 = vmatprep.subr.bf16.mxu0 0
  %4332 = vmatpush1.bf16.msra.mxu0 0
  %4333 = vmatprep.subr.bf16.mxu0 0
  %4334 = vmatpush1.bf16.msra.mxu0 0
  %4335 = vmatprep.subr.bf16.mxu0 0
  %4336 = vmatpush1.bf16.msra.mxu0 0
  %4337 = vmatprep.subr.bf16.mxu0 0
  %4338 = vmatpush1.bf16.msra.mxu0 0
  %4339 = vmatprep.subr.bf16.mxu0 0
  %4340 = vmatpush1.bf16.msra.mxu0 0
  %4341 = vmatprep.subr.bf16.mxu0 0
  %4342 = vmatpush1.bf16.msra.mxu0 0
  %4343 = vmatprep.subr.bf16.mxu0 0
  %4344 = vmatpush1.bf16.msra.mxu0 0
  %4345 = vmatprep.subr.bf16.mxu0 0
  %4346 = vmatpush1.bf16.msra.mxu0 0
  %4347 = vmatprep.mubr.bf16.mxu0 0
  %4348 = vmatmul.mubr.bf16.gmra.mrb[0].mxu0 %v4093
  %v4349 = vpop.f32.mrb[0].mxu0
  %v4350 = vadd.f32 %v4285, %v4349
  %v4351 = vpop.f32.mrb[0].mxu0
  %v4352 = vpop.f32.mrb[0].mxu0
  %v4353 = vadd.f32 %v4288, %v4352
  %v4354 = vpop.f32.mrb[0].mxu0
  %4355 = vmatprep.mubr.bf16.mxu0 0
  %4356 = vmatmul.mubr.bf16.gmra.mrb[0].mxu0 %v4096
  %v4357 = vpop.f32.mrb[0].mxu0
  %v4358 = vadd.f32 %v4293, %v4357
  %v4359 = vpop.f32.mrb[0].mxu0
  %v4360 = vpop.f32.mrb[0].mxu0
  %v4361 = vadd.f32 %v4296, %v4360
  %v4362 = vpop.f32.mrb[0].mxu0
  %4363 = vmatprep.mubr.bf16.mxu0 0
  %4364 = vmatmul.mubr.bf16.gmra.mrb[0].mxu0 %v4099
  %v4365 = vpop.f32.mrb[0].mxu0
  %v4366 = vadd.f32 %v4301, %v4365
  %v4367 = vpop.f32.mrb[0].mxu0
  %v4368 = vpop.f32.mrb[0].mxu0
  %v4369 = vadd.f32 %v4304, %v4368
  %v4370 = vpop.f32.mrb[0].mxu0
  %4371 = vmatprep.mubr.bf16.mxu0 0
  %4372 = vmatmul.mubr.bf16.gmra.mrb[0].mxu0 %v4102
  %v4373 = vpop.f32.mrb[0].mxu0
  %v4374 = vadd.f32 %v4309, %v4373
  %v4375 = vpop.f32.mrb[0].mxu0
  %v4376 = vpop.f32.mrb[0].mxu0
  %v4377 = vadd.f32 %v4312, %v4376
  %v4378 = vpop.f32.mrb[0].mxu0
  %4379 = vdwg.mxu0
  %vm4380 = vcmp.lt.s32.totalorder %v451, 7
  %vm4381 = vcmp.lt.s32.totalorder %v622, 7
  %v4382 = vsel %vm4380, 0.0, -1e+30
  %v4383 = vsel %vm4381, 0.0, -1e+30
  %v4384 = vadd.f32 %v4212, %v4382
  %v4385 = vadd.f32 %v4214, %v4382
  %v4386 = vadd.f32 %v4350, %v4382
  %v4387 = vadd.f32 %v4216, %v4383
  %v4388 = vadd.f32 %v4218, %v4383
  %v4389 = vadd.f32 %v4353, %v4383
  %v4390 = vadd.f32 %v4222, %v4382
  %v4391 = vadd.f32 %v4224, %v4382
  %v4392 = vadd.f32 %v4358, %v4382
  %v4393 = vadd.f32 %v4226, %v4383
  %v4394 = vadd.f32 %v4228, %v4383
  %v4395 = vadd.f32 %v4361, %v4383
  %v4396 = vadd.f32 %v4232, %v4382
  %v4397 = vadd.f32 %v4234, %v4382
  %v4398 = vadd.f32 %v4366, %v4382
  %v4399 = vadd.f32 %v4236, %v4383
  %v4400 = vadd.f32 %v4238, %v4383
  %v4401 = vadd.f32 %v4369, %v4383
  %v4402 = vadd.f32 %v4242, %v4382
  %v4403 = vadd.f32 %v4244, %v4382
  %v4404 = vadd.f32 %v4374, %v4382
  %v4405 = vadd.f32 %v4246, %v4383
  %v4406 = vadd.f32 %v4248, %v4383
  %v4407 = vadd.f32 %v4377, %v4383
  %v4408 = vmax.f32 %v4384, %v4387
  %v4409 = vrot.slane %v4408, 4
  %v4410 = vmax.f32 %v4408, %v4409
  %v4411 = vrot.slane %v4410, 2
  %v4412 = vmax.f32 %v4410, %v4411
  %v4413 = vrot.slane %v4412, 1
  %v4414 = vmax.f32 %v4412, %v4413
  %v4415 = vmax.f32 %v4385, %v4388
  %v4416 = vrot.slane %v4415, 4
  %v4417 = vmax.f32 %v4415, %v4416
  %v4418 = vrot.slane %v4417, 2
  %v4419 = vmax.f32 %v4417, %v4418
  %v4420 = vrot.slane %v4419, 1
  %v4421 = vmax.f32 %v4419, %v4420
  %v4422 = vsel %vm362, %v4386, -inf
  %v4423 = vsel %vm362, %v4389, -inf
  %v4424 = vmax.f32 %v4422, %v4423
  %v4425 = vrot.slane %v4424, 4
  %v4426 = vmax.f32 %v4424, %v4425
  %v4427 = vrot.slane %v4426, 2
  %v4428 = vmax.f32 %v4426, %v4427
  %v4429 = vrot.slane %v4428, 1
  %v4430 = vmax.f32 %v4428, %v4429
  %v4431 = vmax.f32 %v4390, %v4393
  %v4432 = vrot.slane %v4431, 4
  %v4433 = vmax.f32 %v4431, %v4432
  %v4434 = vrot.slane %v4433, 2
  %v4435 = vmax.f32 %v4433, %v4434
  %v4436 = vrot.slane %v4435, 1
  %v4437 = vmax.f32 %v4435, %v4436
  %v4438 = vmax.f32 %v4391, %v4394
  %v4439 = vrot.slane %v4438, 4
  %v4440 = vmax.f32 %v4438, %v4439
  %v4441 = vrot.slane %v4440, 2
  %v4442 = vmax.f32 %v4440, %v4441
  %v4443 = vrot.slane %v4442, 1
  %v4444 = vmax.f32 %v4442, %v4443
  %v4445 = vsel %vm362, %v4392, -inf
  %v4446 = vsel %vm362, %v4395, -inf
  %v4447 = vmax.f32 %v4445, %v4446
  %v4448 = vrot.slane %v4447, 4
  %v4449 = vmax.f32 %v4447, %v4448
  %v4450 = vrot.slane %v4449, 2
  %v4451 = vmax.f32 %v4449, %v4450
  %v4452 = vrot.slane %v4451, 1
  %v4453 = vmax.f32 %v4451, %v4452
  %v4454 = vmax.f32 %v4396, %v4399
  %v4455 = vrot.slane %v4454, 4
  %v4456 = vmax.f32 %v4454, %v4455
  %v4457 = vrot.slane %v4456, 2
  %v4458 = vmax.f32 %v4456, %v4457
  %v4459 = vrot.slane %v4458, 1
  %v4460 = vmax.f32 %v4458, %v4459
  %v4461 = vmax.f32 %v4397, %v4400
  %v4462 = vrot.slane %v4461, 4
  %v4463 = vmax.f32 %v4461, %v4462
  %v4464 = vrot.slane %v4463, 2
  %v4465 = vmax.f32 %v4463, %v4464
  %v4466 = vrot.slane %v4465, 1
  %v4467 = vmax.f32 %v4465, %v4466
  %v4468 = vsel %vm362, %v4398, -inf
  %v4469 = vsel %vm362, %v4401, -inf
  %v4470 = vmax.f32 %v4468, %v4469
  %v4471 = vrot.slane %v4470, 4
  %v4472 = vmax.f32 %v4470, %v4471
  %v4473 = vrot.slane %v4472, 2
  %v4474 = vmax.f32 %v4472, %v4473
  %v4475 = vrot.slane %v4474, 1
  %v4476 = vmax.f32 %v4474, %v4475
  %v4477 = vmax.f32 %v4402, %v4405
  %v4478 = vrot.slane %v4477, 4
  %v4479 = vmax.f32 %v4477, %v4478
  %v4480 = vrot.slane %v4479, 2
  %v4481 = vmax.f32 %v4479, %v4480
  %v4482 = vrot.slane %v4481, 1
  %v4483 = vmax.f32 %v4481, %v4482
  %v4484 = vmax.f32 %v4403, %v4406
  %v4485 = vrot.slane %v4484, 4
  %v4486 = vmax.f32 %v4484, %v4485
  %v4487 = vrot.slane %v4486, 2
  %v4488 = vmax.f32 %v4486, %v4487
  %v4489 = vrot.slane %v4488, 1
  %v4490 = vmax.f32 %v4488, %v4489
  %v4491 = vsel %vm362, %v4404, -inf
  %v4492 = vsel %vm362, %v4407, -inf
  %v4493 = vmax.f32 %v4491, %v4492
  %v4494 = vrot.slane %v4493, 4
  %v4495 = vmax.f32 %v4493, %v4494
  %v4496 = vrot.slane %v4495, 2
  %v4497 = vmax.f32 %v4495, %v4496
  %v4498 = vrot.slane %v4497, 1
  %v4499 = vmax.f32 %v4497, %v4498
  %s4500 = scalar_lea.vmem %s3, 7
  %v4501 = vld [vmem:[%s4500] ss:$8 sm:$0x7]
  %v4503 = vlaneseq
  %v4504 = vshrl.u32 %v4503, 7
  %v4505 = vsub.s32 0, %v4504
  %v4506 = vrot.slane %v4501, %v4505
  %v4507 = vlaneseq
  %v4508 = vshrl.u32 %v4507, 7
  %v4509 = vsub.s32 1, %v4508
  %v4510 = vrot.slane %v4501, %v4509
  %v4511 = vlaneseq
  %v4512 = vshrl.u32 %v4511, 7
  %v4513 = vsub.s32 2, %v4512
  %v4514 = vrot.slane %v4501, %v4513
  %v4518 = vadd.f32 %v4414, %v4506
  %v4519 = vadd.f32 %v4421, %v4510
  %v4520 = vadd.f32 %v4430, %v4514
  %v4521 = vadd.f32 %v4437, %v4506
  %v4522 = vadd.f32 %v4444, %v4510
  %v4523 = vadd.f32 %v4453, %v4514
  %v4524 = vadd.f32 %v4460, %v4506
  %v4525 = vadd.f32 %v4467, %v4510
  %v4526 = vadd.f32 %v4476, %v4514
  %v4527 = vadd.f32 %v4483, %v4506
  %v4528 = vadd.f32 %v4490, %v4510
  %v4529 = vadd.f32 %v4499, %v4514
  %v4530 = vmul.f32 %v4518, %v548
  %v4531 = vmul.f32 %v4519, %v550
  %v4532 = vmul.f32 %v4520, %v619
  %v4533 = vmul.f32 %v4521, %v995
  %v4534 = vmul.f32 %v4522, %v996
  %v4535 = vmul.f32 %v4523, %v997
  %v4536 = vmul.f32 %v4524, %v998
  %v4537 = vmul.f32 %v4525, %v999
  %v4538 = vmul.f32 %v4526, %v1000
  %v4539 = vmul.f32 %v4527, %v1001
  %v4540 = vmul.f32 %v4528, %v1002
  %v4541 = vmul.f32 %v4529, %v1003
  %v4542 = vpack.c.bf16 %v4530, %v4530
  %v4543 = vpack.c.bf16 %v4531, %v4531
  %v4544 = vpack.c.bf16 %v4532, %v4532
  %v4545 = vpack.c.bf16 %v4533, %v4533
  %v4546 = vpack.c.bf16 %v4534, %v4534
  %v4547 = vpack.c.bf16 %v4535, %v4535
  %v4548 = vpack.c.bf16 %v4536, %v4536
  %v4549 = vpack.c.bf16 %v4537, %v4537
  %v4550 = vpack.c.bf16 %v4538, %v4538
  %v4551 = vpack.c.bf16 %v4539, %v4539
  %v4552 = vpack.c.bf16 %v4540, %v4540
  %v4553 = vpack.c.bf16 %v4541, %v4541
  %s4554 = scalar_lea.vmem %s5, 640
  %v4555 = vld [vmem:[%s4554] sm:$0xf]
  %v4556 = vld [vmem:[%s4554 + $0x4] sm:$0xf]
  %v4557 = vld [vmem:[%s4554 + $0x8] sm:$0xf]
  %v4558 = vld [vmem:[%s4554 + $0xc] sm:$0xf]
  %v4559 = vld [vmem:[%s4554 + $0x10] sm:$0xf]
  %v4560 = vld [vmem:[%s4554 + $0x14] sm:$0xf]
  %v4561 = vld [vmem:[%s4554 + $0x18] sm:$0xf]
  %v4562 = vld [vmem:[%s4554 + $0x1c] sm:$0xf]
  %v4563 = vld [vmem:[%s4554 + $0x20] sm:$0xf]
  %v4564 = vld [vmem:[%s4554 + $0x24] sm:$0xf]
  %v4565 = vld [vmem:[%s4554 + $0x28] sm:$0xf]
  %v4566 = vld [vmem:[%s4554 + $0x2c] sm:$0xf]
  %v4567 = vld [vmem:[%s4554 + $0x30] sm:$0xf]
  %v4568 = vld [vmem:[%s4554 + $0x34] sm:$0xf]
  %v4569 = vld [vmem:[%s4554 + $0x38] sm:$0xf]
  %v4570 = vld [vmem:[%s4554 + $0x3c] sm:$0xf]
  %v4571 = vld [vmem:[%s4554 + $0x40] sm:$0xf]
  %v4572 = vld [vmem:[%s4554 + $0x44] sm:$0xf]
  %v4573 = vld [vmem:[%s4554 + $0x48] sm:$0xf]
  %v4574 = vld [vmem:[%s4554 + $0x4c] sm:$0xf]
  %v4575 = vld [vmem:[%s4554 + $0x50] sm:$0xf]
  %v4576 = vld [vmem:[%s4554 + $0x54] sm:$0xf]
  %v4577 = vld [vmem:[%s4554 + $0x58] sm:$0xf]
  %v4578 = vld [vmem:[%s4554 + $0x5c] sm:$0xf]
  %v4579 = vld [vmem:[%s4554 + $0x60] sm:$0xf]
  %v4580 = vld [vmem:[%s4554 + $0x64] sm:$0xf]
  %v4581 = vld [vmem:[%s4554 + $0x68] sm:$0xf]
  %v4582 = vld [vmem:[%s4554 + $0x6c] sm:$0xf]
  %v4583 = vld [vmem:[%s4554 + $0x70] sm:$0xf]
  %v4584 = vld [vmem:[%s4554 + $0x74] sm:$0xf]
  %v4585 = vld [vmem:[%s4554 + $0x78] sm:$0xf]
  %v4586 = vld [vmem:[%s4554 + $0x7c] sm:$0xf]
  %v4587 = vld [vmem:[%s4554 + $0x80] sm:$0xf]
  %v4588 = vld [vmem:[%s4554 + $0x84] sm:$0xf]
  %v4589 = vld [vmem:[%s4554 + $0x88] sm:$0xf]
  %v4590 = vld [vmem:[%s4554 + $0x8c] sm:$0xf]
  %v4591 = vld [vmem:[%s4554 + $0x90] sm:$0xf]
  %v4592 = vld [vmem:[%s4554 + $0x94] sm:$0xf]
  %v4593 = vld [vmem:[%s4554 + $0x98] sm:$0xf]
  %v4594 = vld [vmem:[%s4554 + $0x9c] sm:$0xf]
  %v4607 = vunpack.c.l.b16 %v4542
  %v4608 = vunpack.c.l.b16 %v4543
  %v4609 = vunpack.c.l.b16 %v4544
  %v4610 = vunpack.c.l.b16 %v4545
  %v4611 = vunpack.c.l.b16 %v4546
  %v4612 = vunpack.c.l.b16 %v4547
  %v4613 = vunpack.c.l.b16 %v4548
  %v4614 = vunpack.c.l.b16 %v4549
  %v4615 = vunpack.c.l.b16 %v4550
  %v4616 = vunpack.c.l.b16 %v4551
  %v4617 = vunpack.c.l.b16 %v4552
  %v4618 = vunpack.c.l.b16 %v4553
  %v4619 = vrot.slane %v4610, 7
  %v4620 = vsel %vm129, %v4619, %v4607
  %v4621 = vrot.slane %v4613, 6
  %v4622 = vsel %vm131, %v4621, %v4620
  %v4623 = vrot.slane %v4616, 5
  %v4624 = vsel %vm133, %v4623, %v4622
  %v4625 = vrot.slane %v4611, 7
  %v4626 = vsel %vm129, %v4625, %v4608
  %v4627 = vrot.slane %v4614, 6
  %v4628 = vsel %vm131, %v4627, %v4626
  %v4629 = vrot.slane %v4617, 5
  %v4630 = vsel %vm133, %v4629, %v4628
  %v4631 = vrot.slane %v4612, 7
  %v4632 = vsel %vm129, %v4631, %v4609
  %v4633 = vrot.slane %v4615, 6
  %v4634 = vsel %vm131, %v4633, %v4632
  %v4635 = vrot.slane %v4618, 5
  %v4636 = vsel %vm133, %v4635, %v4634
  %v4637 = vpack.c.b16 %v4624, %v4624
  %v4638 = vpack.c.b16 %v4630, %v4630
  %v4639 = vpack.c.b16 %v4636, %v4636
  %v4682 = vunpack.c.l.b16 %v4555
  %v4683 = vunpack.c.l.b16 %v4556
  %v4684 = vunpack.c.l.b16 %v4557
  %v4685 = vunpack.c.l.b16 %v4558
  %v4686 = vunpack.c.l.b16 %v4559
  %v4687 = vunpack.c.l.b16 %v4560
  %v4688 = vunpack.c.l.b16 %v4561
  %v4689 = vunpack.c.l.b16 %v4562
  %v4690 = vunpack.c.l.b16 %v4563
  %v4691 = vunpack.c.l.b16 %v4564
  %v4692 = vunpack.c.l.b16 %v4565
  %v4693 = vunpack.c.l.b16 %v4566
  %v4694 = vunpack.c.l.b16 %v4567
  %v4695 = vunpack.c.l.b16 %v4568
  %v4696 = vunpack.c.l.b16 %v4569
  %v4697 = vunpack.c.l.b16 %v4570
  %v4698 = vunpack.c.l.b16 %v4571
  %v4699 = vunpack.c.l.b16 %v4572
  %v4700 = vunpack.c.l.b16 %v4573
  %v4701 = vunpack.c.l.b16 %v4574
  %v4702 = vunpack.c.l.b16 %v4575
  %v4703 = vunpack.c.l.b16 %v4576
  %v4704 = vunpack.c.l.b16 %v4577
  %v4705 = vunpack.c.l.b16 %v4578
  %v4706 = vunpack.c.l.b16 %v4579
  %v4707 = vunpack.c.l.b16 %v4580
  %v4708 = vunpack.c.l.b16 %v4581
  %v4709 = vunpack.c.l.b16 %v4582
  %v4710 = vunpack.c.l.b16 %v4583
  %v4711 = vunpack.c.l.b16 %v4584
  %v4712 = vunpack.c.l.b16 %v4585
  %v4713 = vunpack.c.l.b16 %v4586
  %v4714 = vunpack.c.l.b16 %v4587
  %v4715 = vunpack.c.l.b16 %v4588
  %v4716 = vunpack.c.l.b16 %v4589
  %v4717 = vunpack.c.l.b16 %v4590
  %v4718 = vunpack.c.l.b16 %v4591
  %v4719 = vunpack.c.l.b16 %v4592
  %v4720 = vunpack.c.l.b16 %v4593
  %v4721 = vunpack.c.l.b16 %v4594
  %v4722 = vpack.c.b16 %v4683, %v4682
  %v4723 = vpack.c.b16 %v4685, %v4684
  %v4724 = vpack.c.b16 %v4687, %v4686
  %v4725 = vpack.c.b16 %v4689, %v4688
  %v4726 = vpack.c.b16 %v4691, %v4690
  %v4727 = vpack.c.b16 %v4693, %v4692
  %v4728 = vpack.c.b16 %v4695, %v4694
  %v4729 = vpack.c.b16 %v4697, %v4696
  %v4730 = vpack.c.b16 %v4699, %v4698
  %v4731 = vpack.c.b16 %v4701, %v4700
  %v4732 = vpack.c.b16 %v4703, %v4702
  %v4733 = vpack.c.b16 %v4705, %v4704
  %v4734 = vpack.c.b16 %v4707, %v4706
  %v4735 = vpack.c.b16 %v4709, %v4708
  %v4736 = vpack.c.b16 %v4711, %v4710
  %v4737 = vpack.c.b16 %v4713, %v4712
  %v4738 = vpack.c.b16 %v4715, %v4714
  %v4739 = vpack.c.b16 %v4717, %v4716
  %v4740 = vpack.c.b16 %v4719, %v4718
  %v4741 = vpack.c.b16 %v4721, %v4720
  %v4763 = vsel %vm362, %v4639, 0
  %4765 = vmatprep.subr.bf16.mxu0 0
  %4766 = vmatpush1.bf16.msra.mxu0 %v4722
  %4767 = vmatprep.subr.bf16.mxu0 0
  %4768 = vmatpush1.bf16.msra.mxu0 %v4723
  %4769 = vmatprep.subr.bf16.mxu0 0
  %4770 = vmatpush1.bf16.msra.mxu0 %v4724
  %4771 = vmatprep.subr.bf16.mxu0 0
  %4772 = vmatpush1.bf16.msra.mxu0 %v4725
  %4773 = vmatprep.subr.bf16.mxu0 0
  %4774 = vmatpush1.bf16.msra.mxu0 %v4726
  %4775 = vmatprep.subr.bf16.mxu0 0
  %4776 = vmatpush1.bf16.msra.mxu0 %v4727
  %4777 = vmatprep.subr.bf16.mxu0 0
  %4778 = vmatpush1.bf16.msra.mxu0 %v4728
  %4779 = vmatprep.subr.bf16.mxu0 0
  %4780 = vmatpush1.bf16.msra.mxu0 %v4729
  %4781 = vmatprep.subr.bf16.mxu0 0
  %4782 = vmatpush1.bf16.msra.mxu0 %v4730
  %4783 = vmatprep.subr.bf16.mxu0 0
  %4784 = vmatpush1.bf16.msra.mxu0 %v4731
  %4785 = vmatprep.subr.bf16.mxu0 0
  %4786 = vmatpush1.bf16.msra.mxu0 %v4732
  %4787 = vmatprep.subr.bf16.mxu0 0
  %4788 = vmatpush1.bf16.msra.mxu0 %v4733
  %4789 = vmatprep.subr.bf16.mxu0 0
  %4790 = vmatpush1.bf16.msra.mxu0 %v4734
  %4791 = vmatprep.subr.bf16.mxu0 0
  %4792 = vmatpush1.bf16.msra.mxu0 %v4735
  %4793 = vmatprep.subr.bf16.mxu0 0
  %4794 = vmatpush1.bf16.msra.mxu0 %v4736
  %4795 = vmatprep.subr.bf16.mxu0 0
  %4796 = vmatpush1.bf16.msra.mxu0 %v4737
  %4797 = vmatprep.mubr.bf16.mxu0 %v4638
  %4798 = vmatmul.mubr.bf16.gmra.mrb[0].mxu0 %v4637
  %v4799 = vpop.f32.mrb[0].mxu0
  %v4800 = vadd.f32 0.0, %v4799
  %v4801 = vpop.f32.mrb[0].mxu0
  %v4802 = vpop.f32.mrb[0].mxu0
  %v4803 = vpop.f32.mrb[0].mxu0
  %4804 = vdwg.mxu0
  %4805 = vmatprep.subr.bf16.mxu0 0
  %4806 = vmatpush1.bf16.msra.mxu0 %v4738
  %4807 = vmatprep.subr.bf16.mxu0 0
  %4808 = vmatpush1.bf16.msra.mxu0 %v4739
  %4809 = vmatprep.subr.bf16.mxu0 0
  %4810 = vmatpush1.bf16.msra.mxu0 %v4740
  %4811 = vmatprep.subr.bf16.mxu0 0
  %4812 = vmatpush1.bf16.msra.mxu0 %v4741
  %4813 = vmatprep.subr.bf16.mxu0 0
  %4814 = vmatpush1.bf16.msra.mxu0 0
  %4815 = vmatprep.subr.bf16.mxu0 0
  %4816 = vmatpush1.bf16.msra.mxu0 0
  %4817 = vmatprep.subr.bf16.mxu0 0
  %4818 = vmatpush1.bf16.msra.mxu0 0
  %4819 = vmatprep.subr.bf16.mxu0 0
  %4820 = vmatpush1.bf16.msra.mxu0 0
  %4821 = vmatprep.subr.bf16.mxu0 0
  %4822 = vmatpush1.bf16.msra.mxu0 0
  %4823 = vmatprep.subr.bf16.mxu0 0
  %4824 = vmatpush1.bf16.msra.mxu0 0
  %4825 = vmatprep.subr.bf16.mxu0 0
  %4826 = vmatpush1.bf16.msra.mxu0 0
  %4827 = vmatprep.subr.bf16.mxu0 0
  %4828 = vmatpush1.bf16.msra.mxu0 0
  %4829 = vmatprep.subr.bf16.mxu0 0
  %4830 = vmatpush1.bf16.msra.mxu0 0
  %4831 = vmatprep.subr.bf16.mxu0 0
  %4832 = vmatpush1.bf16.msra.mxu0 0
  %4833 = vmatprep.subr.bf16.mxu0 0
  %4834 = vmatpush1.bf16.msra.mxu0 0
  %4835 = vmatprep.subr.bf16.mxu0 0
  %4836 = vmatpush1.bf16.msra.mxu0 0
  %4837 = vmatprep.mubr.bf16.mxu0 0
  %4838 = vmatmul.mubr.bf16.gmra.mrb[0].mxu0 %v4763
  %v4839 = vpop.f32.mrb[0].mxu0
  %v4840 = vadd.f32 %v4800, %v4839
  %v4841 = vpop.f32.mrb[0].mxu0
  %v4842 = vpop.f32.mrb[0].mxu0
  %v4843 = vpop.f32.mrb[0].mxu0
  %4844 = vdwg.mxu0
  %v4845 = vadd.f32 %v3615, %v4840
  %v4846 = vmax.f32 %v4845, 0.0
  %4847 = vrot.lane.b32.xlu0 %v237, 59
  %v4848 = vpop.permute.xlu0 %4847
  %4849 = vrot.lane.b32.xlu0 %v238, 59
  %v4850 = vpop.permute.xlu0 %4849
  %4851 = vrot.lane.b32.xlu0 %v239, 59
  %v4852 = vpop.permute.xlu0 %4851
  %4853 = vrot.lane.b32.xlu0 %v240, 59
  %v4854 = vpop.permute.xlu0 %4853
  %4855 = vrot.lane.b32.xlu0 %v242, 59
  %v4856 = vpop.permute.xlu0 %4855
  %4857 = vrot.lane.b32.xlu0 %v243, 59
  %v4858 = vpop.permute.xlu0 %4857
  %4859 = vrot.lane.b32.xlu0 %v244, 59
  %v4860 = vpop.permute.xlu0 %4859
  %4861 = vrot.lane.b32.xlu0 %v245, 59
  %v4862 = vpop.permute.xlu0 %4861
  %4871 = vrot.lane.b32.xlu0 %v33, 95
  %v4872 = vpop.permute.xlu0 %4871
  %v4875 = vsel %vm362, %v4846, 0
  %4877 = vmatprep.subr.mxu0 0.0
  %4878 = vmatpush1.msra.mxu0 %v4848
  %4879 = vmatprep.subr.mxu0 0.0
  %4880 = vmatpush1.msra.mxu0 %v4850
  %4881 = vmatprep.subr.mxu0 0.0
  %4882 = vmatpush1.msra.mxu0 %v4852
  %4883 = vmatprep.subr.mxu0 0.0
  %4884 = vmatpush1.msra.mxu0 %v4854
  %4885 = vmatprep.subr.mxu0 0.0
  %4886 = vmatpush1.msra.mxu0 %v4856
  %4887 = vmatprep.subr.mxu0 0.0
  %4888 = vmatpush1.msra.mxu0 %v4858
  %4889 = vmatprep.subr.mxu0 0.0
  %4890 = vmatpush1.msra.mxu0 %v4860
  %4891 = vmatprep.subr.mxu0 0.0
  %4892 = vmatpush1.msra.mxu0 %v4862
  %4893 = vmatprep.subr.mxu0 0.0
  %4894 = vmatpush1.msra.mxu0 0.0
  %4895 = vmatprep.subr.mxu0 0.0
  %4896 = vmatpush1.msra.mxu0 0.0
  %4897 = vmatprep.subr.mxu0 0.0
  %4898 = vmatpush1.msra.mxu0 0.0
  %4899 = vmatprep.subr.mxu0 0.0
  %4900 = vmatpush1.msra.mxu0 0.0
  %4901 = vmatprep.subr.mxu0 0.0
  %4902 = vmatpush1.msra.mxu0 0.0
  %4903 = vmatprep.subr.mxu0 0.0
  %4904 = vmatpush1.msra.mxu0 0.0
  %4905 = vmatprep.subr.mxu0 0.0
  %4906 = vmatpush1.msra.mxu0 0.0
  %4907 = vmatprep.subr.mxu0 0.0
  %4908 = vmatpush1.msra.mxu0 0.0
  %4909 = vmatprep.subr.mxu0 0.0
  %4910 = vmatpush1.msra.mxu0 0.0
  %4911 = vmatprep.subr.mxu0 0.0
  %4912 = vmatpush1.msra.mxu0 0.0
  %4913 = vmatprep.subr.mxu0 0.0
  %4914 = vmatpush1.msra.mxu0 0.0
  %4915 = vmatprep.subr.mxu0 0.0
  %4916 = vmatpush1.msra.mxu0 0.0
  %4917 = vmatprep.subr.mxu0 0.0
  %4918 = vmatpush1.msra.mxu0 0.0
  %4919 = vmatprep.subr.mxu0 0.0
  %4920 = vmatpush1.msra.mxu0 0.0
  %4921 = vmatprep.subr.mxu0 0.0
  %4922 = vmatpush1.msra.mxu0 0.0
  %4923 = vmatprep.subr.mxu0 0.0
  %4924 = vmatpush1.msra.mxu0 0.0
  %4925 = vmatprep.subr.mxu0 0.0
  %4926 = vmatpush1.msra.mxu0 0.0
  %4927 = vmatprep.subr.mxu0 0.0
  %4928 = vmatpush1.msra.mxu0 0.0
  %4929 = vmatprep.subr.mxu0 0.0
  %4930 = vmatpush1.msra.mxu0 0.0
  %4931 = vmatprep.subr.mxu0 0.0
  %4932 = vmatpush1.msra.mxu0 0.0
  %4933 = vmatprep.subr.mxu0 0.0
  %4934 = vmatpush1.msra.mxu0 0.0
  %4935 = vmatprep.subr.mxu0 0.0
  %4936 = vmatpush1.msra.mxu0 0.0
  %4937 = vmatprep.subr.mxu0 0.0
  %4938 = vmatpush1.msra.mxu0 0.0
  %4939 = vmatprep.subr.mxu0 0.0
  %4940 = vmatpush1.msra.mxu0 0.0
  %4941 = vmatprep.mubr.f32.mxu0 0.0
  %4942 = vmatmul.mubr.f32.gmra.mrb[0].mxu0 %v4875
  %v4943 = vpop.f32.mrb[0].mxu0
  %v4944 = vadd.f32 %v4872, %v4943
  %v4945 = vpop.f32.mrb[0].mxu0
  %4946 = vdwg.mxu0
  %v4947 = vxor.u32 %v4944, 2147483648
  %v4948 = vmul.f32 %v4947, 1.442695
  %v4949 = vpow.pop %v4948
  %v4950 = vadd.f32 %v4949, 1.0
  %v4951 = vrcp.pop %v4950
  %v4952 = vmul.f32 1.0, %v4951
  %vm4953 = vcmask 3072
  %4954 = vst.msk [vmem:[%s6] sm:$0xf] %vm4953, %v4952
  // Predicated region
  $region26: #{mdfend_forward.1} parent=0 // pred_check
    _
  $region27: #{mdfend_forward.1} parent=0 // pred_check_branch
    %4956 = sbr.rel (0) target = $region29
  $region28: #{mdfend_forward.1} parent=0 // pred_region
    _
  $region29: #{mdfend_forward.1} parent=0 // pred_fallthru
    _
  // Predicated region
  $region30: #{mdfend_forward.1} parent=0 // pred_check
    _
  $region31: #{mdfend_forward.1} parent=0 // pred_check_branch
    %4958 = sbr.rel (0) target = $region33
  $region32: #{mdfend_forward.1} parent=0 // pred_region
    _
  $region33: #{mdfend_forward.1} parent=0 // pred_fallthru
    _

</llo_original>
